<compile_context>
chip_gen: v6e
topology: v6e:2x2x1
jax: 0.10.0
libtpu: 0.0.40
codegen_flags: <defaults>
</compile_context>

<pallas_src>
import jax
import jax.numpy as jnp
from jax import lax
from jax.experimental import pallas as pl
from jax.experimental.pallas import tpu as pltpu


def _round_up(x, m):
    return ((x + m - 1) // m) * m


def _unroll_factor(T, max_u=8):
    u = 1
    for cand in (2, 4, 8):
        if cand <= max_u and T % cand == 0:
            u = cand
    return u


def _pick_batch_tile(B, target=128):
    # Multiple of 8 (full sublanes); grow toward `target` to fill the MXU M dim
    # of the per-step (B_tile, D) @ (D, 4D) recurrence matmul.
    return min(_round_up(max(B, 1), 8), _round_up(target, 8))


def _make_kernel(num_conv_layers, K, T, D, B_tile, compute_dtype):
    pad_l = (K - 1) // 2            # PyTorch 'same': (K-1)//2 left, K//2 right
    pad_r = K // 2
    R = T * B_tile                  # rows per block (time-major)
    PR = (T + pad_l + pad_r) * B_tile
    U = _unroll_factor(T)
    cdt = compute_dtype

    def kernel(x_ref, mask_ref, w_ih_ref, w_hh_ref, b_lstm_ref, *rest):
        conv_refs = rest[:4 * num_conv_layers]
        ln_g_ref = rest[4 * num_conv_layers]
        ln_b_ref = rest[4 * num_conv_layers + 1]
        o_ref = rest[4 * num_conv_layers + 2]
        xw_s = rest[4 * num_conv_layers + 3]     # VMEM (R, 4D) f32
        lx_s = rest[4 * num_conv_layers + 4]     # VMEM (R, D)  f32
        pad_s = rest[4 * num_conv_layers + 5]    # VMEM (PR, D) f32

        x = x_ref[0]                 # (R, D) f32, row r = t*B_tile + b
        mask = mask_ref[0]           # (R, 1) f32
        mask_b = jnp.broadcast_to(mask, (R, D))   # hoisted: one lane-broadcast
        x_c = x.astype(cdt)

        # ---------------- LSTM (single layer, batch_first) ----------------
        # Input projection for every (t, b) in one MXU matmul; gate columns
        # were re-packed in the wrapper to [i | f | o | g].
        xw_s[...] = (jnp.dot(x_c, w_ih_ref[...],
                             preferred_element_type=jnp.float32)
                     + b_lstm_ref[...])
        w_hh = w_hh_ref[...]         # (D, 4D), compute dtype

        def lstm_steps(tb, carry):
            h, c = carry             # (B_tile, D) f32 each
            for u in range(U):       # bounded partial unroll (<= 8 steps)
                r0 = pl.multiple_of((tb * U + u) * B_tile, 8)
                gates = xw_s[pl.ds(r0, B_tile), :] + jnp.dot(
                    h.astype(cdt), w_hh, preferred_element_type=jnp.float32)
                sg = jax.nn.sigmoid(gates[:, :3 * D])      # i, f, o
                g_g = jnp.tanh(gates[:, 3 * D:])           # g
                i_g = sg[:, 0 * D:1 * D]
                f_g = sg[:, 1 * D:2 * D]
                o_g = sg[:, 2 * D:3 * D]
                c = f_g * c + i_g * g_g
                h = o_g * jnp.tanh(c)
                lx_s[pl.ds(r0, B_tile), :] = h
            return h, c

        zeros_bd = jnp.zeros((B_tile, D), jnp.float32)
        lax.fori_loop(0, T // U, lstm_steps, (zeros_bd, zeros_bd))
        lx = jnp.tanh(lx_s[...])     # (R, D); dropout == identity (eval)

        # -------- ConvGLU stack: K accumulated per-tap matmuls --------
        # pad_s is both the zero-padded conv input and the layer activation
        # buffer: halos zeroed once, interior written once per layer.
        if pad_l > 0:
            pad_s[0:pad_l * B_tile, :] = jnp.zeros((pad_l * B_tile, D),
                                                   jnp.float32)
        if pad_r > 0:
            pad_s[(pad_l + T) * B_tile:PR, :] = jnp.zeros((pad_r * B_tile, D),
                                                          jnp.float32)
        pad_s[pad_l * B_tile:(pad_l + T) * B_tile, :] = x

        cx = x
        for l in range(num_conv_layers):
            wc_ref, bc_ref, sc_ref, sh_ref = conv_refs[4 * l: 4 * l + 4]
            # Time shift k == row shift k*B_tile (never mixes batch elements).
            acc = jnp.dot(pad_s[0:R, :].astype(cdt), wc_ref[0],
                          preferred_element_type=jnp.float32)
            for k in range(1, K):
                acc = acc + jnp.dot(
                    pad_s[k * B_tile:k * B_tile + R, :].astype(cdt),
                    wc_ref[k], preferred_element_type=jnp.float32)
            acc = acc + bc_ref[...]
            cx = acc[:, :D] * jax.nn.sigmoid(acc[:, D:])   # GLU (channel dim)
            cx = cx * sc_ref[...] + sh_ref[...]            # folded BN (eval)
            cx = cx * mask_b
            if l + 1 < num_conv_layers:
                pad_s[pad_l * B_tile:(pad_l + T) * B_tile, :] = cx

        # ---------- combine, LayerNorm over D, outer residual ----------
        y = lx + cx
        mu = jnp.mean(y, axis=-1, keepdims=True)
        var = jnp.mean((y - mu) ** 2, axis=-1, keepdims=True)
        y = (y - mu) * lax.rsqrt(var + 1e-5)
        y = y * ln_g_ref[...] + ln_b_ref[...]
        o_ref[0] = x + y             # drop_path == Identity (drop_path=0.0)

    return kernel


def leanspeech_block(x, mask, params, *, batch_tile=None, min_grid_tiles=1,
                     compute_dtype=jnp.float32):
    """x: (B, T, D) f32, mask: (B, 1, T) f32 (as in the PyTorch forward)."""
    B, T, D = x.shape
    K = params["conv_w"][0].shape[-1]
    L = len(params["conv_w"])
    cdt = compute_dtype

    B_tile = batch_tile if batch_tile is not None else _pick_batch_tile(B)
    B_tile = _round_up(B_tile, 8)                  # sublane-aligned offsets
    G = max((B + B_tile - 1) // B_tile, int(min_grid_tiles))
    B_pad = G * B_tile
    R = T * B_tile
    PR = (T + K - 1) * B_tile

    if B_pad != B:                                 # pad batch; never truncate
        x_p = jnp.pad(x, ((0, B_pad - B), (0, 0), (0, 0)))
        mask_p = jnp.pad(mask, ((0, B_pad - B), (0, 0), (0, 0)))
    else:
        x_p, mask_p = x, mask

    # ---- repack activations: (B, T, D) -> (G, T*B_tile, D), time-major ----
    x_tm = (x_p.reshape(G, B_tile, T, D).transpose(0, 2, 1, 3).reshape(G, R, D))
    mask_tm = (jnp.transpose(mask_p, (0, 2, 1)).reshape(G, B_tile, T, 1)
               .transpose(0, 2, 1, 3).reshape(G, R, 1))

    # ---- LSTM weights: reorder gate blocks [i,f,g,o] -> [i,f,o,g] ----
    def reorder(w4):                               # leading axis = 4*D gates
        i, f, g, o = jnp.split(w4, 4, axis=0)
        return jnp.concatenate([i, f, o, g], axis=0)

    w_ih = reorder(params["w_ih"]).T.astype(cdt)                  # (D, 4D)
    w_hh = reorder(params["w_hh"]).T.astype(cdt)                  # (D, 4D)
    b_lstm = reorder(params["b_ih"] + params["b_hh"]).reshape(1, 4 * D)
    b_lstm = b_lstm.astype(jnp.float32)

    inputs = [x_tm, mask_tm, w_ih, w_hh, b_lstm]
    in_specs = [
        pl.BlockSpec((1, R, D), lambda g: (g, 0, 0)),
        pl.BlockSpec((1, R, 1), lambda g: (g, 0, 0)),
        pl.BlockSpec((D, 4 * D), lambda g: (0, 0)),
        pl.BlockSpec((D, 4 * D), lambda g: (0, 0)),
        pl.BlockSpec((1, 4 * D), lambda g: (0, 0)),
    ]
    for l in range(L):
        # (2D, D, K) -> (K, D, 2D): per-tap (D, 2D) weight slices.
        wc = jnp.transpose(params["conv_w"][l], (2, 1, 0)).astype(cdt)
        bc = params["conv_b"][l].reshape(1, 2 * D).astype(jnp.float32)
        sc = params["bn_scale"][l].reshape(1, D).astype(jnp.float32)
        sh = params["bn_shift"][l].reshape(1, D).astype(jnp.float32)
        inputs += [wc, bc, sc, sh]
        in_specs += [
            pl.BlockSpec((K, D, 2 * D), lambda g: (0, 0, 0)),
            pl.BlockSpec((1, 2 * D), lambda g: (0, 0)),
            pl.BlockSpec((1, D), lambda g: (0, 0)),
            pl.BlockSpec((1, D), lambda g: (0, 0)),
        ]
    inputs += [params["ln_g"].reshape(1, D), params["ln_b"].reshape(1, D)]
    in_specs += [pl.BlockSpec((1, D), lambda g: (0, 0)),
                 pl.BlockSpec((1, D), lambda g: (0, 0))]

    # ---- explicit VMEM budget (v7x: 64 MiB physical, 32 MiB default scoped) ----
    csz = jnp.dtype(cdt).itemsize
    act_bytes = R * D * 4
    weight_bytes = (2 * (D * 4 * D) * csz + 4 * D * 4
                    + L * (K * D * 2 * D * csz + (2 * D + D + D) * 4)
                    + 2 * D * 4)
    scratch_bytes = R * 4 * D * 4 + R * D * 4 + PR * D * 4
    est = 2 * (2 * act_bytes + R * 4) + 2 * weight_bytes + scratch_bytes
    vmem_limit = int(min(max(2 * est, 8 * 1024 * 1024), 64 * 1024 * 1024))

    kernel = _make_kernel(L, K, T, D, B_tile, cdt)
    out_tm = pl.pallas_call(
        kernel,
        out_shape=jax.ShapeDtypeStruct((G, R, D), jnp.float32),
        grid=(G,),
        in_specs=in_specs,
        out_specs=pl.BlockSpec((1, R, D), lambda g: (g, 0, 0)),
        scratch_shapes=[
            pltpu.VMEM((R, 4 * D), jnp.float32),     # per-(t,b) gate inputs
            pltpu.VMEM((R, D), jnp.float32),         # lstm hidden states
            pltpu.VMEM((PR, D), jnp.float32),        # conv halo + activations
        ],
        compiler_params=pltpu.CompilerParams(
            dimension_semantics=("parallel",),       # batch tiles independent
            vmem_limit_bytes=vmem_limit),
    )(*inputs)

    # ---- unpack: (G, T*B_tile, D) -> (B, T, D) ----
    out = (out_tm.reshape(G, T, B_tile, D).transpose(0, 2, 1, 3)
           .reshape(B_pad, T, D))
    return out[:B]


# ----------------------- deterministic parameter init -----------------------
def init_params(key, D, K, L):
    ks = jax.random.split(key, 8)
    std = 0.02
    p = {}
    p["w_ih"] = std * jax.random.normal(ks[0], (4 * D, D), jnp.float32)
    p["w_hh"] = std * jax.random.normal(ks[1], (4 * D, D), jnp.float32)
    p["b_ih"] = std * jax.random.normal(ks[2], (4 * D,), jnp.float32)
    p["b_hh"] = std * jax.random.normal(ks[3], (4 * D,), jnp.float32)

    conv_w, conv_b, bn_scale, bn_shift = [], [], [], []
    kk = jax.random.split(ks[4], 4 * L)
    for l in range(L):
        conv_w.append(std * jax.random.normal(kk[4 * l], (2 * D, D, K), jnp.float32))
        conv_b.append(std * jax.random.normal(kk[4 * l + 1], (2 * D,), jnp.float32))
        if l < L - 1:  # batchnorm=True for all but the last conv layer
            gamma = 1.0 + 0.1 * jax.random.normal(kk[4 * l + 2], (D,), jnp.float32)
            beta = 0.1 * jax.random.normal(kk[4 * l + 3], (D,), jnp.float32)
            rmean = jnp.zeros((D,), jnp.float32)     # fresh BN running stats
            rvar = jnp.ones((D,), jnp.float32)
            sc = gamma * lax.rsqrt(rvar + 1e-5)
            sh = beta - rmean * sc
        else:
            sc = jnp.ones((D,), jnp.float32)
            sh = jnp.zeros((D,), jnp.float32)
        bn_scale.append(sc)
        bn_shift.append(sh)
    p["conv_w"], p["conv_b"] = conv_w, conv_b
    p["bn_scale"], p["bn_shift"] = bn_scale, bn_shift

    p["ln_g"] = 1.0 + 0.1 * jax.random.normal(ks[5], (D,), jnp.float32)
    p["ln_b"] = 0.05 * jax.random.normal(ks[6], (D,), jnp.float32)
    return p


# --------------------------- pure-JAX reference ------------------------------
def reference_forward(x, mask, p):
    B, T, D = x.shape
    w_ih, w_hh = p["w_ih"].T, p["w_hh"].T
    b = p["b_ih"] + p["b_hh"]

    def cell(carry, xt):
        h, c = carry
        gates = xt @ w_ih + h @ w_hh + b
        i, f, g, o = jnp.split(gates, 4, axis=-1)
        c = jax.nn.sigmoid(f) * c + jax.nn.sigmoid(i) * jnp.tanh(g)
        h = jax.nn.sigmoid(o) * jnp.tanh(c)
        return (h, c), h

    h0 = jnp.zeros((B, D), jnp.float32)
    c0 = jnp.zeros((B, D), jnp.float32)
    _, hs = lax.scan(cell, (h0, c0), jnp.swapaxes(x, 0, 1))
    lx = jnp.tanh(jnp.swapaxes(hs, 0, 1))

    cx = jnp.swapaxes(x, 1, 2)                     # (B, D, T)
    K = p["conv_w"][0].shape[-1]
    pad_l, pad_r = (K - 1) // 2, K // 2            # PyTorch 'same' (even K asym)
    for l in range(len(p["conv_w"])):
        y = lax.conv_general_dilated(
            cx, p["conv_w"][l], window_strides=(1,), padding=[(pad_l, pad_r)],
            dimension_numbers=("NCH", "OIH", "NCH"))
        y = y + p["conv_b"][l][None, :, None]
        a, g = jnp.split(y, 2, axis=1)
        cx = a * jax.nn.sigmoid(g)
        cx = cx * p["bn_scale"][l][None, :, None] + p["bn_shift"][l][None, :, None]
        cx = cx * mask
    cx = jnp.swapaxes(cx, 1, 2)

    y = lx + cx
    mu = jnp.mean(y, -1, keepdims=True)
    var = jnp.mean((y - mu) ** 2, -1, keepdims=True)
    y = (y - mu) / jnp.sqrt(var + 1e-5) * p["ln_g"] + p["ln_b"]
    return x + y


if __name__ == "__main__":
    B, T, D, K, L = 2, 16, 32, 3, 2      # dim=32, kernel_size=3, num_conv_layers=2
    key = jax.random.PRNGKey(0)
    kx, kp = jax.random.split(key)

    x = jax.random.normal(kx, (B, T, D), jnp.float32)
    lengths = jnp.array([T, T - 4], jnp.int32)    # unused by forward (as in PyTorch)
    mask = (jnp.arange(T)[None, None, :] < lengths[:, None, None]).astype(jnp.float32)
    params = init_params(kp, D, K, L)

    ref = reference_forward(x, mask, params)

    # f32 path; min_grid_tiles=2 exercises >=2 grid steps (v7x megacore sharding).
    out = jax.block_until_ready(
        leanspeech_block(x, mask, params, min_grid_tiles=2))
    assert out.shape == (B, T, D)
    err = float(jnp.max(jnp.abs(out - ref)))
    assert jnp.allclose(out, ref, atol=1e-3, rtol=1e-3), f"f32 max_err={err}"

    # bf16 MXU-operand path (v6e/v7x feedback); accumulation / LN stay f32.
    out_bf16 = jax.block_until_ready(
        leanspeech_block(x, mask, params, compute_dtype=jnp.bfloat16))
    assert out_bf16.shape == (B, T, D)
    err_bf = float(jnp.max(jnp.abs(out_bf16 - ref)))
    assert jnp.allclose(out_bf16, ref, atol=1e-1, rtol=1e-1), f"bf16 max_err={err_bf}"

    print("KERNEL_OK")
</pallas_src>

<mosaic_0001>
module attributes {stable_mosaic.version = 11 : i64} {
  func.func @kernel(%arg0: i32, %arg1: memref<1x128x32xf32, #tpu.memory_space<vmem>>, %arg2: memref<1x128x1xf32, #tpu.memory_space<vmem>>, %arg3: memref<32x128xf32, #tpu.memory_space<vmem>>, %arg4: memref<32x128xf32, #tpu.memory_space<vmem>>, %arg5: memref<1x128xf32, #tpu.memory_space<vmem>>, %arg6: memref<3x32x64xf32, #tpu.memory_space<vmem>>, %arg7: memref<1x64xf32, #tpu.memory_space<vmem>>, %arg8: memref<1x32xf32, #tpu.memory_space<vmem>>, %arg9: memref<1x32xf32, #tpu.memory_space<vmem>>, %arg10: memref<3x32x64xf32, #tpu.memory_space<vmem>>, %arg11: memref<1x64xf32, #tpu.memory_space<vmem>>, %arg12: memref<1x32xf32, #tpu.memory_space<vmem>>, %arg13: memref<1x32xf32, #tpu.memory_space<vmem>>, %arg14: memref<1x32xf32, #tpu.memory_space<vmem>>, %arg15: memref<1x32xf32, #tpu.memory_space<vmem>>, %arg16: memref<1x128x32xf32, #tpu.memory_space<vmem>>, %arg17: memref<128x128xf32, #tpu.memory_space<vmem>>, %arg18: memref<128x32xf32, #tpu.memory_space<vmem>>, %arg19: memref<144x32xf32, #tpu.memory_space<vmem>>) attributes {dimension_semantics = [#tpu.dimension_semantics<parallel>], iteration_bounds = array<i64: 2>, scalar_prefetch = 0 : i64, scratch_operands = 3 : i64, tpu.core_type = #tpu.core_type<tc>, window_params = [{transform_indices = @transform_0, window_bounds = array<i64: 1, 128, 32>}, {transform_indices = @transform_1, window_bounds = array<i64: 1, 128, 1>}, {pipeline_mode = #tpu.pipeline_mode<synchronous>, transform_indices = @transform_2, window_bounds = array<i64: 32, 128>}, {pipeline_mode = #tpu.pipeline_mode<synchronous>, transform_indices = @transform_3, window_bounds = array<i64: 32, 128>}, {pipeline_mode = #tpu.pipeline_mode<synchronous>, transform_indices = @transform_4, window_bounds = array<i64: 1, 128>}, {pipeline_mode = #tpu.pipeline_mode<synchronous>, transform_indices = @transform_5, window_bounds = array<i64: 3, 32, 64>}, {pipeline_mode = #tpu.pipeline_mode<synchronous>, transform_indices = @transform_6, window_bounds = array<i64: 1, 64>}, {pipeline_mode = #tpu.pipeline_mode<synchronous>, transform_indices = @transform_7, window_bounds = array<i64: 1, 32>}, {pipeline_mode = #tpu.pipeline_mode<synchronous>, transform_indices = @transform_8, window_bounds = array<i64: 1, 32>}, {pipeline_mode = #tpu.pipeline_mode<synchronous>, transform_indices = @transform_9, window_bounds = array<i64: 3, 32, 64>}, {pipeline_mode = #tpu.pipeline_mode<synchronous>, transform_indices = @transform_10, window_bounds = array<i64: 1, 64>}, {pipeline_mode = #tpu.pipeline_mode<synchronous>, transform_indices = @transform_11, window_bounds = array<i64: 1, 32>}, {pipeline_mode = #tpu.pipeline_mode<synchronous>, transform_indices = @transform_12, window_bounds = array<i64: 1, 32>}, {pipeline_mode = #tpu.pipeline_mode<synchronous>, transform_indices = @transform_13, window_bounds = array<i64: 1, 32>}, {pipeline_mode = #tpu.pipeline_mode<synchronous>, transform_indices = @transform_14, window_bounds = array<i64: 1, 32>}, {transform_indices = @transform_15, window_bounds = array<i64: 1, 128, 32>}]} {
    %c0 = arith.constant 0 : index
    %c0_0 = arith.constant 0 : index
    %c0_1 = arith.constant 0 : index
    %0 = vector.load %arg1[%c0, %c0_0, %c0_1] : memref<1x128x32xf32, #tpu.memory_space<vmem>>, vector<1x128x32xf32>
    %1 = vector.shape_cast %0 : vector<1x128x32xf32> to vector<128x32xf32>
    %c0_2 = arith.constant 0 : index
    %c0_3 = arith.constant 0 : index
    %c0_4 = arith.constant 0 : index
    %2 = vector.load %arg2[%c0_2, %c0_3, %c0_4] : memref<1x128x1xf32, #tpu.memory_space<vmem>>, vector<1x128x1xf32>
    %3 = vector.shape_cast %2 : vector<1x128x1xf32> to vector<128x1xf32>
    %4 = vector.shape_cast %3 : vector<128x1xf32> to vector<128x1xf32>
    %5 = vector.broadcast %4 : vector<128x1xf32> to vector<128x32xf32>
    %c0_5 = arith.constant 0 : index
    %c0_6 = arith.constant 0 : index
    %6 = vector.load %arg3[%c0_5, %c0_6] : memref<32x128xf32, #tpu.memory_space<vmem>>, vector<32x128xf32>
    %cst = arith.constant dense<0.000000e+00> : vector<128x128xf32>
    %7 = tpu.matmul %1, %6, %cst {dimension_numbers = #tpu.dot_dimension_numbers<[1], [0], [0], [1], [0, 0, 1, 1], [], []>} : vector<128x32xf32>, vector<32x128xf32>, vector<128x128xf32> -> vector<128x128xf32>
    %c0_7 = arith.constant 0 : index
    %c0_8 = arith.constant 0 : index
    %8 = vector.load %arg5[%c0_7, %c0_8] : memref<1x128xf32, #tpu.memory_space<vmem>>, vector<1x128xf32>
    %9 = vector.broadcast %8 : vector<1x128xf32> to vector<128x128xf32>
    %10 = arith.addf %7, %9 : vector<128x128xf32>
    %c0_9 = arith.constant 0 : index
    %c0_10 = arith.constant 0 : index
    %11 = vector.load %arg17[%c0_9, %c0_10] : memref<128x128xf32, #tpu.memory_space<vmem>>, vector<128x128xf32>
    tpu.vector_store %arg17[%c0_9, %c0_10], %10 {strides = array<i32>} : memref<128x128xf32, #tpu.memory_space<vmem>>, vector<128x128xf32>,
    %c0_11 = arith.constant 0 : index
    %c0_12 = arith.constant 0 : index
    %12 = vector.load %arg4[%c0_11, %c0_12] : memref<32x128xf32, #tpu.memory_space<vmem>>, vector<32x128xf32>
    %cst_13 = arith.constant 0.000000e+00 : f32
    %13 = vector.broadcast %cst_13 : f32 to vector<8x32xf32>
    %c0_i32 = arith.constant 0 : i32
    %c2_i32 = arith.constant 2 : i32
    %14 = arith.addi %c0_i32, %c2_i32 : i32
    %c1_i32 = arith.constant 1 : i32
    %15:2 = scf.for %arg20 = %c0_i32 to %14 step %c1_i32 iter_args(%arg21 = %13, %arg22 = %13) -> (vector<8x32xf32>, vector<8x32xf32>)  : i32 {
      %c8_i32 = arith.constant 8 : i32
      %117 = arith.muli %arg20, %c8_i32 : i32
      %c0_i32_84 = arith.constant 0 : i32
      %118 = arith.addi %117, %c0_i32_84 : i32
      %c8_i32_85 = arith.constant 8 : i32
      %119 = arith.muli %118, %c8_i32_85 : i32
      %120 = tpu.assume_multiple %119, 8 : i32
      %121 = arith.index_cast %120 : i32 to index
      %c0_86 = arith.constant 0 : index
      %122 = vector.load %arg17[%121, %c0_86] : memref<128x128xf32, #tpu.memory_space<vmem>>, vector<8x128xf32>
      %cst_87 = arith.constant dense<0.000000e+00> : vector<8x128xf32>
      %123 = tpu.matmul %arg21, %12, %cst_87 {dimension_numbers = #tpu.dot_dimension_numbers<[1], [0], [0], [1], [0, 0, 1, 1], [], []>} : vector<8x32xf32>, vector<32x128xf32>, vector<8x128xf32> -> vector<8x128xf32>
      %124 = arith.addf %122, %123 : vector<8x128xf32>
      %125 = vector.extract_strided_slice %124 {offsets = [0, 0], sizes = [8, 96], strides = [1, 1]} : vector<8x128xf32> to vector<8x96xf32>
      %126 = arith.negf %125 : vector<8x96xf32>
      %127 = math.exp %126 : vector<8x96xf32>
      %cst_88 = arith.constant 1.000000e+00 : f32
      %128 = vector.broadcast %cst_88 : f32 to vector<8x96xf32>
      %129 = arith.addf %128, %127 : vector<8x96xf32>
      %130 = arith.divf %128, %129 : vector<8x96xf32>
      %131 = vector.extract_strided_slice %124 {offsets = [0, 96], sizes = [8, 32], strides = [1, 1]} : vector<8x128xf32> to vector<8x32xf32>
      %132 = math.tanh %131 : vector<8x32xf32>
      %133 = vector.extract_strided_slice %130 {offsets = [0, 0], sizes = [8, 32], strides = [1, 1]} : vector<8x96xf32> to vector<8x32xf32>
      %134 = vector.extract_strided_slice %130 {offsets = [0, 32], sizes = [8, 32], strides = [1, 1]} : vector<8x96xf32> to vector<8x32xf32>
      %135 = vector.extract_strided_slice %130 {offsets = [0, 64], sizes = [8, 32], strides = [1, 1]} : vector<8x96xf32> to vector<8x32xf32>
      %136 = arith.mulf %134, %arg22 : vector<8x32xf32>
      %137 = arith.mulf %133, %132 : vector<8x32xf32>
      %138 = arith.addf %136, %137 : vector<8x32xf32>
      %139 = math.tanh %138 : vector<8x32xf32>
      %140 = arith.mulf %135, %139 : vector<8x32xf32>
      %141 = arith.index_cast %120 : i32 to index
      %c0_89 = arith.constant 0 : index
      %142 = vector.load %arg18[%141, %c0_89] : memref<128x32xf32, #tpu.memory_space<vmem>>, vector<8x32xf32>
      tpu.vector_store %arg18[%141, %c0_89], %140 {strides = array<i32>} : memref<128x32xf32, #tpu.memory_space<vmem>>, vector<8x32xf32>,
      %c8_i32_90 = arith.constant 8 : i32
      %143 = arith.muli %arg20, %c8_i32_90 : i32
      %c1_i32_91 = arith.constant 1 : i32
      %144 = arith.addi %143, %c1_i32_91 : i32
      %c8_i32_92 = arith.constant 8 : i32
      %145 = arith.muli %144, %c8_i32_92 : i32
      %146 = tpu.assume_multiple %145, 8 : i32
      %147 = arith.index_cast %146 : i32 to index
      %c0_93 = arith.constant 0 : index
      %148 = vector.load %arg17[%147, %c0_93] : memref<128x128xf32, #tpu.memory_space<vmem>>, vector<8x128xf32>
      %cst_94 = arith.constant dense<0.000000e+00> : vector<8x128xf32>
      %149 = tpu.matmul %140, %12, %cst_94 {dimension_numbers = #tpu.dot_dimension_numbers<[1], [0], [0], [1], [0, 0, 1, 1], [], []>} : vector<8x32xf32>, vector<32x128xf32>, vector<8x128xf32> -> vector<8x128xf32>
      %150 = arith.addf %148, %149 : vector<8x128xf32>
      %151 = vector.extract_strided_slice %150 {offsets = [0, 0], sizes = [8, 96], strides = [1, 1]} : vector<8x128xf32> to vector<8x96xf32>
      %152 = arith.negf %151 : vector<8x96xf32>
      %153 = math.exp %152 : vector<8x96xf32>
      %cst_95 = arith.constant 1.000000e+00 : f32
      %154 = vector.broadcast %cst_95 : f32 to vector<8x96xf32>
      %155 = arith.addf %154, %153 : vector<8x96xf32>
      %156 = arith.divf %154, %155 : vector<8x96xf32>
      %157 = vector.extract_strided_slice %150 {offsets = [0, 96], sizes = [8, 32], strides = [1, 1]} : vector<8x128xf32> to vector<8x32xf32>
      %158 = math.tanh %157 : vector<8x32xf32>
      %159 = vector.extract_strided_slice %156 {offsets = [0, 0], sizes = [8, 32], strides = [1, 1]} : vector<8x96xf32> to vector<8x32xf32>
      %160 = vector.extract_strided_slice %156 {offsets = [0, 32], sizes = [8, 32], strides = [1, 1]} : vector<8x96xf32> to vector<8x32xf32>
      %161 = vector.extract_strided_slice %156 {offsets = [0, 64], sizes = [8, 32], strides = [1, 1]} : vector<8x96xf32> to vector<8x32xf32>
      %162 = arith.mulf %160, %138 : vector<8x32xf32>
      %163 = arith.mulf %159, %158 : vector<8x32xf32>
      %164 = arith.addf %162, %163 : vector<8x32xf32>
      %165 = math.tanh %164 : vector<8x32xf32>
      %166 = arith.mulf %161, %165 : vector<8x32xf32>
      %167 = arith.index_cast %146 : i32 to index
      %c0_96 = arith.constant 0 : index
      %168 = vector.load %arg18[%167, %c0_96] : memref<128x32xf32, #tpu.memory_space<vmem>>, vector<8x32xf32>
      tpu.vector_store %arg18[%167, %c0_96], %166 {strides = array<i32>} : memref<128x32xf32, #tpu.memory_space<vmem>>, vector<8x32xf32>,
      %c8_i32_97 = arith.constant 8 : i32
      %169 = arith.muli %arg20, %c8_i32_97 : i32
      %c2_i32_98 = arith.constant 2 : i32
      %170 = arith.addi %169, %c2_i32_98 : i32
      %c8_i32_99 = arith.constant 8 : i32
      %171 = arith.muli %170, %c8_i32_99 : i32
      %172 = tpu.assume_multiple %171, 8 : i32
      %173 = arith.index_cast %172 : i32 to index
      %c0_100 = arith.constant 0 : index
      %174 = vector.load %arg17[%173, %c0_100] : memref<128x128xf32, #tpu.memory_space<vmem>>, vector<8x128xf32>
      %cst_101 = arith.constant dense<0.000000e+00> : vector<8x128xf32>
      %175 = tpu.matmul %166, %12, %cst_101 {dimension_numbers = #tpu.dot_dimension_numbers<[1], [0], [0], [1], [0, 0, 1, 1], [], []>} : vector<8x32xf32>, vector<32x128xf32>, vector<8x128xf32> -> vector<8x128xf32>
      %176 = arith.addf %174, %175 : vector<8x128xf32>
      %177 = vector.extract_strided_slice %176 {offsets = [0, 0], sizes = [8, 96], strides = [1, 1]} : vector<8x128xf32> to vector<8x96xf32>
      %178 = arith.negf %177 : vector<8x96xf32>
      %179 = math.exp %178 : vector<8x96xf32>
      %cst_102 = arith.constant 1.000000e+00 : f32
      %180 = vector.broadcast %cst_102 : f32 to vector<8x96xf32>
      %181 = arith.addf %180, %179 : vector<8x96xf32>
      %182 = arith.divf %180, %181 : vector<8x96xf32>
      %183 = vector.extract_strided_slice %176 {offsets = [0, 96], sizes = [8, 32], strides = [1, 1]} : vector<8x128xf32> to vector<8x32xf32>
      %184 = math.tanh %183 : vector<8x32xf32>
      %185 = vector.extract_strided_slice %182 {offsets = [0, 0], sizes = [8, 32], strides = [1, 1]} : vector<8x96xf32> to vector<8x32xf32>
      %186 = vector.extract_strided_slice %182 {offsets = [0, 32], sizes = [8, 32], strides = [1, 1]} : vector<8x96xf32> to vector<8x32xf32>
      %187 = vector.extract_strided_slice %182 {offsets = [0, 64], sizes = [8, 32], strides = [1, 1]} : vector<8x96xf32> to vector<8x32xf32>
      %188 = arith.mulf %186, %164 : vector<8x32xf32>
      %189 = arith.mulf %185, %184 : vector<8x32xf32>
      %190 = arith.addf %188, %189 : vector<8x32xf32>
      %191 = math.tanh %190 : vector<8x32xf32>
      %192 = arith.mulf %187, %191 : vector<8x32xf32>
      %193 = arith.index_cast %172 : i32 to index
      %c0_103 = arith.constant 0 : index
      %194 = vector.load %arg18[%193, %c0_103] : memref<128x32xf32, #tpu.memory_space<vmem>>, vector<8x32xf32>
      tpu.vector_store %arg18[%193, %c0_103], %192 {strides = array<i32>} : memref<128x32xf32, #tpu.memory_space<vmem>>, vector<8x32xf32>,
      %c8_i32_104 = arith.constant 8 : i32
      %195 = arith.muli %arg20, %c8_i32_104 : i32
      %c3_i32 = arith.constant 3 : i32
      %196 = arith.addi %195, %c3_i32 : i32
      %c8_i32_105 = arith.constant 8 : i32
      %197 = arith.muli %196, %c8_i32_105 : i32
      %198 = tpu.assume_multiple %197, 8 : i32
      %199 = arith.index_cast %198 : i32 to index
      %c0_106 = arith.constant 0 : index
      %200 = vector.load %arg17[%199, %c0_106] : memref<128x128xf32, #tpu.memory_space<vmem>>, vector<8x128xf32>
      %cst_107 = arith.constant dense<0.000000e+00> : vector<8x128xf32>
      %201 = tpu.matmul %192, %12, %cst_107 {dimension_numbers = #tpu.dot_dimension_numbers<[1], [0], [0], [1], [0, 0, 1, 1], [], []>} : vector<8x32xf32>, vector<32x128xf32>, vector<8x128xf32> -> vector<8x128xf32>
      %202 = arith.addf %200, %201 : vector<8x128xf32>
      %203 = vector.extract_strided_slice %202 {offsets = [0, 0], sizes = [8, 96], strides = [1, 1]} : vector<8x128xf32> to vector<8x96xf32>
      %204 = arith.negf %203 : vector<8x96xf32>
      %205 = math.exp %204 : vector<8x96xf32>
      %cst_108 = arith.constant 1.000000e+00 : f32
      %206 = vector.broadcast %cst_108 : f32 to vector<8x96xf32>
      %207 = arith.addf %206, %205 : vector<8x96xf32>
      %208 = arith.divf %206, %207 : vector<8x96xf32>
      %209 = vector.extract_strided_slice %202 {offsets = [0, 96], sizes = [8, 32], strides = [1, 1]} : vector<8x128xf32> to vector<8x32xf32>
      %210 = math.tanh %209 : vector<8x32xf32>
      %211 = vector.extract_strided_slice %208 {offsets = [0, 0], sizes = [8, 32], strides = [1, 1]} : vector<8x96xf32> to vector<8x32xf32>
      %212 = vector.extract_strided_slice %208 {offsets = [0, 32], sizes = [8, 32], strides = [1, 1]} : vector<8x96xf32> to vector<8x32xf32>
      %213 = vector.extract_strided_slice %208 {offsets = [0, 64], sizes = [8, 32], strides = [1, 1]} : vector<8x96xf32> to vector<8x32xf32>
      %214 = arith.mulf %212, %190 : vector<8x32xf32>
      %215 = arith.mulf %211, %210 : vector<8x32xf32>
      %216 = arith.addf %214, %215 : vector<8x32xf32>
      %217 = math.tanh %216 : vector<8x32xf32>
      %218 = arith.mulf %213, %217 : vector<8x32xf32>
      %219 = arith.index_cast %198 : i32 to index
      %c0_109 = arith.constant 0 : index
      %220 = vector.load %arg18[%219, %c0_109] : memref<128x32xf32, #tpu.memory_space<vmem>>, vector<8x32xf32>
      tpu.vector_store %arg18[%219, %c0_109], %218 {strides = array<i32>} : memref<128x32xf32, #tpu.memory_space<vmem>>, vector<8x32xf32>,
      %c8_i32_110 = arith.constant 8 : i32
      %221 = arith.muli %arg20, %c8_i32_110 : i32
      %c4_i32 = arith.constant 4 : i32
      %222 = arith.addi %221, %c4_i32 : i32
      %c8_i32_111 = arith.constant 8 : i32
      %223 = arith.muli %222, %c8_i32_111 : i32
      %224 = tpu.assume_multiple %223, 8 : i32
      %225 = arith.index_cast %224 : i32 to index
      %c0_112 = arith.constant 0 : index
      %226 = vector.load %arg17[%225, %c0_112] : memref<128x128xf32, #tpu.memory_space<vmem>>, vector<8x128xf32>
      %cst_113 = arith.constant dense<0.000000e+00> : vector<8x128xf32>
      %227 = tpu.matmul %218, %12, %cst_113 {dimension_numbers = #tpu.dot_dimension_numbers<[1], [0], [0], [1], [0, 0, 1, 1], [], []>} : vector<8x32xf32>, vector<32x128xf32>, vector<8x128xf32> -> vector<8x128xf32>
      %228 = arith.addf %226, %227 : vector<8x128xf32>
      %229 = vector.extract_strided_slice %228 {offsets = [0, 0], sizes = [8, 96], strides = [1, 1]} : vector<8x128xf32> to vector<8x96xf32>
      %230 = arith.negf %229 : vector<8x96xf32>
      %231 = math.exp %230 : vector<8x96xf32>
      %cst_114 = arith.constant 1.000000e+00 : f32
      %232 = vector.broadcast %cst_114 : f32 to vector<8x96xf32>
      %233 = arith.addf %232, %231 : vector<8x96xf32>
      %234 = arith.divf %232, %233 : vector<8x96xf32>
      %235 = vector.extract_strided_slice %228 {offsets = [0, 96], sizes = [8, 32], strides = [1, 1]} : vector<8x128xf32> to vector<8x32xf32>
      %236 = math.tanh %235 : vector<8x32xf32>
      %237 = vector.extract_strided_slice %234 {offsets = [0, 0], sizes = [8, 32], strides = [1, 1]} : vector<8x96xf32> to vector<8x32xf32>
      %238 = vector.extract_strided_slice %234 {offsets = [0, 32], sizes = [8, 32], strides = [1, 1]} : vector<8x96xf32> to vector<8x32xf32>
      %239 = vector.extract_strided_slice %234 {offsets = [0, 64], sizes = [8, 32], strides = [1, 1]} : vector<8x96xf32> to vector<8x32xf32>
      %240 = arith.mulf %238, %216 : vector<8x32xf32>
      %241 = arith.mulf %237, %236 : vector<8x32xf32>
      %242 = arith.addf %240, %241 : vector<8x32xf32>
      %243 = math.tanh %242 : vector<8x32xf32>
      %244 = arith.mulf %239, %243 : vector<8x32xf32>
      %245 = arith.index_cast %224 : i32 to index
      %c0_115 = arith.constant 0 : index
      %246 = vector.load %arg18[%245, %c0_115] : memref<128x32xf32, #tpu.memory_space<vmem>>, vector<8x32xf32>
      tpu.vector_store %arg18[%245, %c0_115], %244 {strides = array<i32>} : memref<128x32xf32, #tpu.memory_space<vmem>>, vector<8x32xf32>,
      %c8_i32_116 = arith.constant 8 : i32
      %247 = arith.muli %arg20, %c8_i32_116 : i32
      %c5_i32 = arith.constant 5 : i32
      %248 = arith.addi %247, %c5_i32 : i32
      %c8_i32_117 = arith.constant 8 : i32
      %249 = arith.muli %248, %c8_i32_117 : i32
      %250 = tpu.assume_multiple %249, 8 : i32
      %251 = arith.index_cast %250 : i32 to index
      %c0_118 = arith.constant 0 : index
      %252 = vector.load %arg17[%251, %c0_118] : memref<128x128xf32, #tpu.memory_space<vmem>>, vector<8x128xf32>
      %cst_119 = arith.constant dense<0.000000e+00> : vector<8x128xf32>
      %253 = tpu.matmul %244, %12, %cst_119 {dimension_numbers = #tpu.dot_dimension_numbers<[1], [0], [0], [1], [0, 0, 1, 1], [], []>} : vector<8x32xf32>, vector<32x128xf32>, vector<8x128xf32> -> vector<8x128xf32>
      %254 = arith.addf %252, %253 : vector<8x128xf32>
      %255 = vector.extract_strided_slice %254 {offsets = [0, 0], sizes = [8, 96], strides = [1, 1]} : vector<8x128xf32> to vector<8x96xf32>
      %256 = arith.negf %255 : vector<8x96xf32>
      %257 = math.exp %256 : vector<8x96xf32>
      %cst_120 = arith.constant 1.000000e+00 : f32
      %258 = vector.broadcast %cst_120 : f32 to vector<8x96xf32>
      %259 = arith.addf %258, %257 : vector<8x96xf32>
      %260 = arith.divf %258, %259 : vector<8x96xf32>
      %261 = vector.extract_strided_slice %254 {offsets = [0, 96], sizes = [8, 32], strides = [1, 1]} : vector<8x128xf32> to vector<8x32xf32>
      %262 = math.tanh %261 : vector<8x32xf32>
      %263 = vector.extract_strided_slice %260 {offsets = [0, 0], sizes = [8, 32], strides = [1, 1]} : vector<8x96xf32> to vector<8x32xf32>
      %264 = vector.extract_strided_slice %260 {offsets = [0, 32], sizes = [8, 32], strides = [1, 1]} : vector<8x96xf32> to vector<8x32xf32>
      %265 = vector.extract_strided_slice %260 {offsets = [0, 64], sizes = [8, 32], strides = [1, 1]} : vector<8x96xf32> to vector<8x32xf32>
      %266 = arith.mulf %264, %242 : vector<8x32xf32>
      %267 = arith.mulf %263, %262 : vector<8x32xf32>
      %268 = arith.addf %266, %267 : vector<8x32xf32>
      %269 = math.tanh %268 : vector<8x32xf32>
      %270 = arith.mulf %265, %269 : vector<8x32xf32>
      %271 = arith.index_cast %250 : i32 to index
      %c0_121 = arith.constant 0 : index
      %272 = vector.load %arg18[%271, %c0_121] : memref<128x32xf32, #tpu.memory_space<vmem>>, vector<8x32xf32>
      tpu.vector_store %arg18[%271, %c0_121], %270 {strides = array<i32>} : memref<128x32xf32, #tpu.memory_space<vmem>>, vector<8x32xf32>,
      %c8_i32_122 = arith.constant 8 : i32
      %273 = arith.muli %arg20, %c8_i32_122 : i32
      %c6_i32 = arith.constant 6 : i32
      %274 = arith.addi %273, %c6_i32 : i32
      %c8_i32_123 = arith.constant 8 : i32
      %275 = arith.muli %274, %c8_i32_123 : i32
      %276 = tpu.assume_multiple %275, 8 : i32
      %277 = arith.index_cast %276 : i32 to index
      %c0_124 = arith.constant 0 : index
      %278 = vector.load %arg17[%277, %c0_124] : memref<128x128xf32, #tpu.memory_space<vmem>>, vector<8x128xf32>
      %cst_125 = arith.constant dense<0.000000e+00> : vector<8x128xf32>
      %279 = tpu.matmul %270, %12, %cst_125 {dimension_numbers = #tpu.dot_dimension_numbers<[1], [0], [0], [1], [0, 0, 1, 1], [], []>} : vector<8x32xf32>, vector<32x128xf32>, vector<8x128xf32> -> vector<8x128xf32>
      %280 = arith.addf %278, %279 : vector<8x128xf32>
      %281 = vector.extract_strided_slice %280 {offsets = [0, 0], sizes = [8, 96], strides = [1, 1]} : vector<8x128xf32> to vector<8x96xf32>
      %282 = arith.negf %281 : vector<8x96xf32>
      %283 = math.exp %282 : vector<8x96xf32>
      %cst_126 = arith.constant 1.000000e+00 : f32
      %284 = vector.broadcast %cst_126 : f32 to vector<8x96xf32>
      %285 = arith.addf %284, %283 : vector<8x96xf32>
      %286 = arith.divf %284, %285 : vector<8x96xf32>
      %287 = vector.extract_strided_slice %280 {offsets = [0, 96], sizes = [8, 32], strides = [1, 1]} : vector<8x128xf32> to vector<8x32xf32>
      %288 = math.tanh %287 : vector<8x32xf32>
      %289 = vector.extract_strided_slice %286 {offsets = [0, 0], sizes = [8, 32], strides = [1, 1]} : vector<8x96xf32> to vector<8x32xf32>
      %290 = vector.extract_strided_slice %286 {offsets = [0, 32], sizes = [8, 32], strides = [1, 1]} : vector<8x96xf32> to vector<8x32xf32>
      %291 = vector.extract_strided_slice %286 {offsets = [0, 64], sizes = [8, 32], strides = [1, 1]} : vector<8x96xf32> to vector<8x32xf32>
      %292 = arith.mulf %290, %268 : vector<8x32xf32>
      %293 = arith.mulf %289, %288 : vector<8x32xf32>
      %294 = arith.addf %292, %293 : vector<8x32xf32>
      %295 = math.tanh %294 : vector<8x32xf32>
      %296 = arith.mulf %291, %295 : vector<8x32xf32>
      %297 = arith.index_cast %276 : i32 to index
      %c0_127 = arith.constant 0 : index
      %298 = vector.load %arg18[%297, %c0_127] : memref<128x32xf32, #tpu.memory_space<vmem>>, vector<8x32xf32>
      tpu.vector_store %arg18[%297, %c0_127], %296 {strides = array<i32>} : memref<128x32xf32, #tpu.memory_space<vmem>>, vector<8x32xf32>,
      %c8_i32_128 = arith.constant 8 : i32
      %299 = arith.muli %arg20, %c8_i32_128 : i32
      %c7_i32 = arith.constant 7 : i32
      %300 = arith.addi %299, %c7_i32 : i32
      %c8_i32_129 = arith.constant 8 : i32
      %301 = arith.muli %300, %c8_i32_129 : i32
      %302 = tpu.assume_multiple %301, 8 : i32
      %303 = arith.index_cast %302 : i32 to index
      %c0_130 = arith.constant 0 : index
      %304 = vector.load %arg17[%303, %c0_130] : memref<128x128xf32, #tpu.memory_space<vmem>>, vector<8x128xf32>
      %cst_131 = arith.constant dense<0.000000e+00> : vector<8x128xf32>
      %305 = tpu.matmul %296, %12, %cst_131 {dimension_numbers = #tpu.dot_dimension_numbers<[1], [0], [0], [1], [0, 0, 1, 1], [], []>} : vector<8x32xf32>, vector<32x128xf32>, vector<8x128xf32> -> vector<8x128xf32>
      %306 = arith.addf %304, %305 : vector<8x128xf32>
      %307 = vector.extract_strided_slice %306 {offsets = [0, 0], sizes = [8, 96], strides = [1, 1]} : vector<8x128xf32> to vector<8x96xf32>
      %308 = arith.negf %307 : vector<8x96xf32>
      %309 = math.exp %308 : vector<8x96xf32>
      %cst_132 = arith.constant 1.000000e+00 : f32
      %310 = vector.broadcast %cst_132 : f32 to vector<8x96xf32>
      %311 = arith.addf %310, %309 : vector<8x96xf32>
      %312 = arith.divf %310, %311 : vector<8x96xf32>
      %313 = vector.extract_strided_slice %306 {offsets = [0, 96], sizes = [8, 32], strides = [1, 1]} : vector<8x128xf32> to vector<8x32xf32>
      %314 = math.tanh %313 : vector<8x32xf32>
      %315 = vector.extract_strided_slice %312 {offsets = [0, 0], sizes = [8, 32], strides = [1, 1]} : vector<8x96xf32> to vector<8x32xf32>
      %316 = vector.extract_strided_slice %312 {offsets = [0, 32], sizes = [8, 32], strides = [1, 1]} : vector<8x96xf32> to vector<8x32xf32>
      %317 = vector.extract_strided_slice %312 {offsets = [0, 64], sizes = [8, 32], strides = [1, 1]} : vector<8x96xf32> to vector<8x32xf32>
      %318 = arith.mulf %316, %294 : vector<8x32xf32>
      %319 = arith.mulf %315, %314 : vector<8x32xf32>
      %320 = arith.addf %318, %319 : vector<8x32xf32>
      %321 = math.tanh %320 : vector<8x32xf32>
      %322 = arith.mulf %317, %321 : vector<8x32xf32>
      %323 = arith.index_cast %302 : i32 to index
      %c0_133 = arith.constant 0 : index
      %324 = vector.load %arg18[%323, %c0_133] : memref<128x32xf32, #tpu.memory_space<vmem>>, vector<8x32xf32>
      tpu.vector_store %arg18[%323, %c0_133], %322 {strides = array<i32>} : memref<128x32xf32, #tpu.memory_space<vmem>>, vector<8x32xf32>,
      scf.yield %322, %320 : vector<8x32xf32>, vector<8x32xf32>
    }
    %c2_i32_14 = arith.constant 2 : i32
    %c0_15 = arith.constant 0 : index
    %c0_16 = arith.constant 0 : index
    %16 = vector.load %arg18[%c0_15, %c0_16] : memref<128x32xf32, #tpu.memory_space<vmem>>, vector<128x32xf32>
    %17 = math.tanh %16 : vector<128x32xf32>
    %cst_17 = arith.constant 0.000000e+00 : f32
    %18 = vector.broadcast %cst_17 : f32 to vector<8x32xf32>
    %c0_18 = arith.constant 0 : index
    %c0_19 = arith.constant 0 : index
    %19 = vector.load %arg19[%c0_18, %c0_19] : memref<144x32xf32, #tpu.memory_space<vmem>>, vector<8x32xf32>
    tpu.vector_store %arg19[%c0_18, %c0_19], %18 {strides = array<i32>} : memref<144x32xf32, #tpu.memory_space<vmem>>, vector<8x32xf32>,
    %cst_20 = arith.constant 0.000000e+00 : f32
    %20 = vector.broadcast %cst_20 : f32 to vector<8x32xf32>
    %c136 = arith.constant 136 : index
    %c0_21 = arith.constant 0 : index
    %21 = vector.load %arg19[%c136, %c0_21] : memref<144x32xf32, #tpu.memory_space<vmem>>, vector<8x32xf32>
    tpu.vector_store %arg19[%c136, %c0_21], %20 {strides = array<i32>} : memref<144x32xf32, #tpu.memory_space<vmem>>, vector<8x32xf32>,
    %c8 = arith.constant 8 : index
    %c0_22 = arith.constant 0 : index
    %22 = vector.load %arg19[%c8, %c0_22] : memref<144x32xf32, #tpu.memory_space<vmem>>, vector<128x32xf32>
    tpu.vector_store %arg19[%c8, %c0_22], %1 {strides = array<i32>} : memref<144x32xf32, #tpu.memory_space<vmem>>, vector<128x32xf32>,
    %c0_23 = arith.constant 0 : index
    %c0_24 = arith.constant 0 : index
    %23 = vector.load %arg19[%c0_23, %c0_24] : memref<144x32xf32, #tpu.memory_space<vmem>>, vector<128x32xf32>
    %c0_25 = arith.constant 0 : index
    %c0_26 = arith.constant 0 : index
    %c0_27 = arith.constant 0 : index
    %24 = vector.load %arg6[%c0_25, %c0_26, %c0_27] : memref<3x32x64xf32, #tpu.memory_space<vmem>>, vector<1x32x64xf32>
    %25 = vector.shape_cast %24 : vector<1x32x64xf32> to vector<32x64xf32>
    %cst_28 = arith.constant dense<0.000000e+00> : vector<128x64xf32>
    %26 = tpu.matmul %23, %25, %cst_28 {dimension_numbers = #tpu.dot_dimension_numbers<[1], [0], [0], [1], [0, 0, 1, 1], [], []>} : vector<128x32xf32>, vector<32x64xf32>, vector<128x64xf32> -> vector<128x64xf32>
    %c8_29 = arith.constant 8 : index
    %c0_30 = arith.constant 0 : index
    %27 = vector.load %arg19[%c8_29, %c0_30] : memref<144x32xf32, #tpu.memory_space<vmem>>, vector<128x32xf32>
    %c1 = arith.constant 1 : index
    %c0_31 = arith.constant 0 : index
    %c0_32 = arith.constant 0 : index
    %28 = vector.load %arg6[%c1, %c0_31, %c0_32] : memref<3x32x64xf32, #tpu.memory_space<vmem>>, vector<1x32x64xf32>
    %29 = vector.shape_cast %28 : vector<1x32x64xf32> to vector<32x64xf32>
    %cst_33 = arith.constant dense<0.000000e+00> : vector<128x64xf32>
    %30 = tpu.matmul %27, %29, %cst_33 {dimension_numbers = #tpu.dot_dimension_numbers<[1], [0], [0], [1], [0, 0, 1, 1], [], []>} : vector<128x32xf32>, vector<32x64xf32>, vector<128x64xf32> -> vector<128x64xf32>
    %31 = arith.addf %26, %30 : vector<128x64xf32>
    %c16 = arith.constant 16 : index
    %c0_34 = arith.constant 0 : index
    %32 = vector.load %arg19[%c16, %c0_34] : memref<144x32xf32, #tpu.memory_space<vmem>>, vector<128x32xf32>
    %c2 = arith.constant 2 : index
    %c0_35 = arith.constant 0 : index
    %c0_36 = arith.constant 0 : index
    %33 = vector.load %arg6[%c2, %c0_35, %c0_36] : memref<3x32x64xf32, #tpu.memory_space<vmem>>, vector<1x32x64xf32>
    %34 = vector.shape_cast %33 : vector<1x32x64xf32> to vector<32x64xf32>
    %cst_37 = arith.constant dense<0.000000e+00> : vector<128x64xf32>
    %35 = tpu.matmul %32, %34, %cst_37 {dimension_numbers = #tpu.dot_dimension_numbers<[1], [0], [0], [1], [0, 0, 1, 1], [], []>} : vector<128x32xf32>, vector<32x64xf32>, vector<128x64xf32> -> vector<128x64xf32>
    %36 = arith.addf %31, %35 : vector<128x64xf32>
    %c0_38 = arith.constant 0 : index
    %c0_39 = arith.constant 0 : index
    %37 = vector.load %arg7[%c0_38, %c0_39] : memref<1x64xf32, #tpu.memory_space<vmem>>, vector<1x64xf32>
    %38 = vector.broadcast %37 : vector<1x64xf32> to vector<128x64xf32>
    %39 = arith.addf %36, %38 : vector<128x64xf32>
    %40 = vector.extract_strided_slice %39 {offsets = [0, 0], sizes = [128, 32], strides = [1, 1]} : vector<128x64xf32> to vector<128x32xf32>
    %41 = vector.extract_strided_slice %39 {offsets = [0, 32], sizes = [128, 32], strides = [1, 1]} : vector<128x64xf32> to vector<128x32xf32>
    %42 = arith.negf %41 : vector<128x32xf32>
    %43 = math.exp %42 : vector<128x32xf32>
    %cst_40 = arith.constant 1.000000e+00 : f32
    %44 = vector.broadcast %cst_40 : f32 to vector<128x32xf32>
    %45 = arith.addf %44, %43 : vector<128x32xf32>
    %46 = arith.divf %44, %45 : vector<128x32xf32>
    %47 = arith.mulf %40, %46 : vector<128x32xf32>
    %c0_41 = arith.constant 0 : index
    %c0_42 = arith.constant 0 : index
    %48 = vector.load %arg8[%c0_41, %c0_42] : memref<1x32xf32, #tpu.memory_space<vmem>>, vector<1x32xf32>
    %49 = vector.broadcast %48 : vector<1x32xf32> to vector<128x32xf32>
    %50 = arith.mulf %47, %49 : vector<128x32xf32>
    %c0_43 = arith.constant 0 : index
    %c0_44 = arith.constant 0 : index
    %51 = vector.load %arg9[%c0_43, %c0_44] : memref<1x32xf32, #tpu.memory_space<vmem>>, vector<1x32xf32>
    %52 = vector.broadcast %51 : vector<1x32xf32> to vector<128x32xf32>
    %53 = arith.addf %50, %52 : vector<128x32xf32>
    %54 = arith.mulf %53, %5 : vector<128x32xf32>
    %c8_45 = arith.constant 8 : index
    %c0_46 = arith.constant 0 : index
    %55 = vector.load %arg19[%c8_45, %c0_46] : memref<144x32xf32, #tpu.memory_space<vmem>>, vector<128x32xf32>
    tpu.vector_store %arg19[%c8_45, %c0_46], %54 {strides = array<i32>} : memref<144x32xf32, #tpu.memory_space<vmem>>, vector<128x32xf32>,
    %c0_47 = arith.constant 0 : index
    %c0_48 = arith.constant 0 : index
    %56 = vector.load %arg19[%c0_47, %c0_48] : memref<144x32xf32, #tpu.memory_space<vmem>>, vector<128x32xf32>
    %c0_49 = arith.constant 0 : index
    %c0_50 = arith.constant 0 : index
    %c0_51 = arith.constant 0 : index
    %57 = vector.load %arg10[%c0_49, %c0_50, %c0_51] : memref<3x32x64xf32, #tpu.memory_space<vmem>>, vector<1x32x64xf32>
    %58 = vector.shape_cast %57 : vector<1x32x64xf32> to vector<32x64xf32>
    %cst_52 = arith.constant dense<0.000000e+00> : vector<128x64xf32>
    %59 = tpu.matmul %56, %58, %cst_52 {dimension_numbers = #tpu.dot_dimension_numbers<[1], [0], [0], [1], [0, 0, 1, 1], [], []>} : vector<128x32xf32>, vector<32x64xf32>, vector<128x64xf32> -> vector<128x64xf32>
    %c8_53 = arith.constant 8 : index
    %c0_54 = arith.constant 0 : index
    %60 = vector.load %arg19[%c8_53, %c0_54] : memref<144x32xf32, #tpu.memory_space<vmem>>, vector<128x32xf32>
    %c1_55 = arith.constant 1 : index
    %c0_56 = arith.constant 0 : index
    %c0_57 = arith.constant 0 : index
    %61 = vector.load %arg10[%c1_55, %c0_56, %c0_57] : memref<3x32x64xf32, #tpu.memory_space<vmem>>, vector<1x32x64xf32>
    %62 = vector.shape_cast %61 : vector<1x32x64xf32> to vector<32x64xf32>
    %cst_58 = arith.constant dense<0.000000e+00> : vector<128x64xf32>
    %63 = tpu.matmul %60, %62, %cst_58 {dimension_numbers = #tpu.dot_dimension_numbers<[1], [0], [0], [1], [0, 0, 1, 1], [], []>} : vector<128x32xf32>, vector<32x64xf32>, vector<128x64xf32> -> vector<128x64xf32>
    %64 = arith.addf %59, %63 : vector<128x64xf32>
    %c16_59 = arith.constant 16 : index
    %c0_60 = arith.constant 0 : index
    %65 = vector.load %arg19[%c16_59, %c0_60] : memref<144x32xf32, #tpu.memory_space<vmem>>, vector<128x32xf32>
    %c2_61 = arith.constant 2 : index
    %c0_62 = arith.constant 0 : index
    %c0_63 = arith.constant 0 : index
    %66 = vector.load %arg10[%c2_61, %c0_62, %c0_63] : memref<3x32x64xf32, #tpu.memory_space<vmem>>, vector<1x32x64xf32>
    %67 = vector.shape_cast %66 : vector<1x32x64xf32> to vector<32x64xf32>
    %cst_64 = arith.constant dense<0.000000e+00> : vector<128x64xf32>
    %68 = tpu.matmul %65, %67, %cst_64 {dimension_numbers = #tpu.dot_dimension_numbers<[1], [0], [0], [1], [0, 0, 1, 1], [], []>} : vector<128x32xf32>, vector<32x64xf32>, vector<128x64xf32> -> vector<128x64xf32>
    %69 = arith.addf %64, %68 : vector<128x64xf32>
    %c0_65 = arith.constant 0 : index
    %c0_66 = arith.constant 0 : index
    %70 = vector.load %arg11[%c0_65, %c0_66] : memref<1x64xf32, #tpu.memory_space<vmem>>, vector<1x64xf32>
    %71 = vector.broadcast %70 : vector<1x64xf32> to vector<128x64xf32>
    %72 = arith.addf %69, %71 : vector<128x64xf32>
    %73 = vector.extract_strided_slice %72 {offsets = [0, 0], sizes = [128, 32], strides = [1, 1]} : vector<128x64xf32> to vector<128x32xf32>
    %74 = vector.extract_strided_slice %72 {offsets = [0, 32], sizes = [128, 32], strides = [1, 1]} : vector<128x64xf32> to vector<128x32xf32>
    %75 = arith.negf %74 : vector<128x32xf32>
    %76 = math.exp %75 : vector<128x32xf32>
    %cst_67 = arith.constant 1.000000e+00 : f32
    %77 = vector.broadcast %cst_67 : f32 to vector<128x32xf32>
    %78 = arith.addf %77, %76 : vector<128x32xf32>
    %79 = arith.divf %77, %78 : vector<128x32xf32>
    %80 = arith.mulf %73, %79 : vector<128x32xf32>
    %c0_68 = arith.constant 0 : index
    %c0_69 = arith.constant 0 : index
    %81 = vector.load %arg12[%c0_68, %c0_69] : memref<1x32xf32, #tpu.memory_space<vmem>>, vector<1x32xf32>
    %82 = vector.broadcast %81 : vector<1x32xf32> to vector<128x32xf32>
    %83 = arith.mulf %80, %82 : vector<128x32xf32>
    %c0_70 = arith.constant 0 : index
    %c0_71 = arith.constant 0 : index
    %84 = vector.load %arg13[%c0_70, %c0_71] : memref<1x32xf32, #tpu.memory_space<vmem>>, vector<1x32xf32>
    %85 = vector.broadcast %84 : vector<1x32xf32> to vector<128x32xf32>
    %86 = arith.addf %83, %85 : vector<128x32xf32>
    %87 = arith.mulf %86, %5 : vector<128x32xf32>
    %88 = arith.addf %17, %87 : vector<128x32xf32>
    %cst_72 = arith.constant dense<0.000000e+00> : vector<128xf32>
    %89 = vector.multi_reduction <add>, %88, %cst_72 [1] : vector<128x32xf32> to vector<128xf32>
    %90 = vector.shape_cast %89 : vector<128xf32> to vector<128x1xf32>
    %cst_73 = arith.constant 3.200000e+01 : f32
    %91 = vector.broadcast %cst_73 : f32 to vector<128x1xf32>
    %92 = arith.divf %90, %91 : vector<128x1xf32>
    %93 = vector.broadcast %92 : vector<128x1xf32> to vector<128x32xf32>
    %94 = arith.subf %88, %93 : vector<128x32xf32>
    %95 = arith.mulf %94, %94 : vector<128x32xf32>
    %cst_74 = arith.constant dense<0.000000e+00> : vector<128xf32>
    %96 = vector.multi_reduction <add>, %95, %cst_74 [1] : vector<128x32xf32> to vector<128xf32>
    %97 = vector.shape_cast %96 : vector<128xf32> to vector<128x1xf32>
    %cst_75 = arith.constant 3.200000e+01 : f32
    %98 = vector.broadcast %cst_75 : f32 to vector<128x1xf32>
    %99 = arith.divf %97, %98 : vector<128x1xf32>
    %100 = vector.broadcast %92 : vector<128x1xf32> to vector<128x32xf32>
    %101 = arith.subf %88, %100 : vector<128x32xf32>
    %cst_76 = arith.constant 9.99999974E-6 : f32
    %102 = vector.broadcast %cst_76 : f32 to vector<128x1xf32>
    %103 = arith.addf %99, %102 : vector<128x1xf32>
    %104 = math.rsqrt %103 : vector<128x1xf32>
    %105 = vector.broadcast %104 : vector<128x1xf32> to vector<128x32xf32>
    %106 = arith.mulf %101, %105 : vector<128x32xf32>
    %c0_77 = arith.constant 0 : index
    %c0_78 = arith.constant 0 : index
    %107 = vector.load %arg14[%c0_77, %c0_78] : memref<1x32xf32, #tpu.memory_space<vmem>>, vector<1x32xf32>
    %108 = vector.broadcast %107 : vector<1x32xf32> to vector<128x32xf32>
    %109 = arith.mulf %106, %108 : vector<128x32xf32>
    %c0_79 = arith.constant 0 : index
    %c0_80 = arith.constant 0 : index
    %110 = vector.load %arg15[%c0_79, %c0_80] : memref<1x32xf32, #tpu.memory_space<vmem>>, vector<1x32xf32>
    %111 = vector.broadcast %110 : vector<1x32xf32> to vector<128x32xf32>
    %112 = arith.addf %109, %111 : vector<128x32xf32>
    %113 = arith.addf %1, %112 : vector<128x32xf32>
    %c0_81 = arith.constant 0 : index
    %c0_82 = arith.constant 0 : index
    %c0_83 = arith.constant 0 : index
    %114 = vector.load %arg16[%c0_81, %c0_82, %c0_83] : memref<1x128x32xf32, #tpu.memory_space<vmem>>, vector<1x128x32xf32>
    %115 = vector.shape_cast %114 : vector<1x128x32xf32> to vector<128x32xf32>
    %116 = vector.shape_cast %113 : vector<128x32xf32> to vector<1x128x32xf32>
    tpu.vector_store %arg16[%c0_81, %c0_82, %c0_83], %116 {strides = array<i32>} : memref<1x128x32xf32, #tpu.memory_space<vmem>>, vector<1x128x32xf32>,
    return
  }
  func.func @transform_0(%arg0: i32) -> (i32, i32, i32) {
    %c0_i32 = arith.constant 0 : i32
    %c0_i32_0 = arith.constant 0 : i32
    %c0_i32_1 = arith.constant 0 : i32
    return %arg0, %c0_i32, %c0_i32_0 : i32, i32, i32
  }
  func.func @transform_1(%arg0: i32) -> (i32, i32, i32) {
    %c0_i32 = arith.constant 0 : i32
    %c0_i32_0 = arith.constant 0 : i32
    %c0_i32_1 = arith.constant 0 : i32
    return %arg0, %c0_i32, %c0_i32_0 : i32, i32, i32
  }
  func.func @transform_2(%arg0: i32) -> (i32, i32) {
    %c0_i32 = arith.constant 0 : i32
    %c0_i32_0 = arith.constant 0 : i32
    %c0_i32_1 = arith.constant 0 : i32
    return %c0_i32, %c0_i32_0 : i32, i32
  }
  func.func @transform_3(%arg0: i32) -> (i32, i32) {
    %c0_i32 = arith.constant 0 : i32
    %c0_i32_0 = arith.constant 0 : i32
    %c0_i32_1 = arith.constant 0 : i32
    return %c0_i32, %c0_i32_0 : i32, i32
  }
  func.func @transform_4(%arg0: i32) -> (i32, i32) {
    %c0_i32 = arith.constant 0 : i32
    %c0_i32_0 = arith.constant 0 : i32
    %c0_i32_1 = arith.constant 0 : i32
    return %c0_i32, %c0_i32_0 : i32, i32
  }
  func.func @transform_5(%arg0: i32) -> (i32, i32, i32) {
    %c0_i32 = arith.constant 0 : i32
    %c0_i32_0 = arith.constant 0 : i32
    %c0_i32_1 = arith.constant 0 : i32
    %c0_i32_2 = arith.constant 0 : i32
    return %c0_i32, %c0_i32_0, %c0_i32_1 : i32, i32, i32
  }
  func.func @transform_6(%arg0: i32) -> (i32, i32) {
    %c0_i32 = arith.constant 0 : i32
    %c0_i32_0 = arith.constant 0 : i32
    %c0_i32_1 = arith.constant 0 : i32
    return %c0_i32, %c0_i32_0 : i32, i32
  }
  func.func @transform_7(%arg0: i32) -> (i32, i32) {
    %c0_i32 = arith.constant 0 : i32
    %c0_i32_0 = arith.constant 0 : i32
    %c0_i32_1 = arith.constant 0 : i32
    return %c0_i32, %c0_i32_0 : i32, i32
  }
  func.func @transform_8(%arg0: i32) -> (i32, i32) {
    %c0_i32 = arith.constant 0 : i32
    %c0_i32_0 = arith.constant 0 : i32
    %c0_i32_1 = arith.constant 0 : i32
    return %c0_i32, %c0_i32_0 : i32, i32
  }
  func.func @transform_9(%arg0: i32) -> (i32, i32, i32) {
    %c0_i32 = arith.constant 0 : i32
    %c0_i32_0 = arith.constant 0 : i32
    %c0_i32_1 = arith.constant 0 : i32
    %c0_i32_2 = arith.constant 0 : i32
    return %c0_i32, %c0_i32_0, %c0_i32_1 : i32, i32, i32
  }
  func.func @transform_10(%arg0: i32) -> (i32, i32) {
    %c0_i32 = arith.constant 0 : i32
    %c0_i32_0 = arith.constant 0 : i32
    %c0_i32_1 = arith.constant 0 : i32
    return %c0_i32, %c0_i32_0 : i32, i32
  }
  func.func @transform_11(%arg0: i32) -> (i32, i32) {
    %c0_i32 = arith.constant 0 : i32
    %c0_i32_0 = arith.constant 0 : i32
    %c0_i32_1 = arith.constant 0 : i32
    return %c0_i32, %c0_i32_0 : i32, i32
  }
  func.func @transform_12(%arg0: i32) -> (i32, i32) {
    %c0_i32 = arith.constant 0 : i32
    %c0_i32_0 = arith.constant 0 : i32
    %c0_i32_1 = arith.constant 0 : i32
    return %c0_i32, %c0_i32_0 : i32, i32
  }
  func.func @transform_13(%arg0: i32) -> (i32, i32) {
    %c0_i32 = arith.constant 0 : i32
    %c0_i32_0 = arith.constant 0 : i32
    %c0_i32_1 = arith.constant 0 : i32
    return %c0_i32, %c0_i32_0 : i32, i32
  }
  func.func @transform_14(%arg0: i32) -> (i32, i32) {
    %c0_i32 = arith.constant 0 : i32
    %c0_i32_0 = arith.constant 0 : i32
    %c0_i32_1 = arith.constant 0 : i32
    return %c0_i32, %c0_i32_0 : i32, i32
  }
  func.func @transform_15(%arg0: i32) -> (i32, i32, i32) {
    %c0_i32 = arith.constant 0 : i32
    %c0_i32_0 = arith.constant 0 : i32
    %c0_i32_1 = arith.constant 0 : i32
    return %arg0, %c0_i32, %c0_i32_0 : i32, i32, i32
  }
}

</mosaic_0001>

<llo_original>
// kernel: tpu_custom_call.1
$region0: #{tpu_custom_call.1}
  #allocation0 [shape = 'u32[]', space=smem, size = 0x4, offset = 0x4, fixed_abs, tag = 'smem constant byte address 0x4 - core index']
  #allocation1 [shape = 'u32[144,128]{1,0:T(1,128)}', space=vmem, size = 0x12000, scoped, tag = 'internal scratch']
  #allocation2 [shape = 'f32[128,128]{1,0:T(8,128)}', space=vmem, size = 0x10000, scoped, tag = 'scratch operand']
  #allocation3 [shape = 'f32[128,32]{1,0:T(8,128)}', space=vmem, size = 0x10000, scoped, tag = 'scratch operand']
  #allocation4 [shape = 'f32[144,32]{1,0:T(8,128)}', space=vmem, size = 0x12000, scoped, tag = 'scratch operand']
  %s0 = inlined_call_operand.vmem [shape: f32[2,128,32], index: 0, kind: input, shape index: {}]
  %s1 = inlined_call_operand.vmem [shape: f32[2,128,1], index: 1, kind: input, shape index: {}]
  %s2 = inlined_call_operand.vmem [shape: f32[32,128], index: 2, kind: input, shape index: {}]
  %s3 = inlined_call_operand.vmem [shape: f32[32,128], index: 3, kind: input, shape index: {}]
  %s4 = inlined_call_operand.vmem [shape: f32[1,128], index: 4, kind: input, shape index: {}]
  %s5 = inlined_call_operand.vmem [shape: f32[3,32,64], index: 5, kind: input, shape index: {}]
  %s6 = inlined_call_operand.vmem [shape: f32[1,64], index: 6, kind: input, shape index: {}]
  %s7 = inlined_call_operand.vmem [shape: f32[1,32], index: 7, kind: input, shape index: {}]
  %s8 = inlined_call_operand.vmem [shape: f32[1,32], index: 8, kind: input, shape index: {}]
  %s9 = inlined_call_operand.vmem [shape: f32[3,32,64], index: 9, kind: input, shape index: {}]
  %s10 = inlined_call_operand.vmem [shape: f32[1,64], index: 10, kind: input, shape index: {}]
  %s11 = inlined_call_operand.vmem [shape: f32[1,32], index: 11, kind: input, shape index: {}]
  %s12 = inlined_call_operand.vmem [shape: f32[1,32], index: 12, kind: input, shape index: {}]
  %s13 = inlined_call_operand.vmem [shape: f32[1,32], index: 13, kind: input, shape index: {}]
  %s14 = inlined_call_operand.vmem [shape: f32[1,32], index: 14, kind: input, shape index: {}]
  %s15 = inlined_call_operand.vmem [shape: f32[2,128,32], index: 15, kind: output, shape index: {}]
  %s16 = sld [smem:[#allocation0]]
  $region100: #{tpu_custom_call.1} parent=0
    _
  %s18 = ssub.s32 1, %s16
  %s19 = scalar_select 0, %s18, %s16
  loop: start=0, step=1, limit=4
  $region2: #{tpu_custom_call.1} parent=0 // loop_pre_header
    _
  $region3: #{tpu_custom_call.1} parent=0 // loop_header
    %s21 = sphi 0, %s25
    %p22 = scmp.ge.s32.totalorder %s21, 4
    %s31 = sphi 0, %s33
    %s34 = sphi 0, %s31
    %s35 = sphi 0, %s34
    %s51 = sphi 0, %s35
    %s57 = sphi 0, %s59
    %s60 = sphi 0, %s57
    %s61 = sphi 0, %s60
    %s77 = sphi 0, %s61
    %s81 = sphi 0, %s81
    %s83 = sphi 0, %s81
    %s84 = sphi 0, %s83
    %s98 = sphi 0, %s84
    %s102 = sphi 0, %s102
    %s104 = sphi 0, %s102
    %s105 = sphi 0, %s104
    %s119 = sphi 0, %s105
    %s123 = sphi 0, %s123
    %s125 = sphi 0, %s123
    %s126 = sphi 0, %s125
    %s140 = sphi 0, %s126
    %s144 = sphi 0, %s144
    %s146 = sphi 0, %s144
    %s147 = sphi 0, %s146
    %s161 = sphi 0, %s147
    %s165 = sphi 0, %s165
    %s167 = sphi 0, %s165
    %s168 = sphi 0, %s167
    %s182 = sphi 0, %s168
    %s186 = sphi 0, %s186
    %s188 = sphi 0, %s186
    %s189 = sphi 0, %s188
    %s203 = sphi 0, %s189
    %s207 = sphi 0, %s207
    %s209 = sphi 0, %s207
    %s210 = sphi 0, %s209
    %s224 = sphi 0, %s210
    %s228 = sphi 0, %s228
    %s230 = sphi 0, %s228
    %s231 = sphi 0, %s230
    %s245 = sphi 0, %s231
    %s249 = sphi 0, %s249
    %s251 = sphi 0, %s249
    %s252 = sphi 0, %s251
    %s266 = sphi 0, %s252
    %s270 = sphi 0, %s270
    %s272 = sphi 0, %s270
    %s273 = sphi 0, %s272
    %s287 = sphi 0, %s273
    %s291 = sphi 0, %s291
    %s293 = sphi 0, %s291
    %s294 = sphi 0, %s293
    %s308 = sphi 0, %s294
    %s312 = sphi 0, %s312
    %s314 = sphi 0, %s312
    %s315 = sphi 0, %s314
    %s329 = sphi 0, %s315
    %s333 = sphi 0, %s333
    %s335 = sphi 0, %s333
    %s336 = sphi 0, %s335
    %s350 = sphi 0, %s336
    %s356 = sphi 0, %s358
    %s359 = sphi 0, %s356
    %s360 = sphi 0, %s359
    %s376 = sphi 0, %s360
  $region4: #{tpu_custom_call.1} parent=0 // loop_header_branch
    %24 = sbr.rel (%p22) target = $region8
  $region5: #{tpu_custom_call.1} parent=0 // loop_body
    %s26 = ssub.s32 %s21, 1
    %s27 = ssub.s32 %s21, 2
    %s28 = sadd.s32 %s21, 1
    %s29 = ssub.s32 %s21, %s28
    %p30 = scmp.eq.s32.totalorder %s29, 0
    %s32 = sadd.s32 %s31, 1
    %s33 = scalar_select %p30, %s31, %s32
    %p36 = pneg %p30
    %p37 = scmp.eq.s32.totalorder %s21, 1
    %p38 = por %p36, %p37
    %p39 = scmp.ne.s32.totalorder %s31, %s34
    %p40 = scmp.eq.s32.totalorder %s21, 0
    %p41 = por %p39, %p40
    %p42 = scmp.ne.s32.totalorder %s31, %s34
    %p43 = scmp.eq.s32.totalorder %s26, 1
    %p44 = por %p42, %p43
    %p45 = scmp.ne.s32.totalorder %s34, %s35
    %p46 = scmp.eq.s32.totalorder %s26, 0
    %p47 = por %p45, %p46
    %p48 = scmp.ne.s32.totalorder %s34, %s35
    %p49 = scmp.eq.s32.totalorder %s27, 1
    %p50 = por %p48, %p49
    %p52 = scmp.ne.s32.totalorder %s35, %s51
    %p53 = scmp.eq.s32.totalorder %s27, 0
    %p54 = por %p52, %p53
    %s55 = ssub.s32 %s21, %s28
    %p56 = scmp.eq.s32.totalorder %s55, 0
    %s58 = sadd.s32 %s57, 1
    %s59 = scalar_select %p56, %s57, %s58
    %p62 = pneg %p56
    %p63 = scmp.eq.s32.totalorder %s21, 1
    %p64 = por %p62, %p63
    %p65 = scmp.ne.s32.totalorder %s57, %s60
    %p66 = scmp.eq.s32.totalorder %s21, 0
    %p67 = por %p65, %p66
    %p68 = scmp.ne.s32.totalorder %s57, %s60
    %p69 = scmp.eq.s32.totalorder %s26, 1
    %p70 = por %p68, %p69
    %p71 = scmp.ne.s32.totalorder %s60, %s61
    %p72 = scmp.eq.s32.totalorder %s26, 0
    %p73 = por %p71, %p72
    %p74 = scmp.ne.s32.totalorder %s60, %s61
    %p75 = scmp.eq.s32.totalorder %s27, 1
    %p76 = por %p74, %p75
    %p78 = scmp.ne.s32.totalorder %s61, %s77
    %p79 = scmp.eq.s32.totalorder %s27, 0
    %p80 = por %p78, %p79
    %s82 = sadd.s32 %s81, 1
    %p85 = scmp.eq.s32.totalorder %s21, 1
    %p86 = scmp.ne.s32.totalorder %s81, %s83
    %p87 = scmp.eq.s32.totalorder %s21, 0
    %p88 = por %p86, %p87
    %p89 = scmp.ne.s32.totalorder %s81, %s83
    %p90 = scmp.eq.s32.totalorder %s26, 1
    %p91 = por %p89, %p90
    %p92 = scmp.ne.s32.totalorder %s83, %s84
    %p93 = scmp.eq.s32.totalorder %s26, 0
    %p94 = por %p92, %p93
    %p95 = scmp.ne.s32.totalorder %s83, %s84
    %p96 = scmp.eq.s32.totalorder %s27, 1
    %p97 = por %p95, %p96
    %p99 = scmp.ne.s32.totalorder %s84, %s98
    %p100 = scmp.eq.s32.totalorder %s27, 0
    %p101 = por %p99, %p100
    %s103 = sadd.s32 %s102, 1
    %p106 = scmp.eq.s32.totalorder %s21, 1
    %p107 = scmp.ne.s32.totalorder %s102, %s104
    %p108 = scmp.eq.s32.totalorder %s21, 0
    %p109 = por %p107, %p108
    %p110 = scmp.ne.s32.totalorder %s102, %s104
    %p111 = scmp.eq.s32.totalorder %s26, 1
    %p112 = por %p110, %p111
    %p113 = scmp.ne.s32.totalorder %s104, %s105
    %p114 = scmp.eq.s32.totalorder %s26, 0
    %p115 = por %p113, %p114
    %p116 = scmp.ne.s32.totalorder %s104, %s105
    %p117 = scmp.eq.s32.totalorder %s27, 1
    %p118 = por %p116, %p117
    %p120 = scmp.ne.s32.totalorder %s105, %s119
    %p121 = scmp.eq.s32.totalorder %s27, 0
    %p122 = por %p120, %p121
    %s124 = sadd.s32 %s123, 1
    %p127 = scmp.eq.s32.totalorder %s21, 1
    %p128 = scmp.ne.s32.totalorder %s123, %s125
    %p129 = scmp.eq.s32.totalorder %s21, 0
    %p130 = por %p128, %p129
    %p131 = scmp.ne.s32.totalorder %s123, %s125
    %p132 = scmp.eq.s32.totalorder %s26, 1
    %p133 = por %p131, %p132
    %p134 = scmp.ne.s32.totalorder %s125, %s126
    %p135 = scmp.eq.s32.totalorder %s26, 0
    %p136 = por %p134, %p135
    %p137 = scmp.ne.s32.totalorder %s125, %s126
    %p138 = scmp.eq.s32.totalorder %s27, 1
    %p139 = por %p137, %p138
    %p141 = scmp.ne.s32.totalorder %s126, %s140
    %p142 = scmp.eq.s32.totalorder %s27, 0
    %p143 = por %p141, %p142
    %s145 = sadd.s32 %s144, 1
    %p148 = scmp.eq.s32.totalorder %s21, 1
    %p149 = scmp.ne.s32.totalorder %s144, %s146
    %p150 = scmp.eq.s32.totalorder %s21, 0
    %p151 = por %p149, %p150
    %p152 = scmp.ne.s32.totalorder %s144, %s146
    %p153 = scmp.eq.s32.totalorder %s26, 1
    %p154 = por %p152, %p153
    %p155 = scmp.ne.s32.totalorder %s146, %s147
    %p156 = scmp.eq.s32.totalorder %s26, 0
    %p157 = por %p155, %p156
    %p158 = scmp.ne.s32.totalorder %s146, %s147
    %p159 = scmp.eq.s32.totalorder %s27, 1
    %p160 = por %p158, %p159
    %p162 = scmp.ne.s32.totalorder %s147, %s161
    %p163 = scmp.eq.s32.totalorder %s27, 0
    %p164 = por %p162, %p163
    %s166 = sadd.s32 %s165, 1
    %p169 = scmp.eq.s32.totalorder %s21, 1
    %p170 = scmp.ne.s32.totalorder %s165, %s167
    %p171 = scmp.eq.s32.totalorder %s21, 0
    %p172 = por %p170, %p171
    %p173 = scmp.ne.s32.totalorder %s165, %s167
    %p174 = scmp.eq.s32.totalorder %s26, 1
    %p175 = por %p173, %p174
    %p176 = scmp.ne.s32.totalorder %s167, %s168
    %p177 = scmp.eq.s32.totalorder %s26, 0
    %p178 = por %p176, %p177
    %p179 = scmp.ne.s32.totalorder %s167, %s168
    %p180 = scmp.eq.s32.totalorder %s27, 1
    %p181 = por %p179, %p180
    %p183 = scmp.ne.s32.totalorder %s168, %s182
    %p184 = scmp.eq.s32.totalorder %s27, 0
    %p185 = por %p183, %p184
    %s187 = sadd.s32 %s186, 1
    %p190 = scmp.eq.s32.totalorder %s21, 1
    %p191 = scmp.ne.s32.totalorder %s186, %s188
    %p192 = scmp.eq.s32.totalorder %s21, 0
    %p193 = por %p191, %p192
    %p194 = scmp.ne.s32.totalorder %s186, %s188
    %p195 = scmp.eq.s32.totalorder %s26, 1
    %p196 = por %p194, %p195
    %p197 = scmp.ne.s32.totalorder %s188, %s189
    %p198 = scmp.eq.s32.totalorder %s26, 0
    %p199 = por %p197, %p198
    %p200 = scmp.ne.s32.totalorder %s188, %s189
    %p201 = scmp.eq.s32.totalorder %s27, 1
    %p202 = por %p200, %p201
    %p204 = scmp.ne.s32.totalorder %s189, %s203
    %p205 = scmp.eq.s32.totalorder %s27, 0
    %p206 = por %p204, %p205
    %s208 = sadd.s32 %s207, 1
    %p211 = scmp.eq.s32.totalorder %s21, 1
    %p212 = scmp.ne.s32.totalorder %s207, %s209
    %p213 = scmp.eq.s32.totalorder %s21, 0
    %p214 = por %p212, %p213
    %p215 = scmp.ne.s32.totalorder %s207, %s209
    %p216 = scmp.eq.s32.totalorder %s26, 1
    %p217 = por %p215, %p216
    %p218 = scmp.ne.s32.totalorder %s209, %s210
    %p219 = scmp.eq.s32.totalorder %s26, 0
    %p220 = por %p218, %p219
    %p221 = scmp.ne.s32.totalorder %s209, %s210
    %p222 = scmp.eq.s32.totalorder %s27, 1
    %p223 = por %p221, %p222
    %p225 = scmp.ne.s32.totalorder %s210, %s224
    %p226 = scmp.eq.s32.totalorder %s27, 0
    %p227 = por %p225, %p226
    %s229 = sadd.s32 %s228, 1
    %p232 = scmp.eq.s32.totalorder %s21, 1
    %p233 = scmp.ne.s32.totalorder %s228, %s230
    %p234 = scmp.eq.s32.totalorder %s21, 0
    %p235 = por %p233, %p234
    %p236 = scmp.ne.s32.totalorder %s228, %s230
    %p237 = scmp.eq.s32.totalorder %s26, 1
    %p238 = por %p236, %p237
    %p239 = scmp.ne.s32.totalorder %s230, %s231
    %p240 = scmp.eq.s32.totalorder %s26, 0
    %p241 = por %p239, %p240
    %p242 = scmp.ne.s32.totalorder %s230, %s231
    %p243 = scmp.eq.s32.totalorder %s27, 1
    %p244 = por %p242, %p243
    %p246 = scmp.ne.s32.totalorder %s231, %s245
    %p247 = scmp.eq.s32.totalorder %s27, 0
    %p248 = por %p246, %p247
    %s250 = sadd.s32 %s249, 1
    %p253 = scmp.eq.s32.totalorder %s21, 1
    %p254 = scmp.ne.s32.totalorder %s249, %s251
    %p255 = scmp.eq.s32.totalorder %s21, 0
    %p256 = por %p254, %p255
    %p257 = scmp.ne.s32.totalorder %s249, %s251
    %p258 = scmp.eq.s32.totalorder %s26, 1
    %p259 = por %p257, %p258
    %p260 = scmp.ne.s32.totalorder %s251, %s252
    %p261 = scmp.eq.s32.totalorder %s26, 0
    %p262 = por %p260, %p261
    %p263 = scmp.ne.s32.totalorder %s251, %s252
    %p264 = scmp.eq.s32.totalorder %s27, 1
    %p265 = por %p263, %p264
    %p267 = scmp.ne.s32.totalorder %s252, %s266
    %p268 = scmp.eq.s32.totalorder %s27, 0
    %p269 = por %p267, %p268
    %s271 = sadd.s32 %s270, 1
    %p274 = scmp.eq.s32.totalorder %s21, 1
    %p275 = scmp.ne.s32.totalorder %s270, %s272
    %p276 = scmp.eq.s32.totalorder %s21, 0
    %p277 = por %p275, %p276
    %p278 = scmp.ne.s32.totalorder %s270, %s272
    %p279 = scmp.eq.s32.totalorder %s26, 1
    %p280 = por %p278, %p279
    %p281 = scmp.ne.s32.totalorder %s272, %s273
    %p282 = scmp.eq.s32.totalorder %s26, 0
    %p283 = por %p281, %p282
    %p284 = scmp.ne.s32.totalorder %s272, %s273
    %p285 = scmp.eq.s32.totalorder %s27, 1
    %p286 = por %p284, %p285
    %p288 = scmp.ne.s32.totalorder %s273, %s287
    %p289 = scmp.eq.s32.totalorder %s27, 0
    %p290 = por %p288, %p289
    %s292 = sadd.s32 %s291, 1
    %p295 = scmp.eq.s32.totalorder %s21, 1
    %p296 = scmp.ne.s32.totalorder %s291, %s293
    %p297 = scmp.eq.s32.totalorder %s21, 0
    %p298 = por %p296, %p297
    %p299 = scmp.ne.s32.totalorder %s291, %s293
    %p300 = scmp.eq.s32.totalorder %s26, 1
    %p301 = por %p299, %p300
    %p302 = scmp.ne.s32.totalorder %s293, %s294
    %p303 = scmp.eq.s32.totalorder %s26, 0
    %p304 = por %p302, %p303
    %p305 = scmp.ne.s32.totalorder %s293, %s294
    %p306 = scmp.eq.s32.totalorder %s27, 1
    %p307 = por %p305, %p306
    %p309 = scmp.ne.s32.totalorder %s294, %s308
    %p310 = scmp.eq.s32.totalorder %s27, 0
    %p311 = por %p309, %p310
    %s313 = sadd.s32 %s312, 1
    %p316 = scmp.eq.s32.totalorder %s21, 1
    %p317 = scmp.ne.s32.totalorder %s312, %s314
    %p318 = scmp.eq.s32.totalorder %s21, 0
    %p319 = por %p317, %p318
    %p320 = scmp.ne.s32.totalorder %s312, %s314
    %p321 = scmp.eq.s32.totalorder %s26, 1
    %p322 = por %p320, %p321
    %p323 = scmp.ne.s32.totalorder %s314, %s315
    %p324 = scmp.eq.s32.totalorder %s26, 0
    %p325 = por %p323, %p324
    %p326 = scmp.ne.s32.totalorder %s314, %s315
    %p327 = scmp.eq.s32.totalorder %s27, 1
    %p328 = por %p326, %p327
    %p330 = scmp.ne.s32.totalorder %s315, %s329
    %p331 = scmp.eq.s32.totalorder %s27, 0
    %p332 = por %p330, %p331
    %s334 = sadd.s32 %s333, 1
    %p337 = scmp.eq.s32.totalorder %s21, 1
    %p338 = scmp.ne.s32.totalorder %s333, %s335
    %p339 = scmp.eq.s32.totalorder %s21, 0
    %p340 = por %p338, %p339
    %p341 = scmp.ne.s32.totalorder %s333, %s335
    %p342 = scmp.eq.s32.totalorder %s26, 1
    %p343 = por %p341, %p342
    %p344 = scmp.ne.s32.totalorder %s335, %s336
    %p345 = scmp.eq.s32.totalorder %s26, 0
    %p346 = por %p344, %p345
    %p347 = scmp.ne.s32.totalorder %s335, %s336
    %p348 = scmp.eq.s32.totalorder %s27, 1
    %p349 = por %p347, %p348
    %p351 = scmp.ne.s32.totalorder %s336, %s350
    %p352 = scmp.eq.s32.totalorder %s27, 0
    %p353 = por %p351, %p352
    %s354 = ssub.s32 %s21, %s28
    %p355 = scmp.eq.s32.totalorder %s354, 0
    %s357 = sadd.s32 %s356, 1
    %s358 = scalar_select %p355, %s356, %s357
    %p361 = pneg %p355
    %p362 = scmp.eq.s32.totalorder %s21, 1
    %p363 = por %p361, %p362
    %p364 = scmp.ne.s32.totalorder %s356, %s359
    %p365 = scmp.eq.s32.totalorder %s21, 0
    %p366 = por %p364, %p365
    %p367 = scmp.ne.s32.totalorder %s356, %s359
    %p368 = scmp.eq.s32.totalorder %s26, 1
    %p369 = por %p367, %p368
    %p370 = scmp.ne.s32.totalorder %s359, %s360
    %p371 = scmp.eq.s32.totalorder %s26, 0
    %p372 = por %p370, %p371
    %p373 = scmp.ne.s32.totalorder %s359, %s360
    %p374 = scmp.eq.s32.totalorder %s27, 1
    %p375 = por %p373, %p374
    %p377 = scmp.ne.s32.totalorder %s360, %s376
    %p378 = scmp.eq.s32.totalorder %s27, 0
    %p379 = por %p377, %p378
    %p380 = scmp.le.s32.totalorder 1, %s21
    %p381 = scmp.lt.s32.totalorder %s21, 3
    %p382 = pnand %p380, %p381
    %p383 = pneg %p382
    // Predicated region
    $region9: #{tpu_custom_call.1} parent=5 // pred_check
      _
    $region10: #{tpu_custom_call.1} parent=5 // pred_check_branch
      %385 = sbr.rel (%p382) target = $region12
    $region11: #{tpu_custom_call.1} parent=5 // pred_region
      %s386 = ssub.s32 %s21, 1
      // Predicated region
      $region13: #{tpu_custom_call.1} parent=11 // pred_check
        %p387 = pneg %p94
      $region14: #{tpu_custom_call.1} parent=11 // pred_check_branch
        %389 = sbr.rel (%p387) target = $region16
      $region15: #{tpu_custom_call.1} parent=11 // pred_region
        _
      $region16: #{tpu_custom_call.1} parent=11 // pred_fallthru
        _
      // Predicated region
      $region17: #{tpu_custom_call.1} parent=11 // pred_check
        %p390 = pneg %p115
      $region18: #{tpu_custom_call.1} parent=11 // pred_check_branch
        %392 = sbr.rel (%p390) target = $region20
      $region19: #{tpu_custom_call.1} parent=11 // pred_region
        _
      $region20: #{tpu_custom_call.1} parent=11 // pred_fallthru
        _
      // Predicated region
      $region21: #{tpu_custom_call.1} parent=11 // pred_check
        %p393 = pneg %p136
      $region22: #{tpu_custom_call.1} parent=11 // pred_check_branch
        %395 = sbr.rel (%p393) target = $region24
      $region23: #{tpu_custom_call.1} parent=11 // pred_region
        _
      $region24: #{tpu_custom_call.1} parent=11 // pred_fallthru
        _
      // Predicated region
      $region25: #{tpu_custom_call.1} parent=11 // pred_check
        %p396 = pneg %p157
      $region26: #{tpu_custom_call.1} parent=11 // pred_check_branch
        %398 = sbr.rel (%p396) target = $region28
      $region27: #{tpu_custom_call.1} parent=11 // pred_region
        _
      $region28: #{tpu_custom_call.1} parent=11 // pred_fallthru
        _
      // Predicated region
      $region29: #{tpu_custom_call.1} parent=11 // pred_check
        %p399 = pneg %p178
      $region30: #{tpu_custom_call.1} parent=11 // pred_check_branch
        %401 = sbr.rel (%p399) target = $region32
      $region31: #{tpu_custom_call.1} parent=11 // pred_region
        _
      $region32: #{tpu_custom_call.1} parent=11 // pred_fallthru
        _
      // Predicated region
      $region33: #{tpu_custom_call.1} parent=11 // pred_check
        %p402 = pneg %p199
      $region34: #{tpu_custom_call.1} parent=11 // pred_check_branch
        %404 = sbr.rel (%p402) target = $region36
      $region35: #{tpu_custom_call.1} parent=11 // pred_region
        _
      $region36: #{tpu_custom_call.1} parent=11 // pred_fallthru
        _
      // Predicated region
      $region37: #{tpu_custom_call.1} parent=11 // pred_check
        %p405 = pneg %p220
      $region38: #{tpu_custom_call.1} parent=11 // pred_check_branch
        %407 = sbr.rel (%p405) target = $region40
      $region39: #{tpu_custom_call.1} parent=11 // pred_region
        _
      $region40: #{tpu_custom_call.1} parent=11 // pred_fallthru
        _
      // Predicated region
      $region41: #{tpu_custom_call.1} parent=11 // pred_check
        %p408 = pneg %p241
      $region42: #{tpu_custom_call.1} parent=11 // pred_check_branch
        %410 = sbr.rel (%p408) target = $region44
      $region43: #{tpu_custom_call.1} parent=11 // pred_region
        _
      $region44: #{tpu_custom_call.1} parent=11 // pred_fallthru
        _
      // Predicated region
      $region45: #{tpu_custom_call.1} parent=11 // pred_check
        %p411 = pneg %p262
      $region46: #{tpu_custom_call.1} parent=11 // pred_check_branch
        %413 = sbr.rel (%p411) target = $region48
      $region47: #{tpu_custom_call.1} parent=11 // pred_region
        _
      $region48: #{tpu_custom_call.1} parent=11 // pred_fallthru
        _
      // Predicated region
      $region49: #{tpu_custom_call.1} parent=11 // pred_check
        %p414 = pneg %p283
      $region50: #{tpu_custom_call.1} parent=11 // pred_check_branch
        %416 = sbr.rel (%p414) target = $region52
      $region51: #{tpu_custom_call.1} parent=11 // pred_region
        _
      $region52: #{tpu_custom_call.1} parent=11 // pred_fallthru
        _
      // Predicated region
      $region53: #{tpu_custom_call.1} parent=11 // pred_check
        %p417 = pneg %p304
      $region54: #{tpu_custom_call.1} parent=11 // pred_check_branch
        %419 = sbr.rel (%p417) target = $region56
      $region55: #{tpu_custom_call.1} parent=11 // pred_region
        _
      $region56: #{tpu_custom_call.1} parent=11 // pred_fallthru
        _
      // Predicated region
      $region57: #{tpu_custom_call.1} parent=11 // pred_check
        %p420 = pneg %p325
      $region58: #{tpu_custom_call.1} parent=11 // pred_check_branch
        %422 = sbr.rel (%p420) target = $region60
      $region59: #{tpu_custom_call.1} parent=11 // pred_region
        _
      $region60: #{tpu_custom_call.1} parent=11 // pred_fallthru
        _
      // Predicated region
      $region61: #{tpu_custom_call.1} parent=11 // pred_check
        %p423 = pneg %p346
      $region62: #{tpu_custom_call.1} parent=11 // pred_check_branch
        %425 = sbr.rel (%p423) target = $region64
      $region63: #{tpu_custom_call.1} parent=11 // pred_region
        _
      $region64: #{tpu_custom_call.1} parent=11 // pred_fallthru
        _
    $region12: #{tpu_custom_call.1} parent=5 // pred_fallthru
      _
    %p426 = scmp.lt.s32.totalorder %s21, 2
    // Predicated region
    $region65: #{tpu_custom_call.1} parent=5 // pred_check
      %p427 = pneg %p426
    $region66: #{tpu_custom_call.1} parent=5 // pred_check_branch
      %429 = sbr.rel (%p427) target = $region68
    $region67: #{tpu_custom_call.1} parent=5 // pred_region
      // Predicated region
      $region69: #{tpu_custom_call.1} parent=67 // pred_check
        %p430 = pneg %p41
      $region70: #{tpu_custom_call.1} parent=67 // pred_check_branch
        %432 = sbr.rel (%p430) target = $region72
      $region71: #{tpu_custom_call.1} parent=67 // pred_region
        %p433 = scmp.lt.s32.totalorder %s21, 1
        %s434 = scalar_select %p433, %s21, 1
        %s435 = smul.addr %s434, 16
        %s436 = smul.addr %s435, 8
        %s437 = scalar_lea.vmem %s0, %s436
      $region72: #{tpu_custom_call.1} parent=67 // pred_fallthru
        _
      // Predicated region
      $region73: #{tpu_custom_call.1} parent=67 // pred_check
        %p438 = pneg %p67
      $region74: #{tpu_custom_call.1} parent=67 // pred_check_branch
        %440 = sbr.rel (%p438) target = $region76
      $region75: #{tpu_custom_call.1} parent=67 // pred_region
        %p441 = scmp.lt.s32.totalorder %s21, 1
        %s442 = scalar_select %p441, %s21, 1
        %s443 = smul.addr %s442, 16
        %s444 = smul.addr %s443, 8
        %s445 = scalar_lea.vmem %s1, %s444
      $region76: #{tpu_custom_call.1} parent=67 // pred_fallthru
        _
    $region68: #{tpu_custom_call.1} parent=5 // pred_fallthru
      _
    %p446 = scmp.le.s32.totalorder 1, %s21
    %p447 = scmp.lt.s32.totalorder %s21, 3
    %p448 = pnand %p446, %p447
    %p449 = pneg %p448
    // Predicated region
    $region77: #{tpu_custom_call.1} parent=5 // pred_check
      _
    $region78: #{tpu_custom_call.1} parent=5 // pred_check_branch
      %451 = sbr.rel (%p448) target = $region80
    $region79: #{tpu_custom_call.1} parent=5 // pred_region
      %s452 = ssub.s32 %s21, 1
      %p453 = scmp.lt.s32.totalorder %s26, 1
      %s454 = scalar_select %p453, %s26, 1
      %s455 = smul.addr %s454, 16
      %s456 = smul.addr %s455, 8
      %s457 = scalar_lea.vmem %s0, %s456
      %p458 = pneg %p47
      %p459 = pneg %p44
      %p460 = scmp.lt.s32.totalorder %s26, 1
      %s461 = scalar_select %p460, %s26, 1
      %s462 = smul.addr %s461, 16
      %s463 = smul.addr %s462, 8
      %s464 = scalar_lea.vmem %s1, %s463
      %p465 = pneg %p73
      %p466 = pneg %p70
      %p467 = pneg %p94
      %p468 = pneg %p91
      %p469 = pneg %p115
      %p470 = pneg %p112
      %p471 = pneg %p136
      %p472 = pneg %p133
      %p473 = pneg %p157
      %p474 = pneg %p154
      %p475 = pneg %p178
      %p476 = pneg %p175
      %p477 = pneg %p199
      %p478 = pneg %p196
      %p479 = pneg %p220
      %p480 = pneg %p217
      %p481 = pneg %p241
      %p482 = pneg %p238
      %p483 = pneg %p262
      %p484 = pneg %p259
      %p485 = pneg %p283
      %p486 = pneg %p280
      %p487 = pneg %p304
      %p488 = pneg %p301
      %p489 = pneg %p325
      %p490 = pneg %p322
      %p491 = pneg %p346
      %p492 = pneg %p343
      %p493 = pneg %p372
      %p494 = pneg %p369
      %p495 = scmp.lt.s32.totalorder %s26, 1
      %s496 = scalar_select %p495, %s26, 1
      %s497 = smul.addr %s496, 16
      %s498 = smul.addr %s497, 8
      %s499 = scalar_lea.vmem %s15, %s498
      %p500 = scmp.lt.s32.totalorder %s26, 1
      %s501 = scalar_select %p500, %s26, 1
      %s502 = smul.addr %s501, 16
      %s503 = smul.addr %s502, 8
      %s504 = scalar_lea.vmem %s0, %s503
      %p505 = scmp.lt.s32.totalorder %s26, 1
      %s506 = scalar_select %p505, %s26, 1
      %s507 = smul.addr %s506, 16
      %s508 = smul.addr %s507, 8
      %s509 = scalar_lea.vmem %s1, %s508
      %p510 = scmp.lt.s32.totalorder %s26, 1
      %s511 = scalar_select %p510, %s26, 1
      %s512 = smul.addr %s511, 16
      %s513 = smul.addr %s512, 8
      %s514 = scalar_lea.vmem %s15, %s513
      %v515 = vld [vmem:[%s504] sm:$0xff]
      %v516 = vld [vmem:[%s504 + $0x8] sm:$0xff]
      %v517 = vld [vmem:[%s504 + $0x10] sm:$0xff]
      %v518 = vld [vmem:[%s504 + $0x18] sm:$0xff]
      %v519 = vld [vmem:[%s504 + $0x20] sm:$0xff]
      %v520 = vld [vmem:[%s504 + $0x28] sm:$0xff]
      %v521 = vld [vmem:[%s504 + $0x30] sm:$0xff]
      %v522 = vld [vmem:[%s504 + $0x38] sm:$0xff]
      %v523 = vld [vmem:[%s504 + $0x40] sm:$0xff]
      %v524 = vld [vmem:[%s504 + $0x48] sm:$0xff]
      %v525 = vld [vmem:[%s504 + $0x50] sm:$0xff]
      %v526 = vld [vmem:[%s504 + $0x58] sm:$0xff]
      %v527 = vld [vmem:[%s504 + $0x60] sm:$0xff]
      %v528 = vld [vmem:[%s504 + $0x68] sm:$0xff]
      %v529 = vld [vmem:[%s504 + $0x70] sm:$0xff]
      %v530 = vld [vmem:[%s504 + $0x78] sm:$0xff]
      %v531 = vld [vmem:[%s509] sm:$0xff]
      %v532 = vld [vmem:[%s509 + $0x8] sm:$0xff]
      %v533 = vld [vmem:[%s509 + $0x10] sm:$0xff]
      %v534 = vld [vmem:[%s509 + $0x18] sm:$0xff]
      %v535 = vld [vmem:[%s509 + $0x20] sm:$0xff]
      %v536 = vld [vmem:[%s509 + $0x28] sm:$0xff]
      %v537 = vld [vmem:[%s509 + $0x30] sm:$0xff]
      %v538 = vld [vmem:[%s509 + $0x38] sm:$0xff]
      %v539 = vld [vmem:[%s509 + $0x40] sm:$0xff]
      %v540 = vld [vmem:[%s509 + $0x48] sm:$0xff]
      %v541 = vld [vmem:[%s509 + $0x50] sm:$0xff]
      %v542 = vld [vmem:[%s509 + $0x58] sm:$0xff]
      %v543 = vld [vmem:[%s509 + $0x60] sm:$0xff]
      %v544 = vld [vmem:[%s509 + $0x68] sm:$0xff]
      %v545 = vld [vmem:[%s509 + $0x70] sm:$0xff]
      %v546 = vld [vmem:[%s509 + $0x78] sm:$0xff]
      %548 = vset.pattern.permute.xlu0 0
      %549 = vperm.xlu0 %548, %v531
      %v550 = vpop.permute.xlu0 %549
      %553 = vset.pattern.permute.xlu0 0
      %554 = vperm.xlu0 %553, %v532
      %v555 = vpop.permute.xlu0 %554
      %558 = vset.pattern.permute.xlu0 0
      %559 = vperm.xlu0 %558, %v533
      %v560 = vpop.permute.xlu0 %559
      %563 = vset.pattern.permute.xlu0 0
      %564 = vperm.xlu0 %563, %v534
      %v565 = vpop.permute.xlu0 %564
      %568 = vset.pattern.permute.xlu0 0
      %569 = vperm.xlu0 %568, %v535
      %v570 = vpop.permute.xlu0 %569
      %573 = vset.pattern.permute.xlu0 0
      %574 = vperm.xlu0 %573, %v536
      %v575 = vpop.permute.xlu0 %574
      %578 = vset.pattern.permute.xlu0 0
      %579 = vperm.xlu0 %578, %v537
      %v580 = vpop.permute.xlu0 %579
      %583 = vset.pattern.permute.xlu0 0
      %584 = vperm.xlu0 %583, %v538
      %v585 = vpop.permute.xlu0 %584
      %588 = vset.pattern.permute.xlu0 0
      %589 = vperm.xlu0 %588, %v539
      %v590 = vpop.permute.xlu0 %589
      %593 = vset.pattern.permute.xlu0 0
      %594 = vperm.xlu0 %593, %v540
      %v595 = vpop.permute.xlu0 %594
      %598 = vset.pattern.permute.xlu0 0
      %599 = vperm.xlu0 %598, %v541
      %v600 = vpop.permute.xlu0 %599
      %603 = vset.pattern.permute.xlu0 0
      %604 = vperm.xlu0 %603, %v542
      %v605 = vpop.permute.xlu0 %604
      %608 = vset.pattern.permute.xlu0 0
      %609 = vperm.xlu0 %608, %v543
      %v610 = vpop.permute.xlu0 %609
      %613 = vset.pattern.permute.xlu0 0
      %614 = vperm.xlu0 %613, %v544
      %v615 = vpop.permute.xlu0 %614
      %618 = vset.pattern.permute.xlu0 0
      %619 = vperm.xlu0 %618, %v545
      %v620 = vpop.permute.xlu0 %619
      %623 = vset.pattern.permute.xlu0 0
      %624 = vperm.xlu0 %623, %v546
      %v625 = vpop.permute.xlu0 %624
      %v627 = vld [vmem:[%s2] sm:$0xff]
      %v628 = vld [vmem:[%s2 + $0x8] sm:$0xff]
      %v629 = vld [vmem:[%s2 + $0x10] sm:$0xff]
      %v630 = vld [vmem:[%s2 + $0x18] sm:$0xff]
      %v631 = vld [vmem:[%s4] sm:$0x1]
      %v633 = vlaneseq
      %v634 = vshrl.u32 %v633, 7
      %v635 = vsub.s32 0, %v634
      %v636 = vrot.slane %v631, %v635
      %vm638 = vcmask 261120
      %v640 = vsel %vm638, %v515, 0
      %v643 = vsel %vm638, %v516, 0
      %v646 = vsel %vm638, %v517, 0
      %v649 = vsel %vm638, %v518, 0
      %v652 = vsel %vm638, %v519, 0
      %v655 = vsel %vm638, %v520, 0
      %v658 = vsel %vm638, %v521, 0
      %v661 = vsel %vm638, %v522, 0
      %v664 = vsel %vm638, %v523, 0
      %v667 = vsel %vm638, %v524, 0
      %v670 = vsel %vm638, %v525, 0
      %v673 = vsel %vm638, %v526, 0
      %v676 = vsel %vm638, %v527, 0
      %v679 = vsel %vm638, %v528, 0
      %v682 = vsel %vm638, %v529, 0
      %v685 = vsel %vm638, %v530, 0
      %687 = vmatprep.subr.mxu0 0.0
      %688 = vmatpush1.msra.mxu0 0.0
      %689 = vmatprep.subr.mxu0 0.0
      %690 = vmatpush1.msra.mxu0 0.0
      %691 = vmatprep.subr.mxu0 0.0
      %692 = vmatpush1.msra.mxu0 0.0
      %693 = vmatprep.subr.mxu0 0.0
      %694 = vmatpush1.msra.mxu0 0.0
      %695 = vmatprep.subr.mxu0 0.0
      %696 = vmatpush1.msra.mxu0 0.0
      %697 = vmatprep.subr.mxu0 0.0
      %698 = vmatpush1.msra.mxu0 0.0
      %699 = vmatprep.subr.mxu0 0.0
      %700 = vmatpush1.msra.mxu0 0.0
      %701 = vmatprep.subr.mxu0 0.0
      %702 = vmatpush1.msra.mxu0 0.0
      %703 = vmatprep.subr.mxu0 0.0
      %704 = vmatpush1.msra.mxu0 0.0
      %705 = vmatprep.subr.mxu0 0.0
      %706 = vmatpush1.msra.mxu0 0.0
      %707 = vmatprep.subr.mxu0 0.0
      %708 = vmatpush1.msra.mxu0 0.0
      %709 = vmatprep.subr.mxu0 0.0
      %710 = vmatpush1.msra.mxu0 0.0
      %711 = vmatprep.subr.mxu0 0.0
      %712 = vmatpush1.msra.mxu0 %v630
      %713 = vmatprep.subr.mxu0 0.0
      %714 = vmatpush1.msra.mxu0 %v629
      %715 = vmatprep.subr.mxu0 0.0
      %716 = vmatpush1.msra.mxu0 %v628
      %717 = vmatprep.subr.mxu0 0.0
      %718 = vmatpush1.msra.mxu0 %v627
      %719 = vmatprep.subr.mxu0 0.0
      %720 = vmatpush2.msra.mxu0 0.0
      %721 = vmatprep.subr.mxu0 0.0
      %722 = vmatpush2.msra.mxu0 0.0
      %723 = vmatprep.subr.mxu0 0.0
      %724 = vmatpush2.msra.mxu0 0.0
      %725 = vmatprep.subr.mxu0 0.0
      %726 = vmatpush2.msra.mxu0 0.0
      %727 = vmatprep.subr.mxu0 0.0
      %728 = vmatpush2.msra.mxu0 0.0
      %729 = vmatprep.subr.mxu0 0.0
      %730 = vmatpush2.msra.mxu0 0.0
      %731 = vmatprep.subr.mxu0 0.0
      %732 = vmatpush2.msra.mxu0 0.0
      %733 = vmatprep.subr.mxu0 0.0
      %734 = vmatpush2.msra.mxu0 0.0
      %735 = vmatprep.subr.mxu0 0.0
      %736 = vmatpush2.msra.mxu0 0.0
      %737 = vmatprep.subr.mxu0 0.0
      %738 = vmatpush2.msra.mxu0 0.0
      %739 = vmatprep.subr.mxu0 0.0
      %740 = vmatpush2.msra.mxu0 0.0
      %741 = vmatprep.subr.mxu0 0.0
      %742 = vmatpush2.msra.mxu0 0.0
      %743 = vmatprep.subr.mxu0 0.0
      %744 = vmatpush2.msra.mxu0 0.0
      %745 = vmatprep.subr.mxu0 0.0
      %746 = vmatpush2.msra.mxu0 0.0
      %747 = vmatprep.subr.mxu0 0.0
      %748 = vmatpush2.msra.mxu0 0.0
      %749 = vmatprep.subr.mxu0 0.0
      %750 = vmatpush2.msra.mxu0 0.0
      %751 = vmatprep.mubr.f32.mxu0 0.0
      %752 = vmatmul.mubr.f32.gmra.mxu0 %v640
      %v753 = vpop.f32.mrf.mxu0
      %v754 = vadd.f32 %v636, %v753
      %v755 = vpop.f32.mrf.mxu0
      %756 = vmatprep.mubr.f32.mxu0 0.0
      %757 = vmatmul.mubr.f32.gmra.mxu0 %v643
      %v758 = vpop.f32.mrf.mxu0
      %v759 = vadd.f32 %v636, %v758
      %v760 = vpop.f32.mrf.mxu0
      %761 = vmatprep.mubr.f32.mxu0 0.0
      %762 = vmatmul.mubr.f32.gmra.mxu0 %v646
      %v763 = vpop.f32.mrf.mxu0
      %v764 = vadd.f32 %v636, %v763
      %v765 = vpop.f32.mrf.mxu0
      %766 = vmatprep.mubr.f32.mxu0 0.0
      %767 = vmatmul.mubr.f32.gmra.mxu0 %v649
      %v768 = vpop.f32.mrf.mxu0
      %v769 = vadd.f32 %v636, %v768
      %v770 = vpop.f32.mrf.mxu0
      %771 = vmatprep.mubr.f32.mxu0 0.0
      %772 = vmatmul.mubr.f32.gmra.mxu0 %v652
      %v773 = vpop.f32.mrf.mxu0
      %v774 = vadd.f32 %v636, %v773
      %v775 = vpop.f32.mrf.mxu0
      %776 = vmatprep.mubr.f32.mxu0 0.0
      %777 = vmatmul.mubr.f32.gmra.mxu0 %v655
      %v778 = vpop.f32.mrf.mxu0
      %v779 = vadd.f32 %v636, %v778
      %v780 = vpop.f32.mrf.mxu0
      %781 = vmatprep.mubr.f32.mxu0 0.0
      %782 = vmatmul.mubr.f32.gmra.mxu0 %v658
      %v783 = vpop.f32.mrf.mxu0
      %v784 = vadd.f32 %v636, %v783
      %v785 = vpop.f32.mrf.mxu0
      %786 = vmatprep.mubr.f32.mxu0 0.0
      %787 = vmatmul.mubr.f32.gmra.mxu0 %v661
      %v788 = vpop.f32.mrf.mxu0
      %v789 = vadd.f32 %v636, %v788
      %v790 = vpop.f32.mrf.mxu0
      %791 = vmatprep.mubr.f32.mxu0 0.0
      %792 = vmatmul.mubr.f32.gmra.mxu0 %v664
      %v793 = vpop.f32.mrf.mxu0
      %v794 = vadd.f32 %v636, %v793
      %v795 = vpop.f32.mrf.mxu0
      %796 = vmatprep.mubr.f32.mxu0 0.0
      %797 = vmatmul.mubr.f32.gmra.mxu0 %v667
      %v798 = vpop.f32.mrf.mxu0
      %v799 = vadd.f32 %v636, %v798
      %v800 = vpop.f32.mrf.mxu0
      %801 = vmatprep.mubr.f32.mxu0 0.0
      %802 = vmatmul.mubr.f32.gmra.mxu0 %v670
      %v803 = vpop.f32.mrf.mxu0
      %v804 = vadd.f32 %v636, %v803
      %v805 = vpop.f32.mrf.mxu0
      %806 = vmatprep.mubr.f32.mxu0 0.0
      %807 = vmatmul.mubr.f32.gmra.mxu0 %v673
      %v808 = vpop.f32.mrf.mxu0
      %v809 = vadd.f32 %v636, %v808
      %v810 = vpop.f32.mrf.mxu0
      %811 = vmatprep.mubr.f32.mxu0 0.0
      %812 = vmatmul.mubr.f32.gmra.mxu0 %v676
      %v813 = vpop.f32.mrf.mxu0
      %v814 = vadd.f32 %v636, %v813
      %v815 = vpop.f32.mrf.mxu0
      %816 = vmatprep.mubr.f32.mxu0 0.0
      %817 = vmatmul.mubr.f32.gmra.mxu0 %v679
      %v818 = vpop.f32.mrf.mxu0
      %v819 = vadd.f32 %v636, %v818
      %v820 = vpop.f32.mrf.mxu0
      %821 = vmatprep.mubr.f32.mxu0 0.0
      %822 = vmatmul.mubr.f32.gmra.mxu0 %v682
      %v823 = vpop.f32.mrf.mxu0
      %v824 = vadd.f32 %v636, %v823
      %v825 = vpop.f32.mrf.mxu0
      %826 = vmatprep.mubr.f32.mxu0 0.0
      %827 = vmatmul.mubr.f32.gmra.mxu0 %v685
      %v828 = vpop.f32.mrf.mxu0
      %v829 = vadd.f32 %v636, %v828
      %v830 = vpop.f32.mrf.mxu0
      %831 = vdwg.mxu0
      %832 = vst [vmem:[#allocation2] sm:$0xff] %v754
      %833 = vst [vmem:[#allocation2 + $0x8] sm:$0xff] %v759
      %834 = vst [vmem:[#allocation2 + $0x10] sm:$0xff] %v764
      %835 = vst [vmem:[#allocation2 + $0x18] sm:$0xff] %v769
      %836 = vst [vmem:[#allocation2 + $0x20] sm:$0xff] %v774
      %837 = vst [vmem:[#allocation2 + $0x28] sm:$0xff] %v779
      %838 = vst [vmem:[#allocation2 + $0x30] sm:$0xff] %v784
      %839 = vst [vmem:[#allocation2 + $0x38] sm:$0xff] %v789
      %840 = vst [vmem:[#allocation2 + $0x40] sm:$0xff] %v794
      %841 = vst [vmem:[#allocation2 + $0x48] sm:$0xff] %v799
      %842 = vst [vmem:[#allocation2 + $0x50] sm:$0xff] %v804
      %843 = vst [vmem:[#allocation2 + $0x58] sm:$0xff] %v809
      %844 = vst [vmem:[#allocation2 + $0x60] sm:$0xff] %v814
      %845 = vst [vmem:[#allocation2 + $0x68] sm:$0xff] %v819
      %846 = vst [vmem:[#allocation2 + $0x70] sm:$0xff] %v824
      %847 = vst [vmem:[#allocation2 + $0x78] sm:$0xff] %v829
      %v848 = vld [vmem:[%s3] sm:$0xff]
      %v849 = vld [vmem:[%s3 + $0x8] sm:$0xff]
      %v850 = vld [vmem:[%s3 + $0x10] sm:$0xff]
      %v851 = vld [vmem:[%s3 + $0x18] sm:$0xff]
      loop: start=0, step=1, limit=2
      $region81: #{tpu_custom_call.1} parent=79 // loop_pre_header
        _
      $region82: #{tpu_custom_call.1} parent=79 // loop_header
        %s853 = sphi 0, %s857
        %p854 = scmp.ge.s32.totalorder %s853, 2
        %v858 = vphi 0.0, %v1712
        %v859 = vphi 0.0, %v1706
      $region83: #{tpu_custom_call.1} parent=79 // loop_header_branch
        %856 = sbr.rel (%p854) target = $region87
      $region84: #{tpu_custom_call.1} parent=79 // loop_body
        %s860 = smul.u32 %s853, 64
        %s861 = scalar_lea.vmem [#allocation2], %s860
        %v862 = vld [vmem:[%s861] sm:$0xff]
        %864 = vrot.lane.b32.xlu0 %v858, 64
        %v865 = vpop.permute.xlu0 %864
        %v866 = vsel %vm638, %v865, 0
        %868 = vmatprep.subr.mxu0 0.0
        %869 = vmatpush1.msra.mxu0 0.0
        %870 = vmatprep.subr.mxu0 0.0
        %871 = vmatpush1.msra.mxu0 0.0
        %872 = vmatprep.subr.mxu0 0.0
        %873 = vmatpush1.msra.mxu0 0.0
        %874 = vmatprep.subr.mxu0 0.0
        %875 = vmatpush1.msra.mxu0 0.0
        %876 = vmatprep.subr.mxu0 0.0
        %877 = vmatpush1.msra.mxu0 0.0
        %878 = vmatprep.subr.mxu0 0.0
        %879 = vmatpush1.msra.mxu0 0.0
        %880 = vmatprep.subr.mxu0 0.0
        %881 = vmatpush1.msra.mxu0 0.0
        %882 = vmatprep.subr.mxu0 0.0
        %883 = vmatpush1.msra.mxu0 0.0
        %884 = vmatprep.subr.mxu0 0.0
        %885 = vmatpush1.msra.mxu0 0.0
        %886 = vmatprep.subr.mxu0 0.0
        %887 = vmatpush1.msra.mxu0 0.0
        %888 = vmatprep.subr.mxu0 0.0
        %889 = vmatpush1.msra.mxu0 0.0
        %890 = vmatprep.subr.mxu0 0.0
        %891 = vmatpush1.msra.mxu0 0.0
        %892 = vmatprep.subr.mxu0 0.0
        %893 = vmatpush1.msra.mxu0 %v851
        %894 = vmatprep.subr.mxu0 0.0
        %895 = vmatpush1.msra.mxu0 %v850
        %896 = vmatprep.subr.mxu0 0.0
        %897 = vmatpush1.msra.mxu0 %v849
        %898 = vmatprep.subr.mxu0 0.0
        %899 = vmatpush1.msra.mxu0 %v848
        %900 = vmatprep.subr.mxu0 0.0
        %901 = vmatpush2.msra.mxu0 0.0
        %902 = vmatprep.subr.mxu0 0.0
        %903 = vmatpush2.msra.mxu0 0.0
        %904 = vmatprep.subr.mxu0 0.0
        %905 = vmatpush2.msra.mxu0 0.0
        %906 = vmatprep.subr.mxu0 0.0
        %907 = vmatpush2.msra.mxu0 0.0
        %908 = vmatprep.subr.mxu0 0.0
        %909 = vmatpush2.msra.mxu0 0.0
        %910 = vmatprep.subr.mxu0 0.0
        %911 = vmatpush2.msra.mxu0 0.0
        %912 = vmatprep.subr.mxu0 0.0
        %913 = vmatpush2.msra.mxu0 0.0
        %914 = vmatprep.subr.mxu0 0.0
        %915 = vmatpush2.msra.mxu0 0.0
        %916 = vmatprep.subr.mxu0 0.0
        %917 = vmatpush2.msra.mxu0 0.0
        %918 = vmatprep.subr.mxu0 0.0
        %919 = vmatpush2.msra.mxu0 0.0
        %920 = vmatprep.subr.mxu0 0.0
        %921 = vmatpush2.msra.mxu0 0.0
        %922 = vmatprep.subr.mxu0 0.0
        %923 = vmatpush2.msra.mxu0 0.0
        %924 = vmatprep.subr.mxu0 0.0
        %925 = vmatpush2.msra.mxu0 0.0
        %926 = vmatprep.subr.mxu0 0.0
        %927 = vmatpush2.msra.mxu0 0.0
        %928 = vmatprep.subr.mxu0 0.0
        %929 = vmatpush2.msra.mxu0 0.0
        %930 = vmatprep.subr.mxu0 0.0
        %931 = vmatpush2.msra.mxu0 0.0
        %932 = vmatprep.mubr.f32.mxu0 0.0
        %933 = vmatmul.mubr.f32.gmra.mxu0 %v866
        %v934 = vpop.f32.mrf.mxu0
        %v935 = vadd.f32 0.0, %v934
        %v936 = vpop.f32.mrf.mxu0
        %937 = vdwg.mxu0
        %v938 = vadd.f32 %v862, %v935
        %v939 = vxor.u32 %v938, 2147483648
        %v940 = vmul.f32 %v939, 1.442695
        %v941 = vpow.pop %v940
        %v942 = vadd.f32 %v941, 1.0
        %v943 = vrcp.pop %v942
        %v944 = vmul.f32 1.0, %v943
        %v945 = vtanh.pop %v938
        %v946 = vmul.f32 %v944, %v859
        %948 = vrot.lane.b32.xlu0 %v945, 32
        %v949 = vpop.permute.xlu0 %948
        %v951 = vmul.f32 %v944, %v949
        %953 = vrot.lane.b32.xlu0 %v951, 32
        %v954 = vpop.permute.xlu0 %953
        %v956 = vadd.f32 %v946, %v954
        %v957 = vtanh.pop %v956
        %959 = vrot.lane.b32.xlu0 %v957, 32
        %v960 = vpop.permute.xlu0 %959
        %v962 = vmul.f32 %v944, %v960
        %964 = vrot.lane.b32.xlu0 %v962, 64
        %v965 = vpop.permute.xlu0 %964
        %s967 = scalar_lea.vmem [#allocation3], %s860
        %968 = vst.msk [vmem:[%s967] sm:$0xff] %vm638, %v965
        %s969 = smul.u32 %s853, 8
        %s970 = sadd.s32 %s969, 1
        %s971 = smul.u32 %s970, 8
        %s972 = scalar_lea.vmem [#allocation2], %s971
        %v973 = vld [vmem:[%s972] sm:$0xff]
        %v974 = vsel %vm638, %v965, 0
        %976 = vmatprep.subr.mxu0 0.0
        %977 = vmatpush1.msra.mxu0 0.0
        %978 = vmatprep.subr.mxu0 0.0
        %979 = vmatpush1.msra.mxu0 0.0
        %980 = vmatprep.subr.mxu0 0.0
        %981 = vmatpush1.msra.mxu0 0.0
        %982 = vmatprep.subr.mxu0 0.0
        %983 = vmatpush1.msra.mxu0 0.0
        %984 = vmatprep.subr.mxu0 0.0
        %985 = vmatpush1.msra.mxu0 0.0
        %986 = vmatprep.subr.mxu0 0.0
        %987 = vmatpush1.msra.mxu0 0.0
        %988 = vmatprep.subr.mxu0 0.0
        %989 = vmatpush1.msra.mxu0 0.0
        %990 = vmatprep.subr.mxu0 0.0
        %991 = vmatpush1.msra.mxu0 0.0
        %992 = vmatprep.subr.mxu0 0.0
        %993 = vmatpush1.msra.mxu0 0.0
        %994 = vmatprep.subr.mxu0 0.0
        %995 = vmatpush1.msra.mxu0 0.0
        %996 = vmatprep.subr.mxu0 0.0
        %997 = vmatpush1.msra.mxu0 0.0
        %998 = vmatprep.subr.mxu0 0.0
        %999 = vmatpush1.msra.mxu0 0.0
        %1000 = vmatprep.subr.mxu0 0.0
        %1001 = vmatpush1.msra.mxu0 %v851
        %1002 = vmatprep.subr.mxu0 0.0
        %1003 = vmatpush1.msra.mxu0 %v850
        %1004 = vmatprep.subr.mxu0 0.0
        %1005 = vmatpush1.msra.mxu0 %v849
        %1006 = vmatprep.subr.mxu0 0.0
        %1007 = vmatpush1.msra.mxu0 %v848
        %1008 = vmatprep.subr.mxu0 0.0
        %1009 = vmatpush2.msra.mxu0 0.0
        %1010 = vmatprep.subr.mxu0 0.0
        %1011 = vmatpush2.msra.mxu0 0.0
        %1012 = vmatprep.subr.mxu0 0.0
        %1013 = vmatpush2.msra.mxu0 0.0
        %1014 = vmatprep.subr.mxu0 0.0
        %1015 = vmatpush2.msra.mxu0 0.0
        %1016 = vmatprep.subr.mxu0 0.0
        %1017 = vmatpush2.msra.mxu0 0.0
        %1018 = vmatprep.subr.mxu0 0.0
        %1019 = vmatpush2.msra.mxu0 0.0
        %1020 = vmatprep.subr.mxu0 0.0
        %1021 = vmatpush2.msra.mxu0 0.0
        %1022 = vmatprep.subr.mxu0 0.0
        %1023 = vmatpush2.msra.mxu0 0.0
        %1024 = vmatprep.subr.mxu0 0.0
        %1025 = vmatpush2.msra.mxu0 0.0
        %1026 = vmatprep.subr.mxu0 0.0
        %1027 = vmatpush2.msra.mxu0 0.0
        %1028 = vmatprep.subr.mxu0 0.0
        %1029 = vmatpush2.msra.mxu0 0.0
        %1030 = vmatprep.subr.mxu0 0.0
        %1031 = vmatpush2.msra.mxu0 0.0
        %1032 = vmatprep.subr.mxu0 0.0
        %1033 = vmatpush2.msra.mxu0 0.0
        %1034 = vmatprep.subr.mxu0 0.0
        %1035 = vmatpush2.msra.mxu0 0.0
        %1036 = vmatprep.subr.mxu0 0.0
        %1037 = vmatpush2.msra.mxu0 0.0
        %1038 = vmatprep.subr.mxu0 0.0
        %1039 = vmatpush2.msra.mxu0 0.0
        %1040 = vmatprep.mubr.f32.mxu0 0.0
        %1041 = vmatmul.mubr.f32.gmra.mxu0 %v974
        %v1042 = vpop.f32.mrf.mxu0
        %v1043 = vadd.f32 0.0, %v1042
        %v1044 = vpop.f32.mrf.mxu0
        %1045 = vdwg.mxu0
        %v1046 = vadd.f32 %v973, %v1043
        %v1047 = vxor.u32 %v1046, 2147483648
        %v1048 = vmul.f32 %v1047, 1.442695
        %v1049 = vpow.pop %v1048
        %v1050 = vadd.f32 %v1049, 1.0
        %v1051 = vrcp.pop %v1050
        %v1052 = vmul.f32 1.0, %v1051
        %v1053 = vtanh.pop %v1046
        %v1054 = vmul.f32 %v1052, %v956
        %1056 = vrot.lane.b32.xlu0 %v1053, 32
        %v1057 = vpop.permute.xlu0 %1056
        %v1059 = vmul.f32 %v1052, %v1057
        %1061 = vrot.lane.b32.xlu0 %v1059, 32
        %v1062 = vpop.permute.xlu0 %1061
        %v1064 = vadd.f32 %v1054, %v1062
        %v1065 = vtanh.pop %v1064
        %1067 = vrot.lane.b32.xlu0 %v1065, 32
        %v1068 = vpop.permute.xlu0 %1067
        %v1070 = vmul.f32 %v1052, %v1068
        %1072 = vrot.lane.b32.xlu0 %v1070, 64
        %v1073 = vpop.permute.xlu0 %1072
        %s1075 = scalar_lea.vmem [#allocation3], %s971
        %1076 = vst.msk [vmem:[%s1075] sm:$0xff] %vm638, %v1073
        %s1077 = sadd.s32 %s969, 2
        %s1078 = smul.u32 %s1077, 8
        %s1079 = scalar_lea.vmem [#allocation2], %s1078
        %v1080 = vld [vmem:[%s1079] sm:$0xff]
        %v1081 = vsel %vm638, %v1073, 0
        %1083 = vmatprep.subr.mxu0 0.0
        %1084 = vmatpush1.msra.mxu0 0.0
        %1085 = vmatprep.subr.mxu0 0.0
        %1086 = vmatpush1.msra.mxu0 0.0
        %1087 = vmatprep.subr.mxu0 0.0
        %1088 = vmatpush1.msra.mxu0 0.0
        %1089 = vmatprep.subr.mxu0 0.0
        %1090 = vmatpush1.msra.mxu0 0.0
        %1091 = vmatprep.subr.mxu0 0.0
        %1092 = vmatpush1.msra.mxu0 0.0
        %1093 = vmatprep.subr.mxu0 0.0
        %1094 = vmatpush1.msra.mxu0 0.0
        %1095 = vmatprep.subr.mxu0 0.0
        %1096 = vmatpush1.msra.mxu0 0.0
        %1097 = vmatprep.subr.mxu0 0.0
        %1098 = vmatpush1.msra.mxu0 0.0
        %1099 = vmatprep.subr.mxu0 0.0
        %1100 = vmatpush1.msra.mxu0 0.0
        %1101 = vmatprep.subr.mxu0 0.0
        %1102 = vmatpush1.msra.mxu0 0.0
        %1103 = vmatprep.subr.mxu0 0.0
        %1104 = vmatpush1.msra.mxu0 0.0
        %1105 = vmatprep.subr.mxu0 0.0
        %1106 = vmatpush1.msra.mxu0 0.0
        %1107 = vmatprep.subr.mxu0 0.0
        %1108 = vmatpush1.msra.mxu0 %v851
        %1109 = vmatprep.subr.mxu0 0.0
        %1110 = vmatpush1.msra.mxu0 %v850
        %1111 = vmatprep.subr.mxu0 0.0
        %1112 = vmatpush1.msra.mxu0 %v849
        %1113 = vmatprep.subr.mxu0 0.0
        %1114 = vmatpush1.msra.mxu0 %v848
        %1115 = vmatprep.subr.mxu0 0.0
        %1116 = vmatpush2.msra.mxu0 0.0
        %1117 = vmatprep.subr.mxu0 0.0
        %1118 = vmatpush2.msra.mxu0 0.0
        %1119 = vmatprep.subr.mxu0 0.0
        %1120 = vmatpush2.msra.mxu0 0.0
        %1121 = vmatprep.subr.mxu0 0.0
        %1122 = vmatpush2.msra.mxu0 0.0
        %1123 = vmatprep.subr.mxu0 0.0
        %1124 = vmatpush2.msra.mxu0 0.0
        %1125 = vmatprep.subr.mxu0 0.0
        %1126 = vmatpush2.msra.mxu0 0.0
        %1127 = vmatprep.subr.mxu0 0.0
        %1128 = vmatpush2.msra.mxu0 0.0
        %1129 = vmatprep.subr.mxu0 0.0
        %1130 = vmatpush2.msra.mxu0 0.0
        %1131 = vmatprep.subr.mxu0 0.0
        %1132 = vmatpush2.msra.mxu0 0.0
        %1133 = vmatprep.subr.mxu0 0.0
        %1134 = vmatpush2.msra.mxu0 0.0
        %1135 = vmatprep.subr.mxu0 0.0
        %1136 = vmatpush2.msra.mxu0 0.0
        %1137 = vmatprep.subr.mxu0 0.0
        %1138 = vmatpush2.msra.mxu0 0.0
        %1139 = vmatprep.subr.mxu0 0.0
        %1140 = vmatpush2.msra.mxu0 0.0
        %1141 = vmatprep.subr.mxu0 0.0
        %1142 = vmatpush2.msra.mxu0 0.0
        %1143 = vmatprep.subr.mxu0 0.0
        %1144 = vmatpush2.msra.mxu0 0.0
        %1145 = vmatprep.subr.mxu0 0.0
        %1146 = vmatpush2.msra.mxu0 0.0
        %1147 = vmatprep.mubr.f32.mxu0 0.0
        %1148 = vmatmul.mubr.f32.gmra.mxu0 %v1081
        %v1149 = vpop.f32.mrf.mxu0
        %v1150 = vadd.f32 0.0, %v1149
        %v1151 = vpop.f32.mrf.mxu0
        %1152 = vdwg.mxu0
        %v1153 = vadd.f32 %v1080, %v1150
        %v1154 = vxor.u32 %v1153, 2147483648
        %v1155 = vmul.f32 %v1154, 1.442695
        %v1156 = vpow.pop %v1155
        %v1157 = vadd.f32 %v1156, 1.0
        %v1158 = vrcp.pop %v1157
        %v1159 = vmul.f32 1.0, %v1158
        %v1160 = vtanh.pop %v1153
        %v1161 = vmul.f32 %v1159, %v1064
        %1163 = vrot.lane.b32.xlu0 %v1160, 32
        %v1164 = vpop.permute.xlu0 %1163
        %v1166 = vmul.f32 %v1159, %v1164
        %1168 = vrot.lane.b32.xlu0 %v1166, 32
        %v1169 = vpop.permute.xlu0 %1168
        %v1171 = vadd.f32 %v1161, %v1169
        %v1172 = vtanh.pop %v1171
        %1174 = vrot.lane.b32.xlu0 %v1172, 32
        %v1175 = vpop.permute.xlu0 %1174
        %v1177 = vmul.f32 %v1159, %v1175
        %1179 = vrot.lane.b32.xlu0 %v1177, 64
        %v1180 = vpop.permute.xlu0 %1179
        %s1182 = scalar_lea.vmem [#allocation3], %s1078
        %1183 = vst.msk [vmem:[%s1182] sm:$0xff] %vm638, %v1180
        %s1184 = sadd.s32 %s969, 3
        %s1185 = smul.u32 %s1184, 8
        %s1186 = scalar_lea.vmem [#allocation2], %s1185
        %v1187 = vld [vmem:[%s1186] sm:$0xff]
        %v1188 = vsel %vm638, %v1180, 0
        %1190 = vmatprep.subr.mxu0 0.0
        %1191 = vmatpush1.msra.mxu0 0.0
        %1192 = vmatprep.subr.mxu0 0.0
        %1193 = vmatpush1.msra.mxu0 0.0
        %1194 = vmatprep.subr.mxu0 0.0
        %1195 = vmatpush1.msra.mxu0 0.0
        %1196 = vmatprep.subr.mxu0 0.0
        %1197 = vmatpush1.msra.mxu0 0.0
        %1198 = vmatprep.subr.mxu0 0.0
        %1199 = vmatpush1.msra.mxu0 0.0
        %1200 = vmatprep.subr.mxu0 0.0
        %1201 = vmatpush1.msra.mxu0 0.0
        %1202 = vmatprep.subr.mxu0 0.0
        %1203 = vmatpush1.msra.mxu0 0.0
        %1204 = vmatprep.subr.mxu0 0.0
        %1205 = vmatpush1.msra.mxu0 0.0
        %1206 = vmatprep.subr.mxu0 0.0
        %1207 = vmatpush1.msra.mxu0 0.0
        %1208 = vmatprep.subr.mxu0 0.0
        %1209 = vmatpush1.msra.mxu0 0.0
        %1210 = vmatprep.subr.mxu0 0.0
        %1211 = vmatpush1.msra.mxu0 0.0
        %1212 = vmatprep.subr.mxu0 0.0
        %1213 = vmatpush1.msra.mxu0 0.0
        %1214 = vmatprep.subr.mxu0 0.0
        %1215 = vmatpush1.msra.mxu0 %v851
        %1216 = vmatprep.subr.mxu0 0.0
        %1217 = vmatpush1.msra.mxu0 %v850
        %1218 = vmatprep.subr.mxu0 0.0
        %1219 = vmatpush1.msra.mxu0 %v849
        %1220 = vmatprep.subr.mxu0 0.0
        %1221 = vmatpush1.msra.mxu0 %v848
        %1222 = vmatprep.subr.mxu0 0.0
        %1223 = vmatpush2.msra.mxu0 0.0
        %1224 = vmatprep.subr.mxu0 0.0
        %1225 = vmatpush2.msra.mxu0 0.0
        %1226 = vmatprep.subr.mxu0 0.0
        %1227 = vmatpush2.msra.mxu0 0.0
        %1228 = vmatprep.subr.mxu0 0.0
        %1229 = vmatpush2.msra.mxu0 0.0
        %1230 = vmatprep.subr.mxu0 0.0
        %1231 = vmatpush2.msra.mxu0 0.0
        %1232 = vmatprep.subr.mxu0 0.0
        %1233 = vmatpush2.msra.mxu0 0.0
        %1234 = vmatprep.subr.mxu0 0.0
        %1235 = vmatpush2.msra.mxu0 0.0
        %1236 = vmatprep.subr.mxu0 0.0
        %1237 = vmatpush2.msra.mxu0 0.0
        %1238 = vmatprep.subr.mxu0 0.0
        %1239 = vmatpush2.msra.mxu0 0.0
        %1240 = vmatprep.subr.mxu0 0.0
        %1241 = vmatpush2.msra.mxu0 0.0
        %1242 = vmatprep.subr.mxu0 0.0
        %1243 = vmatpush2.msra.mxu0 0.0
        %1244 = vmatprep.subr.mxu0 0.0
        %1245 = vmatpush2.msra.mxu0 0.0
        %1246 = vmatprep.subr.mxu0 0.0
        %1247 = vmatpush2.msra.mxu0 0.0
        %1248 = vmatprep.subr.mxu0 0.0
        %1249 = vmatpush2.msra.mxu0 0.0
        %1250 = vmatprep.subr.mxu0 0.0
        %1251 = vmatpush2.msra.mxu0 0.0
        %1252 = vmatprep.subr.mxu0 0.0
        %1253 = vmatpush2.msra.mxu0 0.0
        %1254 = vmatprep.mubr.f32.mxu0 0.0
        %1255 = vmatmul.mubr.f32.gmra.mxu0 %v1188
        %v1256 = vpop.f32.mrf.mxu0
        %v1257 = vadd.f32 0.0, %v1256
        %v1258 = vpop.f32.mrf.mxu0
        %1259 = vdwg.mxu0
        %v1260 = vadd.f32 %v1187, %v1257
        %v1261 = vxor.u32 %v1260, 2147483648
        %v1262 = vmul.f32 %v1261, 1.442695
        %v1263 = vpow.pop %v1262
        %v1264 = vadd.f32 %v1263, 1.0
        %v1265 = vrcp.pop %v1264
        %v1266 = vmul.f32 1.0, %v1265
        %v1267 = vtanh.pop %v1260
        %v1268 = vmul.f32 %v1266, %v1171
        %1270 = vrot.lane.b32.xlu0 %v1267, 32
        %v1271 = vpop.permute.xlu0 %1270
        %v1273 = vmul.f32 %v1266, %v1271
        %1275 = vrot.lane.b32.xlu0 %v1273, 32
        %v1276 = vpop.permute.xlu0 %1275
        %v1278 = vadd.f32 %v1268, %v1276
        %v1279 = vtanh.pop %v1278
        %1281 = vrot.lane.b32.xlu0 %v1279, 32
        %v1282 = vpop.permute.xlu0 %1281
        %v1284 = vmul.f32 %v1266, %v1282
        %1286 = vrot.lane.b32.xlu0 %v1284, 64
        %v1287 = vpop.permute.xlu0 %1286
        %s1289 = scalar_lea.vmem [#allocation3], %s1185
        %1290 = vst.msk [vmem:[%s1289] sm:$0xff] %vm638, %v1287
        %s1291 = sadd.s32 %s969, 4
        %s1292 = smul.u32 %s1291, 8
        %s1293 = scalar_lea.vmem [#allocation2], %s1292
        %v1294 = vld [vmem:[%s1293] sm:$0xff]
        %v1295 = vsel %vm638, %v1287, 0
        %1297 = vmatprep.subr.mxu0 0.0
        %1298 = vmatpush1.msra.mxu0 0.0
        %1299 = vmatprep.subr.mxu0 0.0
        %1300 = vmatpush1.msra.mxu0 0.0
        %1301 = vmatprep.subr.mxu0 0.0
        %1302 = vmatpush1.msra.mxu0 0.0
        %1303 = vmatprep.subr.mxu0 0.0
        %1304 = vmatpush1.msra.mxu0 0.0
        %1305 = vmatprep.subr.mxu0 0.0
        %1306 = vmatpush1.msra.mxu0 0.0
        %1307 = vmatprep.subr.mxu0 0.0
        %1308 = vmatpush1.msra.mxu0 0.0
        %1309 = vmatprep.subr.mxu0 0.0
        %1310 = vmatpush1.msra.mxu0 0.0
        %1311 = vmatprep.subr.mxu0 0.0
        %1312 = vmatpush1.msra.mxu0 0.0
        %1313 = vmatprep.subr.mxu0 0.0
        %1314 = vmatpush1.msra.mxu0 0.0
        %1315 = vmatprep.subr.mxu0 0.0
        %1316 = vmatpush1.msra.mxu0 0.0
        %1317 = vmatprep.subr.mxu0 0.0
        %1318 = vmatpush1.msra.mxu0 0.0
        %1319 = vmatprep.subr.mxu0 0.0
        %1320 = vmatpush1.msra.mxu0 0.0
        %1321 = vmatprep.subr.mxu0 0.0
        %1322 = vmatpush1.msra.mxu0 %v851
        %1323 = vmatprep.subr.mxu0 0.0
        %1324 = vmatpush1.msra.mxu0 %v850
        %1325 = vmatprep.subr.mxu0 0.0
        %1326 = vmatpush1.msra.mxu0 %v849
        %1327 = vmatprep.subr.mxu0 0.0
        %1328 = vmatpush1.msra.mxu0 %v848
        %1329 = vmatprep.subr.mxu0 0.0
        %1330 = vmatpush2.msra.mxu0 0.0
        %1331 = vmatprep.subr.mxu0 0.0
        %1332 = vmatpush2.msra.mxu0 0.0
        %1333 = vmatprep.subr.mxu0 0.0
        %1334 = vmatpush2.msra.mxu0 0.0
        %1335 = vmatprep.subr.mxu0 0.0
        %1336 = vmatpush2.msra.mxu0 0.0
        %1337 = vmatprep.subr.mxu0 0.0
        %1338 = vmatpush2.msra.mxu0 0.0
        %1339 = vmatprep.subr.mxu0 0.0
        %1340 = vmatpush2.msra.mxu0 0.0
        %1341 = vmatprep.subr.mxu0 0.0
        %1342 = vmatpush2.msra.mxu0 0.0
        %1343 = vmatprep.subr.mxu0 0.0
        %1344 = vmatpush2.msra.mxu0 0.0
        %1345 = vmatprep.subr.mxu0 0.0
        %1346 = vmatpush2.msra.mxu0 0.0
        %1347 = vmatprep.subr.mxu0 0.0
        %1348 = vmatpush2.msra.mxu0 0.0
        %1349 = vmatprep.subr.mxu0 0.0
        %1350 = vmatpush2.msra.mxu0 0.0
        %1351 = vmatprep.subr.mxu0 0.0
        %1352 = vmatpush2.msra.mxu0 0.0
        %1353 = vmatprep.subr.mxu0 0.0
        %1354 = vmatpush2.msra.mxu0 0.0
        %1355 = vmatprep.subr.mxu0 0.0
        %1356 = vmatpush2.msra.mxu0 0.0
        %1357 = vmatprep.subr.mxu0 0.0
        %1358 = vmatpush2.msra.mxu0 0.0
        %1359 = vmatprep.subr.mxu0 0.0
        %1360 = vmatpush2.msra.mxu0 0.0
        %1361 = vmatprep.mubr.f32.mxu0 0.0
        %1362 = vmatmul.mubr.f32.gmra.mxu0 %v1295
        %v1363 = vpop.f32.mrf.mxu0
        %v1364 = vadd.f32 0.0, %v1363
        %v1365 = vpop.f32.mrf.mxu0
        %1366 = vdwg.mxu0
        %v1367 = vadd.f32 %v1294, %v1364
        %v1368 = vxor.u32 %v1367, 2147483648
        %v1369 = vmul.f32 %v1368, 1.442695
        %v1370 = vpow.pop %v1369
        %v1371 = vadd.f32 %v1370, 1.0
        %v1372 = vrcp.pop %v1371
        %v1373 = vmul.f32 1.0, %v1372
        %v1374 = vtanh.pop %v1367
        %v1375 = vmul.f32 %v1373, %v1278
        %1377 = vrot.lane.b32.xlu0 %v1374, 32
        %v1378 = vpop.permute.xlu0 %1377
        %v1380 = vmul.f32 %v1373, %v1378
        %1382 = vrot.lane.b32.xlu0 %v1380, 32
        %v1383 = vpop.permute.xlu0 %1382
        %v1385 = vadd.f32 %v1375, %v1383
        %v1386 = vtanh.pop %v1385
        %1388 = vrot.lane.b32.xlu0 %v1386, 32
        %v1389 = vpop.permute.xlu0 %1388
        %v1391 = vmul.f32 %v1373, %v1389
        %1393 = vrot.lane.b32.xlu0 %v1391, 64
        %v1394 = vpop.permute.xlu0 %1393
        %s1396 = scalar_lea.vmem [#allocation3], %s1292
        %1397 = vst.msk [vmem:[%s1396] sm:$0xff] %vm638, %v1394
        %s1398 = sadd.s32 %s969, 5
        %s1399 = smul.u32 %s1398, 8
        %s1400 = scalar_lea.vmem [#allocation2], %s1399
        %v1401 = vld [vmem:[%s1400] sm:$0xff]
        %v1402 = vsel %vm638, %v1394, 0
        %1404 = vmatprep.subr.mxu0 0.0
        %1405 = vmatpush1.msra.mxu0 0.0
        %1406 = vmatprep.subr.mxu0 0.0
        %1407 = vmatpush1.msra.mxu0 0.0
        %1408 = vmatprep.subr.mxu0 0.0
        %1409 = vmatpush1.msra.mxu0 0.0
        %1410 = vmatprep.subr.mxu0 0.0
        %1411 = vmatpush1.msra.mxu0 0.0
        %1412 = vmatprep.subr.mxu0 0.0
        %1413 = vmatpush1.msra.mxu0 0.0
        %1414 = vmatprep.subr.mxu0 0.0
        %1415 = vmatpush1.msra.mxu0 0.0
        %1416 = vmatprep.subr.mxu0 0.0
        %1417 = vmatpush1.msra.mxu0 0.0
        %1418 = vmatprep.subr.mxu0 0.0
        %1419 = vmatpush1.msra.mxu0 0.0
        %1420 = vmatprep.subr.mxu0 0.0
        %1421 = vmatpush1.msra.mxu0 0.0
        %1422 = vmatprep.subr.mxu0 0.0
        %1423 = vmatpush1.msra.mxu0 0.0
        %1424 = vmatprep.subr.mxu0 0.0
        %1425 = vmatpush1.msra.mxu0 0.0
        %1426 = vmatprep.subr.mxu0 0.0
        %1427 = vmatpush1.msra.mxu0 0.0
        %1428 = vmatprep.subr.mxu0 0.0
        %1429 = vmatpush1.msra.mxu0 %v851
        %1430 = vmatprep.subr.mxu0 0.0
        %1431 = vmatpush1.msra.mxu0 %v850
        %1432 = vmatprep.subr.mxu0 0.0
        %1433 = vmatpush1.msra.mxu0 %v849
        %1434 = vmatprep.subr.mxu0 0.0
        %1435 = vmatpush1.msra.mxu0 %v848
        %1436 = vmatprep.subr.mxu0 0.0
        %1437 = vmatpush2.msra.mxu0 0.0
        %1438 = vmatprep.subr.mxu0 0.0
        %1439 = vmatpush2.msra.mxu0 0.0
        %1440 = vmatprep.subr.mxu0 0.0
        %1441 = vmatpush2.msra.mxu0 0.0
        %1442 = vmatprep.subr.mxu0 0.0
        %1443 = vmatpush2.msra.mxu0 0.0
        %1444 = vmatprep.subr.mxu0 0.0
        %1445 = vmatpush2.msra.mxu0 0.0
        %1446 = vmatprep.subr.mxu0 0.0
        %1447 = vmatpush2.msra.mxu0 0.0
        %1448 = vmatprep.subr.mxu0 0.0
        %1449 = vmatpush2.msra.mxu0 0.0
        %1450 = vmatprep.subr.mxu0 0.0
        %1451 = vmatpush2.msra.mxu0 0.0
        %1452 = vmatprep.subr.mxu0 0.0
        %1453 = vmatpush2.msra.mxu0 0.0
        %1454 = vmatprep.subr.mxu0 0.0
        %1455 = vmatpush2.msra.mxu0 0.0
        %1456 = vmatprep.subr.mxu0 0.0
        %1457 = vmatpush2.msra.mxu0 0.0
        %1458 = vmatprep.subr.mxu0 0.0
        %1459 = vmatpush2.msra.mxu0 0.0
        %1460 = vmatprep.subr.mxu0 0.0
        %1461 = vmatpush2.msra.mxu0 0.0
        %1462 = vmatprep.subr.mxu0 0.0
        %1463 = vmatpush2.msra.mxu0 0.0
        %1464 = vmatprep.subr.mxu0 0.0
        %1465 = vmatpush2.msra.mxu0 0.0
        %1466 = vmatprep.subr.mxu0 0.0
        %1467 = vmatpush2.msra.mxu0 0.0
        %1468 = vmatprep.mubr.f32.mxu0 0.0
        %1469 = vmatmul.mubr.f32.gmra.mxu0 %v1402
        %v1470 = vpop.f32.mrf.mxu0
        %v1471 = vadd.f32 0.0, %v1470
        %v1472 = vpop.f32.mrf.mxu0
        %1473 = vdwg.mxu0
        %v1474 = vadd.f32 %v1401, %v1471
        %v1475 = vxor.u32 %v1474, 2147483648
        %v1476 = vmul.f32 %v1475, 1.442695
        %v1477 = vpow.pop %v1476
        %v1478 = vadd.f32 %v1477, 1.0
        %v1479 = vrcp.pop %v1478
        %v1480 = vmul.f32 1.0, %v1479
        %v1481 = vtanh.pop %v1474
        %v1482 = vmul.f32 %v1480, %v1385
        %1484 = vrot.lane.b32.xlu0 %v1481, 32
        %v1485 = vpop.permute.xlu0 %1484
        %v1487 = vmul.f32 %v1480, %v1485
        %1489 = vrot.lane.b32.xlu0 %v1487, 32
        %v1490 = vpop.permute.xlu0 %1489
        %v1492 = vadd.f32 %v1482, %v1490
        %v1493 = vtanh.pop %v1492
        %1495 = vrot.lane.b32.xlu0 %v1493, 32
        %v1496 = vpop.permute.xlu0 %1495
        %v1498 = vmul.f32 %v1480, %v1496
        %1500 = vrot.lane.b32.xlu0 %v1498, 64
        %v1501 = vpop.permute.xlu0 %1500
        %s1503 = scalar_lea.vmem [#allocation3], %s1399
        %1504 = vst.msk [vmem:[%s1503] sm:$0xff] %vm638, %v1501
        %s1505 = sadd.s32 %s969, 6
        %s1506 = smul.u32 %s1505, 8
        %s1507 = scalar_lea.vmem [#allocation2], %s1506
        %v1508 = vld [vmem:[%s1507] sm:$0xff]
        %v1509 = vsel %vm638, %v1501, 0
        %1511 = vmatprep.subr.mxu0 0.0
        %1512 = vmatpush1.msra.mxu0 0.0
        %1513 = vmatprep.subr.mxu0 0.0
        %1514 = vmatpush1.msra.mxu0 0.0
        %1515 = vmatprep.subr.mxu0 0.0
        %1516 = vmatpush1.msra.mxu0 0.0
        %1517 = vmatprep.subr.mxu0 0.0
        %1518 = vmatpush1.msra.mxu0 0.0
        %1519 = vmatprep.subr.mxu0 0.0
        %1520 = vmatpush1.msra.mxu0 0.0
        %1521 = vmatprep.subr.mxu0 0.0
        %1522 = vmatpush1.msra.mxu0 0.0
        %1523 = vmatprep.subr.mxu0 0.0
        %1524 = vmatpush1.msra.mxu0 0.0
        %1525 = vmatprep.subr.mxu0 0.0
        %1526 = vmatpush1.msra.mxu0 0.0
        %1527 = vmatprep.subr.mxu0 0.0
        %1528 = vmatpush1.msra.mxu0 0.0
        %1529 = vmatprep.subr.mxu0 0.0
        %1530 = vmatpush1.msra.mxu0 0.0
        %1531 = vmatprep.subr.mxu0 0.0
        %1532 = vmatpush1.msra.mxu0 0.0
        %1533 = vmatprep.subr.mxu0 0.0
        %1534 = vmatpush1.msra.mxu0 0.0
        %1535 = vmatprep.subr.mxu0 0.0
        %1536 = vmatpush1.msra.mxu0 %v851
        %1537 = vmatprep.subr.mxu0 0.0
        %1538 = vmatpush1.msra.mxu0 %v850
        %1539 = vmatprep.subr.mxu0 0.0
        %1540 = vmatpush1.msra.mxu0 %v849
        %1541 = vmatprep.subr.mxu0 0.0
        %1542 = vmatpush1.msra.mxu0 %v848
        %1543 = vmatprep.subr.mxu0 0.0
        %1544 = vmatpush2.msra.mxu0 0.0
        %1545 = vmatprep.subr.mxu0 0.0
        %1546 = vmatpush2.msra.mxu0 0.0
        %1547 = vmatprep.subr.mxu0 0.0
        %1548 = vmatpush2.msra.mxu0 0.0
        %1549 = vmatprep.subr.mxu0 0.0
        %1550 = vmatpush2.msra.mxu0 0.0
        %1551 = vmatprep.subr.mxu0 0.0
        %1552 = vmatpush2.msra.mxu0 0.0
        %1553 = vmatprep.subr.mxu0 0.0
        %1554 = vmatpush2.msra.mxu0 0.0
        %1555 = vmatprep.subr.mxu0 0.0
        %1556 = vmatpush2.msra.mxu0 0.0
        %1557 = vmatprep.subr.mxu0 0.0
        %1558 = vmatpush2.msra.mxu0 0.0
        %1559 = vmatprep.subr.mxu0 0.0
        %1560 = vmatpush2.msra.mxu0 0.0
        %1561 = vmatprep.subr.mxu0 0.0
        %1562 = vmatpush2.msra.mxu0 0.0
        %1563 = vmatprep.subr.mxu0 0.0
        %1564 = vmatpush2.msra.mxu0 0.0
        %1565 = vmatprep.subr.mxu0 0.0
        %1566 = vmatpush2.msra.mxu0 0.0
        %1567 = vmatprep.subr.mxu0 0.0
        %1568 = vmatpush2.msra.mxu0 0.0
        %1569 = vmatprep.subr.mxu0 0.0
        %1570 = vmatpush2.msra.mxu0 0.0
        %1571 = vmatprep.subr.mxu0 0.0
        %1572 = vmatpush2.msra.mxu0 0.0
        %1573 = vmatprep.subr.mxu0 0.0
        %1574 = vmatpush2.msra.mxu0 0.0
        %1575 = vmatprep.mubr.f32.mxu0 0.0
        %1576 = vmatmul.mubr.f32.gmra.mxu0 %v1509
        %v1577 = vpop.f32.mrf.mxu0
        %v1578 = vadd.f32 0.0, %v1577
        %v1579 = vpop.f32.mrf.mxu0
        %1580 = vdwg.mxu0
        %v1581 = vadd.f32 %v1508, %v1578
        %v1582 = vxor.u32 %v1581, 2147483648
        %v1583 = vmul.f32 %v1582, 1.442695
        %v1584 = vpow.pop %v1583
        %v1585 = vadd.f32 %v1584, 1.0
        %v1586 = vrcp.pop %v1585
        %v1587 = vmul.f32 1.0, %v1586
        %v1588 = vtanh.pop %v1581
        %v1589 = vmul.f32 %v1587, %v1492
        %1591 = vrot.lane.b32.xlu0 %v1588, 32
        %v1592 = vpop.permute.xlu0 %1591
        %v1594 = vmul.f32 %v1587, %v1592
        %1596 = vrot.lane.b32.xlu0 %v1594, 32
        %v1597 = vpop.permute.xlu0 %1596
        %v1599 = vadd.f32 %v1589, %v1597
        %v1600 = vtanh.pop %v1599
        %1602 = vrot.lane.b32.xlu0 %v1600, 32
        %v1603 = vpop.permute.xlu0 %1602
        %v1605 = vmul.f32 %v1587, %v1603
        %1607 = vrot.lane.b32.xlu0 %v1605, 64
        %v1608 = vpop.permute.xlu0 %1607
        %s1610 = scalar_lea.vmem [#allocation3], %s1506
        %1611 = vst.msk [vmem:[%s1610] sm:$0xff] %vm638, %v1608
        %s1612 = sadd.s32 %s969, 7
        %s1613 = smul.u32 %s1612, 8
        %s1614 = scalar_lea.vmem [#allocation2], %s1613
        %v1615 = vld [vmem:[%s1614] sm:$0xff]
        %v1616 = vsel %vm638, %v1608, 0
        %1618 = vmatprep.subr.mxu0 0.0
        %1619 = vmatpush1.msra.mxu0 0.0
        %1620 = vmatprep.subr.mxu0 0.0
        %1621 = vmatpush1.msra.mxu0 0.0
        %1622 = vmatprep.subr.mxu0 0.0
        %1623 = vmatpush1.msra.mxu0 0.0
        %1624 = vmatprep.subr.mxu0 0.0
        %1625 = vmatpush1.msra.mxu0 0.0
        %1626 = vmatprep.subr.mxu0 0.0
        %1627 = vmatpush1.msra.mxu0 0.0
        %1628 = vmatprep.subr.mxu0 0.0
        %1629 = vmatpush1.msra.mxu0 0.0
        %1630 = vmatprep.subr.mxu0 0.0
        %1631 = vmatpush1.msra.mxu0 0.0
        %1632 = vmatprep.subr.mxu0 0.0
        %1633 = vmatpush1.msra.mxu0 0.0
        %1634 = vmatprep.subr.mxu0 0.0
        %1635 = vmatpush1.msra.mxu0 0.0
        %1636 = vmatprep.subr.mxu0 0.0
        %1637 = vmatpush1.msra.mxu0 0.0
        %1638 = vmatprep.subr.mxu0 0.0
        %1639 = vmatpush1.msra.mxu0 0.0
        %1640 = vmatprep.subr.mxu0 0.0
        %1641 = vmatpush1.msra.mxu0 0.0
        %1642 = vmatprep.subr.mxu0 0.0
        %1643 = vmatpush1.msra.mxu0 %v851
        %1644 = vmatprep.subr.mxu0 0.0
        %1645 = vmatpush1.msra.mxu0 %v850
        %1646 = vmatprep.subr.mxu0 0.0
        %1647 = vmatpush1.msra.mxu0 %v849
        %1648 = vmatprep.subr.mxu0 0.0
        %1649 = vmatpush1.msra.mxu0 %v848
        %1650 = vmatprep.subr.mxu0 0.0
        %1651 = vmatpush2.msra.mxu0 0.0
        %1652 = vmatprep.subr.mxu0 0.0
        %1653 = vmatpush2.msra.mxu0 0.0
        %1654 = vmatprep.subr.mxu0 0.0
        %1655 = vmatpush2.msra.mxu0 0.0
        %1656 = vmatprep.subr.mxu0 0.0
        %1657 = vmatpush2.msra.mxu0 0.0
        %1658 = vmatprep.subr.mxu0 0.0
        %1659 = vmatpush2.msra.mxu0 0.0
        %1660 = vmatprep.subr.mxu0 0.0
        %1661 = vmatpush2.msra.mxu0 0.0
        %1662 = vmatprep.subr.mxu0 0.0
        %1663 = vmatpush2.msra.mxu0 0.0
        %1664 = vmatprep.subr.mxu0 0.0
        %1665 = vmatpush2.msra.mxu0 0.0
        %1666 = vmatprep.subr.mxu0 0.0
        %1667 = vmatpush2.msra.mxu0 0.0
        %1668 = vmatprep.subr.mxu0 0.0
        %1669 = vmatpush2.msra.mxu0 0.0
        %1670 = vmatprep.subr.mxu0 0.0
        %1671 = vmatpush2.msra.mxu0 0.0
        %1672 = vmatprep.subr.mxu0 0.0
        %1673 = vmatpush2.msra.mxu0 0.0
        %1674 = vmatprep.subr.mxu0 0.0
        %1675 = vmatpush2.msra.mxu0 0.0
        %1676 = vmatprep.subr.mxu0 0.0
        %1677 = vmatpush2.msra.mxu0 0.0
        %1678 = vmatprep.subr.mxu0 0.0
        %1679 = vmatpush2.msra.mxu0 0.0
        %1680 = vmatprep.subr.mxu0 0.0
        %1681 = vmatpush2.msra.mxu0 0.0
        %1682 = vmatprep.mubr.f32.mxu0 0.0
        %1683 = vmatmul.mubr.f32.gmra.mxu0 %v1616
        %v1684 = vpop.f32.mrf.mxu0
        %v1685 = vadd.f32 0.0, %v1684
        %v1686 = vpop.f32.mrf.mxu0
        %1687 = vdwg.mxu0
        %v1688 = vadd.f32 %v1615, %v1685
        %v1689 = vxor.u32 %v1688, 2147483648
        %v1690 = vmul.f32 %v1689, 1.442695
        %v1691 = vpow.pop %v1690
        %v1692 = vadd.f32 %v1691, 1.0
        %v1693 = vrcp.pop %v1692
        %v1694 = vmul.f32 1.0, %v1693
        %v1695 = vtanh.pop %v1688
        %v1696 = vmul.f32 %v1694, %v1599
        %1698 = vrot.lane.b32.xlu0 %v1695, 32
        %v1699 = vpop.permute.xlu0 %1698
        %v1701 = vmul.f32 %v1694, %v1699
        %1703 = vrot.lane.b32.xlu0 %v1701, 32
        %v1704 = vpop.permute.xlu0 %1703
        %v1706 = vadd.f32 %v1696, %v1704
        %v1707 = vtanh.pop %v1706
        %1709 = vrot.lane.b32.xlu0 %v1707, 32
        %v1710 = vpop.permute.xlu0 %1709
        %v1712 = vmul.f32 %v1694, %v1710
        %1714 = vrot.lane.b32.xlu0 %v1712, 64
        %v1715 = vpop.permute.xlu0 %1714
        %s1717 = scalar_lea.vmem [#allocation3], %s1613
        %1718 = vst.msk [vmem:[%s1717] sm:$0xff] %vm638, %v1715
      $region85: #{tpu_custom_call.1} parent=79 // loop_footer
        %s857 = sadd.s32 1, %s853
      $region86: #{tpu_custom_call.1} parent=79 // loop_footer_branch
        %852 = sbr.rel target = $region82
      $region87: #{tpu_custom_call.1} parent=79 // loop_exit
        _
      %v1719 = vld [vmem:[#allocation3] sm:$0xff]
      %v1720 = vld [vmem:[#allocation3 + $0x8] sm:$0xff]
      %v1721 = vld [vmem:[#allocation3 + $0x10] sm:$0xff]
      %v1722 = vld [vmem:[#allocation3 + $0x18] sm:$0xff]
      %v1723 = vld [vmem:[#allocation3 + $0x20] sm:$0xff]
      %v1724 = vld [vmem:[#allocation3 + $0x28] sm:$0xff]
      %v1725 = vld [vmem:[#allocation3 + $0x30] sm:$0xff]
      %v1726 = vld [vmem:[#allocation3 + $0x38] sm:$0xff]
      %v1727 = vld [vmem:[#allocation3 + $0x40] sm:$0xff]
      %v1728 = vld [vmem:[#allocation3 + $0x48] sm:$0xff]
      %v1729 = vld [vmem:[#allocation3 + $0x50] sm:$0xff]
      %v1730 = vld [vmem:[#allocation3 + $0x58] sm:$0xff]
      %v1731 = vld [vmem:[#allocation3 + $0x60] sm:$0xff]
      %v1732 = vld [vmem:[#allocation3 + $0x68] sm:$0xff]
      %v1733 = vld [vmem:[#allocation3 + $0x70] sm:$0xff]
      %v1734 = vld [vmem:[#allocation3 + $0x78] sm:$0xff]
      %v1735 = vtanh.pop %v1719
      %v1736 = vtanh.pop %v1720
      %v1737 = vtanh.pop %v1721
      %v1738 = vtanh.pop %v1722
      %v1739 = vtanh.pop %v1723
      %v1740 = vtanh.pop %v1724
      %v1741 = vtanh.pop %v1725
      %v1742 = vtanh.pop %v1726
      %v1743 = vtanh.pop %v1727
      %v1744 = vtanh.pop %v1728
      %v1745 = vtanh.pop %v1729
      %v1746 = vtanh.pop %v1730
      %v1747 = vtanh.pop %v1731
      %v1748 = vtanh.pop %v1732
      %v1749 = vtanh.pop %v1733
      %v1750 = vtanh.pop %v1734
      %1751 = vst.msk [vmem:[#allocation4] sm:$0xff] %vm638, 0.0
      %1752 = vst.msk [vmem:[#allocation4 + $0x88] sm:$0xff] %vm638, 0.0
      %1753 = vst.msk [vmem:[#allocation4 + $0x8] sm:$0xff] %vm638, %v515
      %1754 = vst.msk [vmem:[#allocation4 + $0x10] sm:$0xff] %vm638, %v516
      %1755 = vst.msk [vmem:[#allocation4 + $0x18] sm:$0xff] %vm638, %v517
      %1756 = vst.msk [vmem:[#allocation4 + $0x20] sm:$0xff] %vm638, %v518
      %1757 = vst.msk [vmem:[#allocation4 + $0x28] sm:$0xff] %vm638, %v519
      %1758 = vst.msk [vmem:[#allocation4 + $0x30] sm:$0xff] %vm638, %v520
      %1759 = vst.msk [vmem:[#allocation4 + $0x38] sm:$0xff] %vm638, %v521
      %1760 = vst.msk [vmem:[#allocation4 + $0x40] sm:$0xff] %vm638, %v522
      %1761 = vst.msk [vmem:[#allocation4 + $0x48] sm:$0xff] %vm638, %v523
      %1762 = vst.msk [vmem:[#allocation4 + $0x50] sm:$0xff] %vm638, %v524
      %1763 = vst.msk [vmem:[#allocation4 + $0x58] sm:$0xff] %vm638, %v525
      %1764 = vst.msk [vmem:[#allocation4 + $0x60] sm:$0xff] %vm638, %v526
      %1765 = vst.msk [vmem:[#allocation4 + $0x68] sm:$0xff] %vm638, %v527
      %1766 = vst.msk [vmem:[#allocation4 + $0x70] sm:$0xff] %vm638, %v528
      %1767 = vst.msk [vmem:[#allocation4 + $0x78] sm:$0xff] %vm638, %v529
      %1768 = vst.msk [vmem:[#allocation4 + $0x80] sm:$0xff] %vm638, %v530
      %v1769 = vld [vmem:[#allocation4] sm:$0xff]
      %v1770 = vld [vmem:[#allocation4 + $0x8] sm:$0xff]
      %v1771 = vld [vmem:[#allocation4 + $0x10] sm:$0xff]
      %v1772 = vld [vmem:[#allocation4 + $0x18] sm:$0xff]
      %v1773 = vld [vmem:[#allocation4 + $0x20] sm:$0xff]
      %v1774 = vld [vmem:[#allocation4 + $0x28] sm:$0xff]
      %v1775 = vld [vmem:[#allocation4 + $0x30] sm:$0xff]
      %v1776 = vld [vmem:[#allocation4 + $0x38] sm:$0xff]
      %v1777 = vld [vmem:[#allocation4 + $0x40] sm:$0xff]
      %v1778 = vld [vmem:[#allocation4 + $0x48] sm:$0xff]
      %v1779 = vld [vmem:[#allocation4 + $0x50] sm:$0xff]
      %v1780 = vld [vmem:[#allocation4 + $0x58] sm:$0xff]
      %v1781 = vld [vmem:[#allocation4 + $0x60] sm:$0xff]
      %v1782 = vld [vmem:[#allocation4 + $0x68] sm:$0xff]
      %v1783 = vld [vmem:[#allocation4 + $0x70] sm:$0xff]
      %v1784 = vld [vmem:[#allocation4 + $0x78] sm:$0xff]
      %v1785 = vld [vmem:[%s5] sm:$0xff]
      %v1786 = vld [vmem:[%s5 + $0x8] sm:$0xff]
      %v1787 = vld [vmem:[%s5 + $0x10] sm:$0xff]
      %v1788 = vld [vmem:[%s5 + $0x18] sm:$0xff]
      %v1789 = vld [vmem:[#allocation4 + $0x80] sm:$0xff]
      %s1790 = scalar_lea.vmem %s5, 32
      %v1791 = vld [vmem:[%s1790] sm:$0xff]
      %v1792 = vld [vmem:[%s1790 + $0x8] sm:$0xff]
      %v1793 = vld [vmem:[%s1790 + $0x10] sm:$0xff]
      %v1794 = vld [vmem:[%s1790 + $0x18] sm:$0xff]
      %v1796 = vsel %vm638, %v1770, 0
      %v1799 = vsel %vm638, %v1771, 0
      %v1802 = vsel %vm638, %v1772, 0
      %v1805 = vsel %vm638, %v1773, 0
      %v1808 = vsel %vm638, %v1774, 0
      %v1811 = vsel %vm638, %v1775, 0
      %v1814 = vsel %vm638, %v1776, 0
      %v1817 = vsel %vm638, %v1777, 0
      %v1820 = vsel %vm638, %v1778, 0
      %v1823 = vsel %vm638, %v1779, 0
      %v1826 = vsel %vm638, %v1780, 0
      %v1829 = vsel %vm638, %v1781, 0
      %v1832 = vsel %vm638, %v1782, 0
      %v1835 = vsel %vm638, %v1783, 0
      %v1838 = vsel %vm638, %v1784, 0
      %v1841 = vsel %vm638, %v1789, 0
      %1843 = vmatprep.subr.mxu0 0.0
      %1844 = vmatpush1.msra.mxu0 0.0
      %1845 = vmatprep.subr.mxu0 0.0
      %1846 = vmatpush1.msra.mxu0 0.0
      %1847 = vmatprep.subr.mxu0 0.0
      %1848 = vmatpush1.msra.mxu0 0.0
      %1849 = vmatprep.subr.mxu0 0.0
      %1850 = vmatpush1.msra.mxu0 0.0
      %1851 = vmatprep.subr.mxu0 0.0
      %1852 = vmatpush1.msra.mxu0 0.0
      %1853 = vmatprep.subr.mxu0 0.0
      %1854 = vmatpush1.msra.mxu0 0.0
      %1855 = vmatprep.subr.mxu0 0.0
      %1856 = vmatpush1.msra.mxu0 0.0
      %1857 = vmatprep.subr.mxu0 0.0
      %1858 = vmatpush1.msra.mxu0 0.0
      %1859 = vmatprep.subr.mxu0 0.0
      %1860 = vmatpush1.msra.mxu0 0.0
      %1861 = vmatprep.subr.mxu0 0.0
      %1862 = vmatpush1.msra.mxu0 0.0
      %1863 = vmatprep.subr.mxu0 0.0
      %1864 = vmatpush1.msra.mxu0 0.0
      %1865 = vmatprep.subr.mxu0 0.0
      %1866 = vmatpush1.msra.mxu0 0.0
      %1867 = vmatprep.subr.mxu0 0.0
      %1868 = vmatpush1.msra.mxu0 %v1794
      %1869 = vmatprep.subr.mxu0 0.0
      %1870 = vmatpush1.msra.mxu0 %v1793
      %1871 = vmatprep.subr.mxu0 0.0
      %1872 = vmatpush1.msra.mxu0 %v1792
      %1873 = vmatprep.subr.mxu0 0.0
      %1874 = vmatpush1.msra.mxu0 %v1791
      %1875 = vmatprep.subr.mxu0 0.0
      %1876 = vmatpush2.msra.mxu0 0.0
      %1877 = vmatprep.subr.mxu0 0.0
      %1878 = vmatpush2.msra.mxu0 0.0
      %1879 = vmatprep.subr.mxu0 0.0
      %1880 = vmatpush2.msra.mxu0 0.0
      %1881 = vmatprep.subr.mxu0 0.0
      %1882 = vmatpush2.msra.mxu0 0.0
      %1883 = vmatprep.subr.mxu0 0.0
      %1884 = vmatpush2.msra.mxu0 0.0
      %1885 = vmatprep.subr.mxu0 0.0
      %1886 = vmatpush2.msra.mxu0 0.0
      %1887 = vmatprep.subr.mxu0 0.0
      %1888 = vmatpush2.msra.mxu0 0.0
      %1889 = vmatprep.subr.mxu0 0.0
      %1890 = vmatpush2.msra.mxu0 0.0
      %1891 = vmatprep.subr.mxu0 0.0
      %1892 = vmatpush2.msra.mxu0 0.0
      %1893 = vmatprep.subr.mxu0 0.0
      %1894 = vmatpush2.msra.mxu0 0.0
      %1895 = vmatprep.subr.mxu0 0.0
      %1896 = vmatpush2.msra.mxu0 0.0
      %1897 = vmatprep.subr.mxu0 0.0
      %1898 = vmatpush2.msra.mxu0 0.0
      %1899 = vmatprep.subr.mxu0 0.0
      %1900 = vmatpush2.msra.mxu0 0.0
      %1901 = vmatprep.subr.mxu0 0.0
      %1902 = vmatpush2.msra.mxu0 0.0
      %1903 = vmatprep.subr.mxu0 0.0
      %1904 = vmatpush2.msra.mxu0 0.0
      %1905 = vmatprep.subr.mxu0 0.0
      %1906 = vmatpush2.msra.mxu0 0.0
      %1907 = vmatprep.mubr.f32.mxu0 0.0
      %1908 = vmatmul.mubr.f32.gmra.mxu0 %v1796
      %v1909 = vpop.f32.mrf.mxu0
      %v1910 = vadd.f32 0.0, %v1909
      %v1911 = vpop.f32.mrf.mxu0
      %1912 = vmatprep.mubr.f32.mxu0 0.0
      %1913 = vmatmul.mubr.f32.gmra.mxu0 %v1799
      %v1914 = vpop.f32.mrf.mxu0
      %v1915 = vadd.f32 0.0, %v1914
      %v1916 = vpop.f32.mrf.mxu0
      %1917 = vmatprep.mubr.f32.mxu0 0.0
      %1918 = vmatmul.mubr.f32.gmra.mxu0 %v1802
      %v1919 = vpop.f32.mrf.mxu0
      %v1920 = vadd.f32 0.0, %v1919
      %v1921 = vpop.f32.mrf.mxu0
      %1922 = vmatprep.mubr.f32.mxu0 0.0
      %1923 = vmatmul.mubr.f32.gmra.mxu0 %v1805
      %v1924 = vpop.f32.mrf.mxu0
      %v1925 = vadd.f32 0.0, %v1924
      %v1926 = vpop.f32.mrf.mxu0
      %1927 = vmatprep.mubr.f32.mxu0 0.0
      %1928 = vmatmul.mubr.f32.gmra.mxu0 %v1808
      %v1929 = vpop.f32.mrf.mxu0
      %v1930 = vadd.f32 0.0, %v1929
      %v1931 = vpop.f32.mrf.mxu0
      %1932 = vmatprep.mubr.f32.mxu0 0.0
      %1933 = vmatmul.mubr.f32.gmra.mxu0 %v1811
      %v1934 = vpop.f32.mrf.mxu0
      %v1935 = vadd.f32 0.0, %v1934
      %v1936 = vpop.f32.mrf.mxu0
      %1937 = vmatprep.mubr.f32.mxu0 0.0
      %1938 = vmatmul.mubr.f32.gmra.mxu0 %v1814
      %v1939 = vpop.f32.mrf.mxu0
      %v1940 = vadd.f32 0.0, %v1939
      %v1941 = vpop.f32.mrf.mxu0
      %1942 = vmatprep.mubr.f32.mxu0 0.0
      %1943 = vmatmul.mubr.f32.gmra.mxu0 %v1817
      %v1944 = vpop.f32.mrf.mxu0
      %v1945 = vadd.f32 0.0, %v1944
      %v1946 = vpop.f32.mrf.mxu0
      %1947 = vmatprep.mubr.f32.mxu0 0.0
      %1948 = vmatmul.mubr.f32.gmra.mxu0 %v1820
      %v1949 = vpop.f32.mrf.mxu0
      %v1950 = vadd.f32 0.0, %v1949
      %v1951 = vpop.f32.mrf.mxu0
      %1952 = vmatprep.mubr.f32.mxu0 0.0
      %1953 = vmatmul.mubr.f32.gmra.mxu0 %v1823
      %v1954 = vpop.f32.mrf.mxu0
      %v1955 = vadd.f32 0.0, %v1954
      %v1956 = vpop.f32.mrf.mxu0
      %1957 = vmatprep.mubr.f32.mxu0 0.0
      %1958 = vmatmul.mubr.f32.gmra.mxu0 %v1826
      %v1959 = vpop.f32.mrf.mxu0
      %v1960 = vadd.f32 0.0, %v1959
      %v1961 = vpop.f32.mrf.mxu0
      %1962 = vmatprep.mubr.f32.mxu0 0.0
      %1963 = vmatmul.mubr.f32.gmra.mxu0 %v1829
      %v1964 = vpop.f32.mrf.mxu0
      %v1965 = vadd.f32 0.0, %v1964
      %v1966 = vpop.f32.mrf.mxu0
      %1967 = vmatprep.mubr.f32.mxu0 0.0
      %1968 = vmatmul.mubr.f32.gmra.mxu0 %v1832
      %v1969 = vpop.f32.mrf.mxu0
      %v1970 = vadd.f32 0.0, %v1969
      %v1971 = vpop.f32.mrf.mxu0
      %1972 = vmatprep.mubr.f32.mxu0 0.0
      %1973 = vmatmul.mubr.f32.gmra.mxu0 %v1835
      %v1974 = vpop.f32.mrf.mxu0
      %v1975 = vadd.f32 0.0, %v1974
      %v1976 = vpop.f32.mrf.mxu0
      %1977 = vmatprep.mubr.f32.mxu0 0.0
      %1978 = vmatmul.mubr.f32.gmra.mxu0 %v1838
      %v1979 = vpop.f32.mrf.mxu0
      %v1980 = vadd.f32 0.0, %v1979
      %v1981 = vpop.f32.mrf.mxu0
      %1982 = vmatprep.mubr.f32.mxu0 0.0
      %1983 = vmatmul.mubr.f32.gmra.mxu0 %v1841
      %v1984 = vpop.f32.mrf.mxu0
      %v1985 = vadd.f32 0.0, %v1984
      %v1986 = vpop.f32.mrf.mxu0
      %1987 = vdwg.mxu0
      %v1989 = vsel %vm638, %v1769, 0
      %1991 = vmatprep.subr.mxu0 0.0
      %1992 = vmatpush1.msra.mxu0 0.0
      %1993 = vmatprep.subr.mxu0 0.0
      %1994 = vmatpush1.msra.mxu0 0.0
      %1995 = vmatprep.subr.mxu0 0.0
      %1996 = vmatpush1.msra.mxu0 0.0
      %1997 = vmatprep.subr.mxu0 0.0
      %1998 = vmatpush1.msra.mxu0 0.0
      %1999 = vmatprep.subr.mxu0 0.0
      %2000 = vmatpush1.msra.mxu0 0.0
      %2001 = vmatprep.subr.mxu0 0.0
      %2002 = vmatpush1.msra.mxu0 0.0
      %2003 = vmatprep.subr.mxu0 0.0
      %2004 = vmatpush1.msra.mxu0 0.0
      %2005 = vmatprep.subr.mxu0 0.0
      %2006 = vmatpush1.msra.mxu0 0.0
      %2007 = vmatprep.subr.mxu0 0.0
      %2008 = vmatpush1.msra.mxu0 0.0
      %2009 = vmatprep.subr.mxu0 0.0
      %2010 = vmatpush1.msra.mxu0 0.0
      %2011 = vmatprep.subr.mxu0 0.0
      %2012 = vmatpush1.msra.mxu0 0.0
      %2013 = vmatprep.subr.mxu0 0.0
      %2014 = vmatpush1.msra.mxu0 0.0
      %2015 = vmatprep.subr.mxu0 0.0
      %2016 = vmatpush1.msra.mxu0 %v1788
      %2017 = vmatprep.subr.mxu0 0.0
      %2018 = vmatpush1.msra.mxu0 %v1787
      %2019 = vmatprep.subr.mxu0 0.0
      %2020 = vmatpush1.msra.mxu0 %v1786
      %2021 = vmatprep.subr.mxu0 0.0
      %2022 = vmatpush1.msra.mxu0 %v1785
      %2023 = vmatprep.subr.mxu0 0.0
      %2024 = vmatpush2.msra.mxu0 0.0
      %2025 = vmatprep.subr.mxu0 0.0
      %2026 = vmatpush2.msra.mxu0 0.0
      %2027 = vmatprep.subr.mxu0 0.0
      %2028 = vmatpush2.msra.mxu0 0.0
      %2029 = vmatprep.subr.mxu0 0.0
      %2030 = vmatpush2.msra.mxu0 0.0
      %2031 = vmatprep.subr.mxu0 0.0
      %2032 = vmatpush2.msra.mxu0 0.0
      %2033 = vmatprep.subr.mxu0 0.0
      %2034 = vmatpush2.msra.mxu0 0.0
      %2035 = vmatprep.subr.mxu0 0.0
      %2036 = vmatpush2.msra.mxu0 0.0
      %2037 = vmatprep.subr.mxu0 0.0
      %2038 = vmatpush2.msra.mxu0 0.0
      %2039 = vmatprep.subr.mxu0 0.0
      %2040 = vmatpush2.msra.mxu0 0.0
      %2041 = vmatprep.subr.mxu0 0.0
      %2042 = vmatpush2.msra.mxu0 0.0
      %2043 = vmatprep.subr.mxu0 0.0
      %2044 = vmatpush2.msra.mxu0 0.0
      %2045 = vmatprep.subr.mxu0 0.0
      %2046 = vmatpush2.msra.mxu0 0.0
      %2047 = vmatprep.subr.mxu0 0.0
      %2048 = vmatpush2.msra.mxu0 0.0
      %2049 = vmatprep.subr.mxu0 0.0
      %2050 = vmatpush2.msra.mxu0 0.0
      %2051 = vmatprep.subr.mxu0 0.0
      %2052 = vmatpush2.msra.mxu0 0.0
      %2053 = vmatprep.subr.mxu0 0.0
      %2054 = vmatpush2.msra.mxu0 0.0
      %2055 = vmatprep.mubr.f32.mxu0 0.0
      %2056 = vmatmul.mubr.f32.gmra.mxu0 %v1989
      %v2057 = vpop.f32.mrf.mxu0
      %v2058 = vadd.f32 %v1910, %v2057
      %v2059 = vpop.f32.mrf.mxu0
      %2060 = vmatprep.mubr.f32.mxu0 0.0
      %2061 = vmatmul.mubr.f32.gmra.mxu0 %v1796
      %v2062 = vpop.f32.mrf.mxu0
      %v2063 = vadd.f32 %v1915, %v2062
      %v2064 = vpop.f32.mrf.mxu0
      %2065 = vmatprep.mubr.f32.mxu0 0.0
      %2066 = vmatmul.mubr.f32.gmra.mxu0 %v1799
      %v2067 = vpop.f32.mrf.mxu0
      %v2068 = vadd.f32 %v1920, %v2067
      %v2069 = vpop.f32.mrf.mxu0
      %2070 = vmatprep.mubr.f32.mxu0 0.0
      %2071 = vmatmul.mubr.f32.gmra.mxu0 %v1802
      %v2072 = vpop.f32.mrf.mxu0
      %v2073 = vadd.f32 %v1925, %v2072
      %v2074 = vpop.f32.mrf.mxu0
      %2075 = vmatprep.mubr.f32.mxu0 0.0
      %2076 = vmatmul.mubr.f32.gmra.mxu0 %v1805
      %v2077 = vpop.f32.mrf.mxu0
      %v2078 = vadd.f32 %v1930, %v2077
      %v2079 = vpop.f32.mrf.mxu0
      %2080 = vmatprep.mubr.f32.mxu0 0.0
      %2081 = vmatmul.mubr.f32.gmra.mxu0 %v1808
      %v2082 = vpop.f32.mrf.mxu0
      %v2083 = vadd.f32 %v1935, %v2082
      %v2084 = vpop.f32.mrf.mxu0
      %2085 = vmatprep.mubr.f32.mxu0 0.0
      %2086 = vmatmul.mubr.f32.gmra.mxu0 %v1811
      %v2087 = vpop.f32.mrf.mxu0
      %v2088 = vadd.f32 %v1940, %v2087
      %v2089 = vpop.f32.mrf.mxu0
      %2090 = vmatprep.mubr.f32.mxu0 0.0
      %2091 = vmatmul.mubr.f32.gmra.mxu0 %v1814
      %v2092 = vpop.f32.mrf.mxu0
      %v2093 = vadd.f32 %v1945, %v2092
      %v2094 = vpop.f32.mrf.mxu0
      %2095 = vmatprep.mubr.f32.mxu0 0.0
      %2096 = vmatmul.mubr.f32.gmra.mxu0 %v1817
      %v2097 = vpop.f32.mrf.mxu0
      %v2098 = vadd.f32 %v1950, %v2097
      %v2099 = vpop.f32.mrf.mxu0
      %2100 = vmatprep.mubr.f32.mxu0 0.0
      %2101 = vmatmul.mubr.f32.gmra.mxu0 %v1820
      %v2102 = vpop.f32.mrf.mxu0
      %v2103 = vadd.f32 %v1955, %v2102
      %v2104 = vpop.f32.mrf.mxu0
      %2105 = vmatprep.mubr.f32.mxu0 0.0
      %2106 = vmatmul.mubr.f32.gmra.mxu0 %v1823
      %v2107 = vpop.f32.mrf.mxu0
      %v2108 = vadd.f32 %v1960, %v2107
      %v2109 = vpop.f32.mrf.mxu0
      %2110 = vmatprep.mubr.f32.mxu0 0.0
      %2111 = vmatmul.mubr.f32.gmra.mxu0 %v1826
      %v2112 = vpop.f32.mrf.mxu0
      %v2113 = vadd.f32 %v1965, %v2112
      %v2114 = vpop.f32.mrf.mxu0
      %2115 = vmatprep.mubr.f32.mxu0 0.0
      %2116 = vmatmul.mubr.f32.gmra.mxu0 %v1829
      %v2117 = vpop.f32.mrf.mxu0
      %v2118 = vadd.f32 %v1970, %v2117
      %v2119 = vpop.f32.mrf.mxu0
      %2120 = vmatprep.mubr.f32.mxu0 0.0
      %2121 = vmatmul.mubr.f32.gmra.mxu0 %v1832
      %v2122 = vpop.f32.mrf.mxu0
      %v2123 = vadd.f32 %v1975, %v2122
      %v2124 = vpop.f32.mrf.mxu0
      %2125 = vmatprep.mubr.f32.mxu0 0.0
      %2126 = vmatmul.mubr.f32.gmra.mxu0 %v1835
      %v2127 = vpop.f32.mrf.mxu0
      %v2128 = vadd.f32 %v1980, %v2127
      %v2129 = vpop.f32.mrf.mxu0
      %2130 = vmatprep.mubr.f32.mxu0 0.0
      %2131 = vmatmul.mubr.f32.gmra.mxu0 %v1838
      %v2132 = vpop.f32.mrf.mxu0
      %v2133 = vadd.f32 %v1985, %v2132
      %v2134 = vpop.f32.mrf.mxu0
      %2135 = vdwg.mxu0
      %v2136 = vld [vmem:[#allocation4 + $0x10] sm:$0xff]
      %v2137 = vld [vmem:[#allocation4 + $0x18] sm:$0xff]
      %v2138 = vld [vmem:[#allocation4 + $0x20] sm:$0xff]
      %v2139 = vld [vmem:[#allocation4 + $0x28] sm:$0xff]
      %v2140 = vld [vmem:[#allocation4 + $0x30] sm:$0xff]
      %v2141 = vld [vmem:[#allocation4 + $0x38] sm:$0xff]
      %v2142 = vld [vmem:[#allocation4 + $0x40] sm:$0xff]
      %v2143 = vld [vmem:[#allocation4 + $0x48] sm:$0xff]
      %v2144 = vld [vmem:[#allocation4 + $0x50] sm:$0xff]
      %v2145 = vld [vmem:[#allocation4 + $0x58] sm:$0xff]
      %v2146 = vld [vmem:[#allocation4 + $0x60] sm:$0xff]
      %v2147 = vld [vmem:[#allocation4 + $0x68] sm:$0xff]
      %v2148 = vld [vmem:[#allocation4 + $0x70] sm:$0xff]
      %v2149 = vld [vmem:[#allocation4 + $0x78] sm:$0xff]
      %v2150 = vld [vmem:[#allocation4 + $0x80] sm:$0xff]
      %v2151 = vld [vmem:[#allocation4 + $0x88] sm:$0xff]
      %s2152 = scalar_lea.vmem %s5, 64
      %v2153 = vld [vmem:[%s2152] sm:$0xff]
      %v2154 = vld [vmem:[%s2152 + $0x8] sm:$0xff]
      %v2155 = vld [vmem:[%s2152 + $0x10] sm:$0xff]
      %v2156 = vld [vmem:[%s2152 + $0x18] sm:$0xff]
      %v2158 = vsel %vm638, %v2136, 0
      %v2161 = vsel %vm638, %v2137, 0
      %v2164 = vsel %vm638, %v2138, 0
      %v2167 = vsel %vm638, %v2139, 0
      %v2170 = vsel %vm638, %v2140, 0
      %v2173 = vsel %vm638, %v2141, 0
      %v2176 = vsel %vm638, %v2142, 0
      %v2179 = vsel %vm638, %v2143, 0
      %v2182 = vsel %vm638, %v2144, 0
      %v2185 = vsel %vm638, %v2145, 0
      %v2188 = vsel %vm638, %v2146, 0
      %v2191 = vsel %vm638, %v2147, 0
      %v2194 = vsel %vm638, %v2148, 0
      %v2197 = vsel %vm638, %v2149, 0
      %v2200 = vsel %vm638, %v2150, 0
      %v2203 = vsel %vm638, %v2151, 0
      %2205 = vmatprep.subr.mxu0 0.0
      %2206 = vmatpush1.msra.mxu0 0.0
      %2207 = vmatprep.subr.mxu0 0.0
      %2208 = vmatpush1.msra.mxu0 0.0
      %2209 = vmatprep.subr.mxu0 0.0
      %2210 = vmatpush1.msra.mxu0 0.0
      %2211 = vmatprep.subr.mxu0 0.0
      %2212 = vmatpush1.msra.mxu0 0.0
      %2213 = vmatprep.subr.mxu0 0.0
      %2214 = vmatpush1.msra.mxu0 0.0
      %2215 = vmatprep.subr.mxu0 0.0
      %2216 = vmatpush1.msra.mxu0 0.0
      %2217 = vmatprep.subr.mxu0 0.0
      %2218 = vmatpush1.msra.mxu0 0.0
      %2219 = vmatprep.subr.mxu0 0.0
      %2220 = vmatpush1.msra.mxu0 0.0
      %2221 = vmatprep.subr.mxu0 0.0
      %2222 = vmatpush1.msra.mxu0 0.0
      %2223 = vmatprep.subr.mxu0 0.0
      %2224 = vmatpush1.msra.mxu0 0.0
      %2225 = vmatprep.subr.mxu0 0.0
      %2226 = vmatpush1.msra.mxu0 0.0
      %2227 = vmatprep.subr.mxu0 0.0
      %2228 = vmatpush1.msra.mxu0 0.0
      %2229 = vmatprep.subr.mxu0 0.0
      %2230 = vmatpush1.msra.mxu0 %v2156
      %2231 = vmatprep.subr.mxu0 0.0
      %2232 = vmatpush1.msra.mxu0 %v2155
      %2233 = vmatprep.subr.mxu0 0.0
      %2234 = vmatpush1.msra.mxu0 %v2154
      %2235 = vmatprep.subr.mxu0 0.0
      %2236 = vmatpush1.msra.mxu0 %v2153
      %2237 = vmatprep.subr.mxu0 0.0
      %2238 = vmatpush2.msra.mxu0 0.0
      %2239 = vmatprep.subr.mxu0 0.0
      %2240 = vmatpush2.msra.mxu0 0.0
      %2241 = vmatprep.subr.mxu0 0.0
      %2242 = vmatpush2.msra.mxu0 0.0
      %2243 = vmatprep.subr.mxu0 0.0
      %2244 = vmatpush2.msra.mxu0 0.0
      %2245 = vmatprep.subr.mxu0 0.0
      %2246 = vmatpush2.msra.mxu0 0.0
      %2247 = vmatprep.subr.mxu0 0.0
      %2248 = vmatpush2.msra.mxu0 0.0
      %2249 = vmatprep.subr.mxu0 0.0
      %2250 = vmatpush2.msra.mxu0 0.0
      %2251 = vmatprep.subr.mxu0 0.0
      %2252 = vmatpush2.msra.mxu0 0.0
      %2253 = vmatprep.subr.mxu0 0.0
      %2254 = vmatpush2.msra.mxu0 0.0
      %2255 = vmatprep.subr.mxu0 0.0
      %2256 = vmatpush2.msra.mxu0 0.0
      %2257 = vmatprep.subr.mxu0 0.0
      %2258 = vmatpush2.msra.mxu0 0.0
      %2259 = vmatprep.subr.mxu0 0.0
      %2260 = vmatpush2.msra.mxu0 0.0
      %2261 = vmatprep.subr.mxu0 0.0
      %2262 = vmatpush2.msra.mxu0 0.0
      %2263 = vmatprep.subr.mxu0 0.0
      %2264 = vmatpush2.msra.mxu0 0.0
      %2265 = vmatprep.subr.mxu0 0.0
      %2266 = vmatpush2.msra.mxu0 0.0
      %2267 = vmatprep.subr.mxu0 0.0
      %2268 = vmatpush2.msra.mxu0 0.0
      %2269 = vmatprep.mubr.f32.mxu0 0.0
      %2270 = vmatmul.mubr.f32.gmra.mxu0 %v2158
      %v2271 = vpop.f32.mrf.mxu0
      %v2272 = vadd.f32 0.0, %v2271
      %v2273 = vpop.f32.mrf.mxu0
      %2274 = vmatprep.mubr.f32.mxu0 0.0
      %2275 = vmatmul.mubr.f32.gmra.mxu0 %v2161
      %v2276 = vpop.f32.mrf.mxu0
      %v2277 = vadd.f32 0.0, %v2276
      %v2278 = vpop.f32.mrf.mxu0
      %2279 = vmatprep.mubr.f32.mxu0 0.0
      %2280 = vmatmul.mubr.f32.gmra.mxu0 %v2164
      %v2281 = vpop.f32.mrf.mxu0
      %v2282 = vadd.f32 0.0, %v2281
      %v2283 = vpop.f32.mrf.mxu0
      %2284 = vmatprep.mubr.f32.mxu0 0.0
      %2285 = vmatmul.mubr.f32.gmra.mxu0 %v2167
      %v2286 = vpop.f32.mrf.mxu0
      %v2287 = vadd.f32 0.0, %v2286
      %v2288 = vpop.f32.mrf.mxu0
      %2289 = vmatprep.mubr.f32.mxu0 0.0
      %2290 = vmatmul.mubr.f32.gmra.mxu0 %v2170
      %v2291 = vpop.f32.mrf.mxu0
      %v2292 = vadd.f32 0.0, %v2291
      %v2293 = vpop.f32.mrf.mxu0
      %2294 = vmatprep.mubr.f32.mxu0 0.0
      %2295 = vmatmul.mubr.f32.gmra.mxu0 %v2173
      %v2296 = vpop.f32.mrf.mxu0
      %v2297 = vadd.f32 0.0, %v2296
      %v2298 = vpop.f32.mrf.mxu0
      %2299 = vmatprep.mubr.f32.mxu0 0.0
      %2300 = vmatmul.mubr.f32.gmra.mxu0 %v2176
      %v2301 = vpop.f32.mrf.mxu0
      %v2302 = vadd.f32 0.0, %v2301
      %v2303 = vpop.f32.mrf.mxu0
      %2304 = vmatprep.mubr.f32.mxu0 0.0
      %2305 = vmatmul.mubr.f32.gmra.mxu0 %v2179
      %v2306 = vpop.f32.mrf.mxu0
      %v2307 = vadd.f32 0.0, %v2306
      %v2308 = vpop.f32.mrf.mxu0
      %2309 = vmatprep.mubr.f32.mxu0 0.0
      %2310 = vmatmul.mubr.f32.gmra.mxu0 %v2182
      %v2311 = vpop.f32.mrf.mxu0
      %v2312 = vadd.f32 0.0, %v2311
      %v2313 = vpop.f32.mrf.mxu0
      %2314 = vmatprep.mubr.f32.mxu0 0.0
      %2315 = vmatmul.mubr.f32.gmra.mxu0 %v2185
      %v2316 = vpop.f32.mrf.mxu0
      %v2317 = vadd.f32 0.0, %v2316
      %v2318 = vpop.f32.mrf.mxu0
      %2319 = vmatprep.mubr.f32.mxu0 0.0
      %2320 = vmatmul.mubr.f32.gmra.mxu0 %v2188
      %v2321 = vpop.f32.mrf.mxu0
      %v2322 = vadd.f32 0.0, %v2321
      %v2323 = vpop.f32.mrf.mxu0
      %2324 = vmatprep.mubr.f32.mxu0 0.0
      %2325 = vmatmul.mubr.f32.gmra.mxu0 %v2191
      %v2326 = vpop.f32.mrf.mxu0
      %v2327 = vadd.f32 0.0, %v2326
      %v2328 = vpop.f32.mrf.mxu0
      %2329 = vmatprep.mubr.f32.mxu0 0.0
      %2330 = vmatmul.mubr.f32.gmra.mxu0 %v2194
      %v2331 = vpop.f32.mrf.mxu0
      %v2332 = vadd.f32 0.0, %v2331
      %v2333 = vpop.f32.mrf.mxu0
      %2334 = vmatprep.mubr.f32.mxu0 0.0
      %2335 = vmatmul.mubr.f32.gmra.mxu0 %v2197
      %v2336 = vpop.f32.mrf.mxu0
      %v2337 = vadd.f32 0.0, %v2336
      %v2338 = vpop.f32.mrf.mxu0
      %2339 = vmatprep.mubr.f32.mxu0 0.0
      %2340 = vmatmul.mubr.f32.gmra.mxu0 %v2200
      %v2341 = vpop.f32.mrf.mxu0
      %v2342 = vadd.f32 0.0, %v2341
      %v2343 = vpop.f32.mrf.mxu0
      %2344 = vmatprep.mubr.f32.mxu0 0.0
      %2345 = vmatmul.mubr.f32.gmra.mxu0 %v2203
      %v2346 = vpop.f32.mrf.mxu0
      %v2347 = vadd.f32 0.0, %v2346
      %v2348 = vpop.f32.mrf.mxu0
      %2349 = vdwg.mxu0
      %v2350 = vadd.f32 %v2058, %v2272
      %v2351 = vadd.f32 %v2063, %v2277
      %v2352 = vadd.f32 %v2068, %v2282
      %v2353 = vadd.f32 %v2073, %v2287
      %v2354 = vadd.f32 %v2078, %v2292
      %v2355 = vadd.f32 %v2083, %v2297
      %v2356 = vadd.f32 %v2088, %v2302
      %v2357 = vadd.f32 %v2093, %v2307
      %v2358 = vadd.f32 %v2098, %v2312
      %v2359 = vadd.f32 %v2103, %v2317
      %v2360 = vadd.f32 %v2108, %v2322
      %v2361 = vadd.f32 %v2113, %v2327
      %v2362 = vadd.f32 %v2118, %v2332
      %v2363 = vadd.f32 %v2123, %v2337
      %v2364 = vadd.f32 %v2128, %v2342
      %v2365 = vadd.f32 %v2133, %v2347
      %v2366 = vld [vmem:[%s6] sm:$0x1]
      %v2368 = vlaneseq
      %v2369 = vshrl.u32 %v2368, 7
      %v2370 = vsub.s32 0, %v2369
      %v2371 = vrot.slane %v2366, %v2370
      %v2373 = vadd.f32 %v2350, %v2371
      %v2374 = vadd.f32 %v2351, %v2371
      %v2375 = vadd.f32 %v2352, %v2371
      %v2376 = vadd.f32 %v2353, %v2371
      %v2377 = vadd.f32 %v2354, %v2371
      %v2378 = vadd.f32 %v2355, %v2371
      %v2379 = vadd.f32 %v2356, %v2371
      %v2380 = vadd.f32 %v2357, %v2371
      %v2381 = vadd.f32 %v2358, %v2371
      %v2382 = vadd.f32 %v2359, %v2371
      %v2383 = vadd.f32 %v2360, %v2371
      %v2384 = vadd.f32 %v2361, %v2371
      %v2385 = vadd.f32 %v2362, %v2371
      %v2386 = vadd.f32 %v2363, %v2371
      %v2387 = vadd.f32 %v2364, %v2371
      %v2388 = vadd.f32 %v2365, %v2371
      %v2389 = vxor.u32 %v2373, 2147483648
      %v2390 = vxor.u32 %v2374, 2147483648
      %v2391 = vxor.u32 %v2375, 2147483648
      %v2392 = vxor.u32 %v2376, 2147483648
      %v2393 = vxor.u32 %v2377, 2147483648
      %v2394 = vxor.u32 %v2378, 2147483648
      %v2395 = vxor.u32 %v2379, 2147483648
      %v2396 = vxor.u32 %v2380, 2147483648
      %v2397 = vxor.u32 %v2381, 2147483648
      %v2398 = vxor.u32 %v2382, 2147483648
      %v2399 = vxor.u32 %v2383, 2147483648
      %v2400 = vxor.u32 %v2384, 2147483648
      %v2401 = vxor.u32 %v2385, 2147483648
      %v2402 = vxor.u32 %v2386, 2147483648
      %v2403 = vxor.u32 %v2387, 2147483648
      %v2404 = vxor.u32 %v2388, 2147483648
      %v2405 = vmul.f32 %v2389, 1.442695
      %v2406 = vpow.pop %v2405
      %v2407 = vmul.f32 %v2390, 1.442695
      %v2408 = vpow.pop %v2407
      %v2409 = vmul.f32 %v2391, 1.442695
      %v2410 = vpow.pop %v2409
      %v2411 = vmul.f32 %v2392, 1.442695
      %v2412 = vpow.pop %v2411
      %v2413 = vmul.f32 %v2393, 1.442695
      %v2414 = vpow.pop %v2413
      %v2415 = vmul.f32 %v2394, 1.442695
      %v2416 = vpow.pop %v2415
      %v2417 = vmul.f32 %v2395, 1.442695
      %v2418 = vpow.pop %v2417
      %v2419 = vmul.f32 %v2396, 1.442695
      %v2420 = vpow.pop %v2419
      %v2421 = vmul.f32 %v2397, 1.442695
      %v2422 = vpow.pop %v2421
      %v2423 = vmul.f32 %v2398, 1.442695
      %v2424 = vpow.pop %v2423
      %v2425 = vmul.f32 %v2399, 1.442695
      %v2426 = vpow.pop %v2425
      %v2427 = vmul.f32 %v2400, 1.442695
      %v2428 = vpow.pop %v2427
      %v2429 = vmul.f32 %v2401, 1.442695
      %v2430 = vpow.pop %v2429
      %v2431 = vmul.f32 %v2402, 1.442695
      %v2432 = vpow.pop %v2431
      %v2433 = vmul.f32 %v2403, 1.442695
      %v2434 = vpow.pop %v2433
      %v2435 = vmul.f32 %v2404, 1.442695
      %v2436 = vpow.pop %v2435
      %v2437 = vadd.f32 %v2406, 1.0
      %v2438 = vadd.f32 %v2408, 1.0
      %v2439 = vadd.f32 %v2410, 1.0
      %v2440 = vadd.f32 %v2412, 1.0
      %v2441 = vadd.f32 %v2414, 1.0
      %v2442 = vadd.f32 %v2416, 1.0
      %v2443 = vadd.f32 %v2418, 1.0
      %v2444 = vadd.f32 %v2420, 1.0
      %v2445 = vadd.f32 %v2422, 1.0
      %v2446 = vadd.f32 %v2424, 1.0
      %v2447 = vadd.f32 %v2426, 1.0
      %v2448 = vadd.f32 %v2428, 1.0
      %v2449 = vadd.f32 %v2430, 1.0
      %v2450 = vadd.f32 %v2432, 1.0
      %v2451 = vadd.f32 %v2434, 1.0
      %v2452 = vadd.f32 %v2436, 1.0
      %v2453 = vrcp.pop %v2437
      %v2454 = vmul.f32 1.0, %v2453
      %v2455 = vrcp.pop %v2438
      %v2456 = vmul.f32 1.0, %v2455
      %v2457 = vrcp.pop %v2439
      %v2458 = vmul.f32 1.0, %v2457
      %v2459 = vrcp.pop %v2440
      %v2460 = vmul.f32 1.0, %v2459
      %v2461 = vrcp.pop %v2441
      %v2462 = vmul.f32 1.0, %v2461
      %v2463 = vrcp.pop %v2442
      %v2464 = vmul.f32 1.0, %v2463
      %v2465 = vrcp.pop %v2443
      %v2466 = vmul.f32 1.0, %v2465
      %v2467 = vrcp.pop %v2444
      %v2468 = vmul.f32 1.0, %v2467
      %v2469 = vrcp.pop %v2445
      %v2470 = vmul.f32 1.0, %v2469
      %v2471 = vrcp.pop %v2446
      %v2472 = vmul.f32 1.0, %v2471
      %v2473 = vrcp.pop %v2447
      %v2474 = vmul.f32 1.0, %v2473
      %v2475 = vrcp.pop %v2448
      %v2476 = vmul.f32 1.0, %v2475
      %v2477 = vrcp.pop %v2449
      %v2478 = vmul.f32 1.0, %v2477
      %v2479 = vrcp.pop %v2450
      %v2480 = vmul.f32 1.0, %v2479
      %v2481 = vrcp.pop %v2451
      %v2482 = vmul.f32 1.0, %v2481
      %v2483 = vrcp.pop %v2452
      %v2484 = vmul.f32 1.0, %v2483
      %2501 = vrot.lane.b32.xlu0 %v2454, 96
      %v2502 = vpop.permute.xlu0 %2501
      %2503 = vrot.lane.b32.xlu0 %v2456, 96
      %v2504 = vpop.permute.xlu0 %2503
      %2505 = vrot.lane.b32.xlu0 %v2458, 96
      %v2506 = vpop.permute.xlu0 %2505
      %2507 = vrot.lane.b32.xlu0 %v2460, 96
      %v2508 = vpop.permute.xlu0 %2507
      %2509 = vrot.lane.b32.xlu0 %v2462, 96
      %v2510 = vpop.permute.xlu0 %2509
      %2511 = vrot.lane.b32.xlu0 %v2464, 96
      %v2512 = vpop.permute.xlu0 %2511
      %2513 = vrot.lane.b32.xlu0 %v2466, 96
      %v2514 = vpop.permute.xlu0 %2513
      %2515 = vrot.lane.b32.xlu0 %v2468, 96
      %v2516 = vpop.permute.xlu0 %2515
      %2517 = vrot.lane.b32.xlu0 %v2470, 96
      %v2518 = vpop.permute.xlu0 %2517
      %2519 = vrot.lane.b32.xlu0 %v2472, 96
      %v2520 = vpop.permute.xlu0 %2519
      %2521 = vrot.lane.b32.xlu0 %v2474, 96
      %v2522 = vpop.permute.xlu0 %2521
      %2523 = vrot.lane.b32.xlu0 %v2476, 96
      %v2524 = vpop.permute.xlu0 %2523
      %2525 = vrot.lane.b32.xlu0 %v2478, 96
      %v2526 = vpop.permute.xlu0 %2525
      %2527 = vrot.lane.b32.xlu0 %v2480, 96
      %v2528 = vpop.permute.xlu0 %2527
      %2529 = vrot.lane.b32.xlu0 %v2482, 96
      %v2530 = vpop.permute.xlu0 %2529
      %2531 = vrot.lane.b32.xlu0 %v2484, 96
      %v2532 = vpop.permute.xlu0 %2531
      %v2549 = vmul.f32 %v2373, %v2502
      %v2550 = vmul.f32 %v2374, %v2504
      %v2551 = vmul.f32 %v2375, %v2506
      %v2552 = vmul.f32 %v2376, %v2508
      %v2553 = vmul.f32 %v2377, %v2510
      %v2554 = vmul.f32 %v2378, %v2512
      %v2555 = vmul.f32 %v2379, %v2514
      %v2556 = vmul.f32 %v2380, %v2516
      %v2557 = vmul.f32 %v2381, %v2518
      %v2558 = vmul.f32 %v2382, %v2520
      %v2559 = vmul.f32 %v2383, %v2522
      %v2560 = vmul.f32 %v2384, %v2524
      %v2561 = vmul.f32 %v2385, %v2526
      %v2562 = vmul.f32 %v2386, %v2528
      %v2563 = vmul.f32 %v2387, %v2530
      %v2564 = vmul.f32 %v2388, %v2532
      %v2565 = vld [vmem:[%s7] sm:$0x1]
      %v2567 = vlaneseq
      %v2568 = vshrl.u32 %v2567, 7
      %v2569 = vsub.s32 0, %v2568
      %v2570 = vrot.slane %v2565, %v2569
      %v2572 = vmul.f32 %v2549, %v2570
      %v2573 = vmul.f32 %v2550, %v2570
      %v2574 = vmul.f32 %v2551, %v2570
      %v2575 = vmul.f32 %v2552, %v2570
      %v2576 = vmul.f32 %v2553, %v2570
      %v2577 = vmul.f32 %v2554, %v2570
      %v2578 = vmul.f32 %v2555, %v2570
      %v2579 = vmul.f32 %v2556, %v2570
      %v2580 = vmul.f32 %v2557, %v2570
      %v2581 = vmul.f32 %v2558, %v2570
      %v2582 = vmul.f32 %v2559, %v2570
      %v2583 = vmul.f32 %v2560, %v2570
      %v2584 = vmul.f32 %v2561, %v2570
      %v2585 = vmul.f32 %v2562, %v2570
      %v2586 = vmul.f32 %v2563, %v2570
      %v2587 = vmul.f32 %v2564, %v2570
      %v2588 = vld [vmem:[%s8] sm:$0x1]
      %v2590 = vlaneseq
      %v2591 = vshrl.u32 %v2590, 7
      %v2592 = vsub.s32 0, %v2591
      %v2593 = vrot.slane %v2588, %v2592
      %v2595 = vadd.f32 %v2572, %v2593
      %v2596 = vadd.f32 %v2573, %v2593
      %v2597 = vadd.f32 %v2574, %v2593
      %v2598 = vadd.f32 %v2575, %v2593
      %v2599 = vadd.f32 %v2576, %v2593
      %v2600 = vadd.f32 %v2577, %v2593
      %v2601 = vadd.f32 %v2578, %v2593
      %v2602 = vadd.f32 %v2579, %v2593
      %v2603 = vadd.f32 %v2580, %v2593
      %v2604 = vadd.f32 %v2581, %v2593
      %v2605 = vadd.f32 %v2582, %v2593
      %v2606 = vadd.f32 %v2583, %v2593
      %v2607 = vadd.f32 %v2584, %v2593
      %v2608 = vadd.f32 %v2585, %v2593
      %v2609 = vadd.f32 %v2586, %v2593
      %v2610 = vadd.f32 %v2587, %v2593
      %v2611 = vmul.f32 %v2595, %v550
      %v2612 = vmul.f32 %v2596, %v555
      %v2613 = vmul.f32 %v2597, %v560
      %v2614 = vmul.f32 %v2598, %v565
      %v2615 = vmul.f32 %v2599, %v570
      %v2616 = vmul.f32 %v2600, %v575
      %v2617 = vmul.f32 %v2601, %v580
      %v2618 = vmul.f32 %v2602, %v585
      %v2619 = vmul.f32 %v2603, %v590
      %v2620 = vmul.f32 %v2604, %v595
      %v2621 = vmul.f32 %v2605, %v600
      %v2622 = vmul.f32 %v2606, %v605
      %v2623 = vmul.f32 %v2607, %v610
      %v2624 = vmul.f32 %v2608, %v615
      %v2625 = vmul.f32 %v2609, %v620
      %v2626 = vmul.f32 %v2610, %v625
      %2627 = vst.msk [vmem:[#allocation4 + $0x8] sm:$0xff] %vm638, %v2611
      %2628 = vst.msk [vmem:[#allocation4 + $0x10] sm:$0xff] %vm638, %v2612
      %2629 = vst.msk [vmem:[#allocation4 + $0x18] sm:$0xff] %vm638, %v2613
      %2630 = vst.msk [vmem:[#allocation4 + $0x20] sm:$0xff] %vm638, %v2614
      %2631 = vst.msk [vmem:[#allocation4 + $0x28] sm:$0xff] %vm638, %v2615
      %2632 = vst.msk [vmem:[#allocation4 + $0x30] sm:$0xff] %vm638, %v2616
      %2633 = vst.msk [vmem:[#allocation4 + $0x38] sm:$0xff] %vm638, %v2617
      %2634 = vst.msk [vmem:[#allocation4 + $0x40] sm:$0xff] %vm638, %v2618
      %2635 = vst.msk [vmem:[#allocation4 + $0x48] sm:$0xff] %vm638, %v2619
      %2636 = vst.msk [vmem:[#allocation4 + $0x50] sm:$0xff] %vm638, %v2620
      %2637 = vst.msk [vmem:[#allocation4 + $0x58] sm:$0xff] %vm638, %v2621
      %2638 = vst.msk [vmem:[#allocation4 + $0x60] sm:$0xff] %vm638, %v2622
      %2639 = vst.msk [vmem:[#allocation4 + $0x68] sm:$0xff] %vm638, %v2623
      %2640 = vst.msk [vmem:[#allocation4 + $0x70] sm:$0xff] %vm638, %v2624
      %2641 = vst.msk [vmem:[#allocation4 + $0x78] sm:$0xff] %vm638, %v2625
      %2642 = vst.msk [vmem:[#allocation4 + $0x80] sm:$0xff] %vm638, %v2626
      %v2643 = vld [vmem:[#allocation4] sm:$0xff]
      %v2644 = vld [vmem:[#allocation4 + $0x8] sm:$0xff]
      %v2645 = vld [vmem:[#allocation4 + $0x10] sm:$0xff]
      %v2646 = vld [vmem:[#allocation4 + $0x18] sm:$0xff]
      %v2647 = vld [vmem:[#allocation4 + $0x20] sm:$0xff]
      %v2648 = vld [vmem:[#allocation4 + $0x28] sm:$0xff]
      %v2649 = vld [vmem:[#allocation4 + $0x30] sm:$0xff]
      %v2650 = vld [vmem:[#allocation4 + $0x38] sm:$0xff]
      %v2651 = vld [vmem:[#allocation4 + $0x40] sm:$0xff]
      %v2652 = vld [vmem:[#allocation4 + $0x48] sm:$0xff]
      %v2653 = vld [vmem:[#allocation4 + $0x50] sm:$0xff]
      %v2654 = vld [vmem:[#allocation4 + $0x58] sm:$0xff]
      %v2655 = vld [vmem:[#allocation4 + $0x60] sm:$0xff]
      %v2656 = vld [vmem:[#allocation4 + $0x68] sm:$0xff]
      %v2657 = vld [vmem:[#allocation4 + $0x70] sm:$0xff]
      %v2658 = vld [vmem:[#allocation4 + $0x78] sm:$0xff]
      %v2659 = vld [vmem:[%s9] sm:$0xff]
      %v2660 = vld [vmem:[%s9 + $0x8] sm:$0xff]
      %v2661 = vld [vmem:[%s9 + $0x10] sm:$0xff]
      %v2662 = vld [vmem:[%s9 + $0x18] sm:$0xff]
      %v2663 = vld [vmem:[#allocation4 + $0x80] sm:$0xff]
      %s2664 = scalar_lea.vmem %s9, 32
      %v2665 = vld [vmem:[%s2664] sm:$0xff]
      %v2666 = vld [vmem:[%s2664 + $0x8] sm:$0xff]
      %v2667 = vld [vmem:[%s2664 + $0x10] sm:$0xff]
      %v2668 = vld [vmem:[%s2664 + $0x18] sm:$0xff]
      %v2670 = vsel %vm638, %v2644, 0
      %v2673 = vsel %vm638, %v2645, 0
      %v2676 = vsel %vm638, %v2646, 0
      %v2679 = vsel %vm638, %v2647, 0
      %v2682 = vsel %vm638, %v2648, 0
      %v2685 = vsel %vm638, %v2649, 0
      %v2688 = vsel %vm638, %v2650, 0
      %v2691 = vsel %vm638, %v2651, 0
      %v2694 = vsel %vm638, %v2652, 0
      %v2697 = vsel %vm638, %v2653, 0
      %v2700 = vsel %vm638, %v2654, 0
      %v2703 = vsel %vm638, %v2655, 0
      %v2706 = vsel %vm638, %v2656, 0
      %v2709 = vsel %vm638, %v2657, 0
      %v2712 = vsel %vm638, %v2658, 0
      %v2715 = vsel %vm638, %v2663, 0
      %2717 = vmatprep.subr.mxu0 0.0
      %2718 = vmatpush1.msra.mxu0 0.0
      %2719 = vmatprep.subr.mxu0 0.0
      %2720 = vmatpush1.msra.mxu0 0.0
      %2721 = vmatprep.subr.mxu0 0.0
      %2722 = vmatpush1.msra.mxu0 0.0
      %2723 = vmatprep.subr.mxu0 0.0
      %2724 = vmatpush1.msra.mxu0 0.0
      %2725 = vmatprep.subr.mxu0 0.0
      %2726 = vmatpush1.msra.mxu0 0.0
      %2727 = vmatprep.subr.mxu0 0.0
      %2728 = vmatpush1.msra.mxu0 0.0
      %2729 = vmatprep.subr.mxu0 0.0
      %2730 = vmatpush1.msra.mxu0 0.0
      %2731 = vmatprep.subr.mxu0 0.0
      %2732 = vmatpush1.msra.mxu0 0.0
      %2733 = vmatprep.subr.mxu0 0.0
      %2734 = vmatpush1.msra.mxu0 0.0
      %2735 = vmatprep.subr.mxu0 0.0
      %2736 = vmatpush1.msra.mxu0 0.0
      %2737 = vmatprep.subr.mxu0 0.0
      %2738 = vmatpush1.msra.mxu0 0.0
      %2739 = vmatprep.subr.mxu0 0.0
      %2740 = vmatpush1.msra.mxu0 0.0
      %2741 = vmatprep.subr.mxu0 0.0
      %2742 = vmatpush1.msra.mxu0 %v2668
      %2743 = vmatprep.subr.mxu0 0.0
      %2744 = vmatpush1.msra.mxu0 %v2667
      %2745 = vmatprep.subr.mxu0 0.0
      %2746 = vmatpush1.msra.mxu0 %v2666
      %2747 = vmatprep.subr.mxu0 0.0
      %2748 = vmatpush1.msra.mxu0 %v2665
      %2749 = vmatprep.subr.mxu0 0.0
      %2750 = vmatpush2.msra.mxu0 0.0
      %2751 = vmatprep.subr.mxu0 0.0
      %2752 = vmatpush2.msra.mxu0 0.0
      %2753 = vmatprep.subr.mxu0 0.0
      %2754 = vmatpush2.msra.mxu0 0.0
      %2755 = vmatprep.subr.mxu0 0.0
      %2756 = vmatpush2.msra.mxu0 0.0
      %2757 = vmatprep.subr.mxu0 0.0
      %2758 = vmatpush2.msra.mxu0 0.0
      %2759 = vmatprep.subr.mxu0 0.0
      %2760 = vmatpush2.msra.mxu0 0.0
      %2761 = vmatprep.subr.mxu0 0.0
      %2762 = vmatpush2.msra.mxu0 0.0
      %2763 = vmatprep.subr.mxu0 0.0
      %2764 = vmatpush2.msra.mxu0 0.0
      %2765 = vmatprep.subr.mxu0 0.0
      %2766 = vmatpush2.msra.mxu0 0.0
      %2767 = vmatprep.subr.mxu0 0.0
      %2768 = vmatpush2.msra.mxu0 0.0
      %2769 = vmatprep.subr.mxu0 0.0
      %2770 = vmatpush2.msra.mxu0 0.0
      %2771 = vmatprep.subr.mxu0 0.0
      %2772 = vmatpush2.msra.mxu0 0.0
      %2773 = vmatprep.subr.mxu0 0.0
      %2774 = vmatpush2.msra.mxu0 0.0
      %2775 = vmatprep.subr.mxu0 0.0
      %2776 = vmatpush2.msra.mxu0 0.0
      %2777 = vmatprep.subr.mxu0 0.0
      %2778 = vmatpush2.msra.mxu0 0.0
      %2779 = vmatprep.subr.mxu0 0.0
      %2780 = vmatpush2.msra.mxu0 0.0
      %2781 = vmatprep.mubr.f32.mxu0 0.0
      %2782 = vmatmul.mubr.f32.gmra.mxu0 %v2670
      %v2783 = vpop.f32.mrf.mxu0
      %v2784 = vadd.f32 0.0, %v2783
      %v2785 = vpop.f32.mrf.mxu0
      %2786 = vmatprep.mubr.f32.mxu0 0.0
      %2787 = vmatmul.mubr.f32.gmra.mxu0 %v2673
      %v2788 = vpop.f32.mrf.mxu0
      %v2789 = vadd.f32 0.0, %v2788
      %v2790 = vpop.f32.mrf.mxu0
      %2791 = vmatprep.mubr.f32.mxu0 0.0
      %2792 = vmatmul.mubr.f32.gmra.mxu0 %v2676
      %v2793 = vpop.f32.mrf.mxu0
      %v2794 = vadd.f32 0.0, %v2793
      %v2795 = vpop.f32.mrf.mxu0
      %2796 = vmatprep.mubr.f32.mxu0 0.0
      %2797 = vmatmul.mubr.f32.gmra.mxu0 %v2679
      %v2798 = vpop.f32.mrf.mxu0
      %v2799 = vadd.f32 0.0, %v2798
      %v2800 = vpop.f32.mrf.mxu0
      %2801 = vmatprep.mubr.f32.mxu0 0.0
      %2802 = vmatmul.mubr.f32.gmra.mxu0 %v2682
      %v2803 = vpop.f32.mrf.mxu0
      %v2804 = vadd.f32 0.0, %v2803
      %v2805 = vpop.f32.mrf.mxu0
      %2806 = vmatprep.mubr.f32.mxu0 0.0
      %2807 = vmatmul.mubr.f32.gmra.mxu0 %v2685
      %v2808 = vpop.f32.mrf.mxu0
      %v2809 = vadd.f32 0.0, %v2808
      %v2810 = vpop.f32.mrf.mxu0
      %2811 = vmatprep.mubr.f32.mxu0 0.0
      %2812 = vmatmul.mubr.f32.gmra.mxu0 %v2688
      %v2813 = vpop.f32.mrf.mxu0
      %v2814 = vadd.f32 0.0, %v2813
      %v2815 = vpop.f32.mrf.mxu0
      %2816 = vmatprep.mubr.f32.mxu0 0.0
      %2817 = vmatmul.mubr.f32.gmra.mxu0 %v2691
      %v2818 = vpop.f32.mrf.mxu0
      %v2819 = vadd.f32 0.0, %v2818
      %v2820 = vpop.f32.mrf.mxu0
      %2821 = vmatprep.mubr.f32.mxu0 0.0
      %2822 = vmatmul.mubr.f32.gmra.mxu0 %v2694
      %v2823 = vpop.f32.mrf.mxu0
      %v2824 = vadd.f32 0.0, %v2823
      %v2825 = vpop.f32.mrf.mxu0
      %2826 = vmatprep.mubr.f32.mxu0 0.0
      %2827 = vmatmul.mubr.f32.gmra.mxu0 %v2697
      %v2828 = vpop.f32.mrf.mxu0
      %v2829 = vadd.f32 0.0, %v2828
      %v2830 = vpop.f32.mrf.mxu0
      %2831 = vmatprep.mubr.f32.mxu0 0.0
      %2832 = vmatmul.mubr.f32.gmra.mxu0 %v2700
      %v2833 = vpop.f32.mrf.mxu0
      %v2834 = vadd.f32 0.0, %v2833
      %v2835 = vpop.f32.mrf.mxu0
      %2836 = vmatprep.mubr.f32.mxu0 0.0
      %2837 = vmatmul.mubr.f32.gmra.mxu0 %v2703
      %v2838 = vpop.f32.mrf.mxu0
      %v2839 = vadd.f32 0.0, %v2838
      %v2840 = vpop.f32.mrf.mxu0
      %2841 = vmatprep.mubr.f32.mxu0 0.0
      %2842 = vmatmul.mubr.f32.gmra.mxu0 %v2706
      %v2843 = vpop.f32.mrf.mxu0
      %v2844 = vadd.f32 0.0, %v2843
      %v2845 = vpop.f32.mrf.mxu0
      %2846 = vmatprep.mubr.f32.mxu0 0.0
      %2847 = vmatmul.mubr.f32.gmra.mxu0 %v2709
      %v2848 = vpop.f32.mrf.mxu0
      %v2849 = vadd.f32 0.0, %v2848
      %v2850 = vpop.f32.mrf.mxu0
      %2851 = vmatprep.mubr.f32.mxu0 0.0
      %2852 = vmatmul.mubr.f32.gmra.mxu0 %v2712
      %v2853 = vpop.f32.mrf.mxu0
      %v2854 = vadd.f32 0.0, %v2853
      %v2855 = vpop.f32.mrf.mxu0
      %2856 = vmatprep.mubr.f32.mxu0 0.0
      %2857 = vmatmul.mubr.f32.gmra.mxu0 %v2715
      %v2858 = vpop.f32.mrf.mxu0
      %v2859 = vadd.f32 0.0, %v2858
      %v2860 = vpop.f32.mrf.mxu0
      %2861 = vdwg.mxu0
      %v2863 = vsel %vm638, %v2643, 0
      %2865 = vmatprep.subr.mxu0 0.0
      %2866 = vmatpush1.msra.mxu0 0.0
      %2867 = vmatprep.subr.mxu0 0.0
      %2868 = vmatpush1.msra.mxu0 0.0
      %2869 = vmatprep.subr.mxu0 0.0
      %2870 = vmatpush1.msra.mxu0 0.0
      %2871 = vmatprep.subr.mxu0 0.0
      %2872 = vmatpush1.msra.mxu0 0.0
      %2873 = vmatprep.subr.mxu0 0.0
      %2874 = vmatpush1.msra.mxu0 0.0
      %2875 = vmatprep.subr.mxu0 0.0
      %2876 = vmatpush1.msra.mxu0 0.0
      %2877 = vmatprep.subr.mxu0 0.0
      %2878 = vmatpush1.msra.mxu0 0.0
      %2879 = vmatprep.subr.mxu0 0.0
      %2880 = vmatpush1.msra.mxu0 0.0
      %2881 = vmatprep.subr.mxu0 0.0
      %2882 = vmatpush1.msra.mxu0 0.0
      %2883 = vmatprep.subr.mxu0 0.0
      %2884 = vmatpush1.msra.mxu0 0.0
      %2885 = vmatprep.subr.mxu0 0.0
      %2886 = vmatpush1.msra.mxu0 0.0
      %2887 = vmatprep.subr.mxu0 0.0
      %2888 = vmatpush1.msra.mxu0 0.0
      %2889 = vmatprep.subr.mxu0 0.0
      %2890 = vmatpush1.msra.mxu0 %v2662
      %2891 = vmatprep.subr.mxu0 0.0
      %2892 = vmatpush1.msra.mxu0 %v2661
      %2893 = vmatprep.subr.mxu0 0.0
      %2894 = vmatpush1.msra.mxu0 %v2660
      %2895 = vmatprep.subr.mxu0 0.0
      %2896 = vmatpush1.msra.mxu0 %v2659
      %2897 = vmatprep.subr.mxu0 0.0
      %2898 = vmatpush2.msra.mxu0 0.0
      %2899 = vmatprep.subr.mxu0 0.0
      %2900 = vmatpush2.msra.mxu0 0.0
      %2901 = vmatprep.subr.mxu0 0.0
      %2902 = vmatpush2.msra.mxu0 0.0
      %2903 = vmatprep.subr.mxu0 0.0
      %2904 = vmatpush2.msra.mxu0 0.0
      %2905 = vmatprep.subr.mxu0 0.0
      %2906 = vmatpush2.msra.mxu0 0.0
      %2907 = vmatprep.subr.mxu0 0.0
      %2908 = vmatpush2.msra.mxu0 0.0
      %2909 = vmatprep.subr.mxu0 0.0
      %2910 = vmatpush2.msra.mxu0 0.0
      %2911 = vmatprep.subr.mxu0 0.0
      %2912 = vmatpush2.msra.mxu0 0.0
      %2913 = vmatprep.subr.mxu0 0.0
      %2914 = vmatpush2.msra.mxu0 0.0
      %2915 = vmatprep.subr.mxu0 0.0
      %2916 = vmatpush2.msra.mxu0 0.0
      %2917 = vmatprep.subr.mxu0 0.0
      %2918 = vmatpush2.msra.mxu0 0.0
      %2919 = vmatprep.subr.mxu0 0.0
      %2920 = vmatpush2.msra.mxu0 0.0
      %2921 = vmatprep.subr.mxu0 0.0
      %2922 = vmatpush2.msra.mxu0 0.0
      %2923 = vmatprep.subr.mxu0 0.0
      %2924 = vmatpush2.msra.mxu0 0.0
      %2925 = vmatprep.subr.mxu0 0.0
      %2926 = vmatpush2.msra.mxu0 0.0
      %2927 = vmatprep.subr.mxu0 0.0
      %2928 = vmatpush2.msra.mxu0 0.0
      %2929 = vmatprep.mubr.f32.mxu0 0.0
      %2930 = vmatmul.mubr.f32.gmra.mxu0 %v2863
      %v2931 = vpop.f32.mrf.mxu0
      %v2932 = vadd.f32 %v2784, %v2931
      %v2933 = vpop.f32.mrf.mxu0
      %2934 = vmatprep.mubr.f32.mxu0 0.0
      %2935 = vmatmul.mubr.f32.gmra.mxu0 %v2670
      %v2936 = vpop.f32.mrf.mxu0
      %v2937 = vadd.f32 %v2789, %v2936
      %v2938 = vpop.f32.mrf.mxu0
      %2939 = vmatprep.mubr.f32.mxu0 0.0
      %2940 = vmatmul.mubr.f32.gmra.mxu0 %v2673
      %v2941 = vpop.f32.mrf.mxu0
      %v2942 = vadd.f32 %v2794, %v2941
      %v2943 = vpop.f32.mrf.mxu0
      %2944 = vmatprep.mubr.f32.mxu0 0.0
      %2945 = vmatmul.mubr.f32.gmra.mxu0 %v2676
      %v2946 = vpop.f32.mrf.mxu0
      %v2947 = vadd.f32 %v2799, %v2946
      %v2948 = vpop.f32.mrf.mxu0
      %2949 = vmatprep.mubr.f32.mxu0 0.0
      %2950 = vmatmul.mubr.f32.gmra.mxu0 %v2679
      %v2951 = vpop.f32.mrf.mxu0
      %v2952 = vadd.f32 %v2804, %v2951
      %v2953 = vpop.f32.mrf.mxu0
      %2954 = vmatprep.mubr.f32.mxu0 0.0
      %2955 = vmatmul.mubr.f32.gmra.mxu0 %v2682
      %v2956 = vpop.f32.mrf.mxu0
      %v2957 = vadd.f32 %v2809, %v2956
      %v2958 = vpop.f32.mrf.mxu0
      %2959 = vmatprep.mubr.f32.mxu0 0.0
      %2960 = vmatmul.mubr.f32.gmra.mxu0 %v2685
      %v2961 = vpop.f32.mrf.mxu0
      %v2962 = vadd.f32 %v2814, %v2961
      %v2963 = vpop.f32.mrf.mxu0
      %2964 = vmatprep.mubr.f32.mxu0 0.0
      %2965 = vmatmul.mubr.f32.gmra.mxu0 %v2688
      %v2966 = vpop.f32.mrf.mxu0
      %v2967 = vadd.f32 %v2819, %v2966
      %v2968 = vpop.f32.mrf.mxu0
      %2969 = vmatprep.mubr.f32.mxu0 0.0
      %2970 = vmatmul.mubr.f32.gmra.mxu0 %v2691
      %v2971 = vpop.f32.mrf.mxu0
      %v2972 = vadd.f32 %v2824, %v2971
      %v2973 = vpop.f32.mrf.mxu0
      %2974 = vmatprep.mubr.f32.mxu0 0.0
      %2975 = vmatmul.mubr.f32.gmra.mxu0 %v2694
      %v2976 = vpop.f32.mrf.mxu0
      %v2977 = vadd.f32 %v2829, %v2976
      %v2978 = vpop.f32.mrf.mxu0
      %2979 = vmatprep.mubr.f32.mxu0 0.0
      %2980 = vmatmul.mubr.f32.gmra.mxu0 %v2697
      %v2981 = vpop.f32.mrf.mxu0
      %v2982 = vadd.f32 %v2834, %v2981
      %v2983 = vpop.f32.mrf.mxu0
      %2984 = vmatprep.mubr.f32.mxu0 0.0
      %2985 = vmatmul.mubr.f32.gmra.mxu0 %v2700
      %v2986 = vpop.f32.mrf.mxu0
      %v2987 = vadd.f32 %v2839, %v2986
      %v2988 = vpop.f32.mrf.mxu0
      %2989 = vmatprep.mubr.f32.mxu0 0.0
      %2990 = vmatmul.mubr.f32.gmra.mxu0 %v2703
      %v2991 = vpop.f32.mrf.mxu0
      %v2992 = vadd.f32 %v2844, %v2991
      %v2993 = vpop.f32.mrf.mxu0
      %2994 = vmatprep.mubr.f32.mxu0 0.0
      %2995 = vmatmul.mubr.f32.gmra.mxu0 %v2706
      %v2996 = vpop.f32.mrf.mxu0
      %v2997 = vadd.f32 %v2849, %v2996
      %v2998 = vpop.f32.mrf.mxu0
      %2999 = vmatprep.mubr.f32.mxu0 0.0
      %3000 = vmatmul.mubr.f32.gmra.mxu0 %v2709
      %v3001 = vpop.f32.mrf.mxu0
      %v3002 = vadd.f32 %v2854, %v3001
      %v3003 = vpop.f32.mrf.mxu0
      %3004 = vmatprep.mubr.f32.mxu0 0.0
      %3005 = vmatmul.mubr.f32.gmra.mxu0 %v2712
      %v3006 = vpop.f32.mrf.mxu0
      %v3007 = vadd.f32 %v2859, %v3006
      %v3008 = vpop.f32.mrf.mxu0
      %3009 = vdwg.mxu0
      %v3010 = vld [vmem:[#allocation4 + $0x10] sm:$0xff]
      %v3011 = vld [vmem:[#allocation4 + $0x18] sm:$0xff]
      %v3012 = vld [vmem:[#allocation4 + $0x20] sm:$0xff]
      %v3013 = vld [vmem:[#allocation4 + $0x28] sm:$0xff]
      %v3014 = vld [vmem:[#allocation4 + $0x30] sm:$0xff]
      %v3015 = vld [vmem:[#allocation4 + $0x38] sm:$0xff]
      %v3016 = vld [vmem:[#allocation4 + $0x40] sm:$0xff]
      %v3017 = vld [vmem:[#allocation4 + $0x48] sm:$0xff]
      %v3018 = vld [vmem:[#allocation4 + $0x50] sm:$0xff]
      %v3019 = vld [vmem:[#allocation4 + $0x58] sm:$0xff]
      %v3020 = vld [vmem:[#allocation4 + $0x60] sm:$0xff]
      %v3021 = vld [vmem:[#allocation4 + $0x68] sm:$0xff]
      %v3022 = vld [vmem:[#allocation4 + $0x70] sm:$0xff]
      %v3023 = vld [vmem:[#allocation4 + $0x78] sm:$0xff]
      %v3024 = vld [vmem:[#allocation4 + $0x80] sm:$0xff]
      %v3025 = vld [vmem:[#allocation4 + $0x88] sm:$0xff]
      %s3026 = scalar_lea.vmem %s9, 64
      %v3027 = vld [vmem:[%s3026] sm:$0xff]
      %v3028 = vld [vmem:[%s3026 + $0x8] sm:$0xff]
      %v3029 = vld [vmem:[%s3026 + $0x10] sm:$0xff]
      %v3030 = vld [vmem:[%s3026 + $0x18] sm:$0xff]
      %v3032 = vsel %vm638, %v3010, 0
      %v3035 = vsel %vm638, %v3011, 0
      %v3038 = vsel %vm638, %v3012, 0
      %v3041 = vsel %vm638, %v3013, 0
      %v3044 = vsel %vm638, %v3014, 0
      %v3047 = vsel %vm638, %v3015, 0
      %v3050 = vsel %vm638, %v3016, 0
      %v3053 = vsel %vm638, %v3017, 0
      %v3056 = vsel %vm638, %v3018, 0
      %v3059 = vsel %vm638, %v3019, 0
      %v3062 = vsel %vm638, %v3020, 0
      %v3065 = vsel %vm638, %v3021, 0
      %v3068 = vsel %vm638, %v3022, 0
      %v3071 = vsel %vm638, %v3023, 0
      %v3074 = vsel %vm638, %v3024, 0
      %v3077 = vsel %vm638, %v3025, 0
      %3079 = vmatprep.subr.mxu0 0.0
      %3080 = vmatpush1.msra.mxu0 0.0
      %3081 = vmatprep.subr.mxu0 0.0
      %3082 = vmatpush1.msra.mxu0 0.0
      %3083 = vmatprep.subr.mxu0 0.0
      %3084 = vmatpush1.msra.mxu0 0.0
      %3085 = vmatprep.subr.mxu0 0.0
      %3086 = vmatpush1.msra.mxu0 0.0
      %3087 = vmatprep.subr.mxu0 0.0
      %3088 = vmatpush1.msra.mxu0 0.0
      %3089 = vmatprep.subr.mxu0 0.0
      %3090 = vmatpush1.msra.mxu0 0.0
      %3091 = vmatprep.subr.mxu0 0.0
      %3092 = vmatpush1.msra.mxu0 0.0
      %3093 = vmatprep.subr.mxu0 0.0
      %3094 = vmatpush1.msra.mxu0 0.0
      %3095 = vmatprep.subr.mxu0 0.0
      %3096 = vmatpush1.msra.mxu0 0.0
      %3097 = vmatprep.subr.mxu0 0.0
      %3098 = vmatpush1.msra.mxu0 0.0
      %3099 = vmatprep.subr.mxu0 0.0
      %3100 = vmatpush1.msra.mxu0 0.0
      %3101 = vmatprep.subr.mxu0 0.0
      %3102 = vmatpush1.msra.mxu0 0.0
      %3103 = vmatprep.subr.mxu0 0.0
      %3104 = vmatpush1.msra.mxu0 %v3030
      %3105 = vmatprep.subr.mxu0 0.0
      %3106 = vmatpush1.msra.mxu0 %v3029
      %3107 = vmatprep.subr.mxu0 0.0
      %3108 = vmatpush1.msra.mxu0 %v3028
      %3109 = vmatprep.subr.mxu0 0.0
      %3110 = vmatpush1.msra.mxu0 %v3027
      %3111 = vmatprep.subr.mxu0 0.0
      %3112 = vmatpush2.msra.mxu0 0.0
      %3113 = vmatprep.subr.mxu0 0.0
      %3114 = vmatpush2.msra.mxu0 0.0
      %3115 = vmatprep.subr.mxu0 0.0
      %3116 = vmatpush2.msra.mxu0 0.0
      %3117 = vmatprep.subr.mxu0 0.0
      %3118 = vmatpush2.msra.mxu0 0.0
      %3119 = vmatprep.subr.mxu0 0.0
      %3120 = vmatpush2.msra.mxu0 0.0
      %3121 = vmatprep.subr.mxu0 0.0
      %3122 = vmatpush2.msra.mxu0 0.0
      %3123 = vmatprep.subr.mxu0 0.0
      %3124 = vmatpush2.msra.mxu0 0.0
      %3125 = vmatprep.subr.mxu0 0.0
      %3126 = vmatpush2.msra.mxu0 0.0
      %3127 = vmatprep.subr.mxu0 0.0
      %3128 = vmatpush2.msra.mxu0 0.0
      %3129 = vmatprep.subr.mxu0 0.0
      %3130 = vmatpush2.msra.mxu0 0.0
      %3131 = vmatprep.subr.mxu0 0.0
      %3132 = vmatpush2.msra.mxu0 0.0
      %3133 = vmatprep.subr.mxu0 0.0
      %3134 = vmatpush2.msra.mxu0 0.0
      %3135 = vmatprep.subr.mxu0 0.0
      %3136 = vmatpush2.msra.mxu0 0.0
      %3137 = vmatprep.subr.mxu0 0.0
      %3138 = vmatpush2.msra.mxu0 0.0
      %3139 = vmatprep.subr.mxu0 0.0
      %3140 = vmatpush2.msra.mxu0 0.0
      %3141 = vmatprep.subr.mxu0 0.0
      %3142 = vmatpush2.msra.mxu0 0.0
      %3143 = vmatprep.mubr.f32.mxu0 0.0
      %3144 = vmatmul.mubr.f32.gmra.mxu0 %v3032
      %v3145 = vpop.f32.mrf.mxu0
      %v3146 = vadd.f32 0.0, %v3145
      %v3147 = vpop.f32.mrf.mxu0
      %3148 = vmatprep.mubr.f32.mxu0 0.0
      %3149 = vmatmul.mubr.f32.gmra.mxu0 %v3035
      %v3150 = vpop.f32.mrf.mxu0
      %v3151 = vadd.f32 0.0, %v3150
      %v3152 = vpop.f32.mrf.mxu0
      %3153 = vmatprep.mubr.f32.mxu0 0.0
      %3154 = vmatmul.mubr.f32.gmra.mxu0 %v3038
      %v3155 = vpop.f32.mrf.mxu0
      %v3156 = vadd.f32 0.0, %v3155
      %v3157 = vpop.f32.mrf.mxu0
      %3158 = vmatprep.mubr.f32.mxu0 0.0
      %3159 = vmatmul.mubr.f32.gmra.mxu0 %v3041
      %v3160 = vpop.f32.mrf.mxu0
      %v3161 = vadd.f32 0.0, %v3160
      %v3162 = vpop.f32.mrf.mxu0
      %3163 = vmatprep.mubr.f32.mxu0 0.0
      %3164 = vmatmul.mubr.f32.gmra.mxu0 %v3044
      %v3165 = vpop.f32.mrf.mxu0
      %v3166 = vadd.f32 0.0, %v3165
      %v3167 = vpop.f32.mrf.mxu0
      %3168 = vmatprep.mubr.f32.mxu0 0.0
      %3169 = vmatmul.mubr.f32.gmra.mxu0 %v3047
      %v3170 = vpop.f32.mrf.mxu0
      %v3171 = vadd.f32 0.0, %v3170
      %v3172 = vpop.f32.mrf.mxu0
      %3173 = vmatprep.mubr.f32.mxu0 0.0
      %3174 = vmatmul.mubr.f32.gmra.mxu0 %v3050
      %v3175 = vpop.f32.mrf.mxu0
      %v3176 = vadd.f32 0.0, %v3175
      %v3177 = vpop.f32.mrf.mxu0
      %3178 = vmatprep.mubr.f32.mxu0 0.0
      %3179 = vmatmul.mubr.f32.gmra.mxu0 %v3053
      %v3180 = vpop.f32.mrf.mxu0
      %v3181 = vadd.f32 0.0, %v3180
      %v3182 = vpop.f32.mrf.mxu0
      %3183 = vmatprep.mubr.f32.mxu0 0.0
      %3184 = vmatmul.mubr.f32.gmra.mxu0 %v3056
      %v3185 = vpop.f32.mrf.mxu0
      %v3186 = vadd.f32 0.0, %v3185
      %v3187 = vpop.f32.mrf.mxu0
      %3188 = vmatprep.mubr.f32.mxu0 0.0
      %3189 = vmatmul.mubr.f32.gmra.mxu0 %v3059
      %v3190 = vpop.f32.mrf.mxu0
      %v3191 = vadd.f32 0.0, %v3190
      %v3192 = vpop.f32.mrf.mxu0
      %3193 = vmatprep.mubr.f32.mxu0 0.0
      %3194 = vmatmul.mubr.f32.gmra.mxu0 %v3062
      %v3195 = vpop.f32.mrf.mxu0
      %v3196 = vadd.f32 0.0, %v3195
      %v3197 = vpop.f32.mrf.mxu0
      %3198 = vmatprep.mubr.f32.mxu0 0.0
      %3199 = vmatmul.mubr.f32.gmra.mxu0 %v3065
      %v3200 = vpop.f32.mrf.mxu0
      %v3201 = vadd.f32 0.0, %v3200
      %v3202 = vpop.f32.mrf.mxu0
      %3203 = vmatprep.mubr.f32.mxu0 0.0
      %3204 = vmatmul.mubr.f32.gmra.mxu0 %v3068
      %v3205 = vpop.f32.mrf.mxu0
      %v3206 = vadd.f32 0.0, %v3205
      %v3207 = vpop.f32.mrf.mxu0
      %3208 = vmatprep.mubr.f32.mxu0 0.0
      %3209 = vmatmul.mubr.f32.gmra.mxu0 %v3071
      %v3210 = vpop.f32.mrf.mxu0
      %v3211 = vadd.f32 0.0, %v3210
      %v3212 = vpop.f32.mrf.mxu0
      %3213 = vmatprep.mubr.f32.mxu0 0.0
      %3214 = vmatmul.mubr.f32.gmra.mxu0 %v3074
      %v3215 = vpop.f32.mrf.mxu0
      %v3216 = vadd.f32 0.0, %v3215
      %v3217 = vpop.f32.mrf.mxu0
      %3218 = vmatprep.mubr.f32.mxu0 0.0
      %3219 = vmatmul.mubr.f32.gmra.mxu0 %v3077
      %v3220 = vpop.f32.mrf.mxu0
      %v3221 = vadd.f32 0.0, %v3220
      %v3222 = vpop.f32.mrf.mxu0
      %3223 = vdwg.mxu0
      %v3224 = vadd.f32 %v2932, %v3146
      %v3225 = vadd.f32 %v2937, %v3151
      %v3226 = vadd.f32 %v2942, %v3156
      %v3227 = vadd.f32 %v2947, %v3161
      %v3228 = vadd.f32 %v2952, %v3166
      %v3229 = vadd.f32 %v2957, %v3171
      %v3230 = vadd.f32 %v2962, %v3176
      %v3231 = vadd.f32 %v2967, %v3181
      %v3232 = vadd.f32 %v2972, %v3186
      %v3233 = vadd.f32 %v2977, %v3191
      %v3234 = vadd.f32 %v2982, %v3196
      %v3235 = vadd.f32 %v2987, %v3201
      %v3236 = vadd.f32 %v2992, %v3206
      %v3237 = vadd.f32 %v2997, %v3211
      %v3238 = vadd.f32 %v3002, %v3216
      %v3239 = vadd.f32 %v3007, %v3221
      %v3240 = vld [vmem:[%s10] sm:$0x1]
      %v3242 = vlaneseq
      %v3243 = vshrl.u32 %v3242, 7
      %v3244 = vsub.s32 0, %v3243
      %v3245 = vrot.slane %v3240, %v3244
      %v3247 = vadd.f32 %v3224, %v3245
      %v3248 = vadd.f32 %v3225, %v3245
      %v3249 = vadd.f32 %v3226, %v3245
      %v3250 = vadd.f32 %v3227, %v3245
      %v3251 = vadd.f32 %v3228, %v3245
      %v3252 = vadd.f32 %v3229, %v3245
      %v3253 = vadd.f32 %v3230, %v3245
      %v3254 = vadd.f32 %v3231, %v3245
      %v3255 = vadd.f32 %v3232, %v3245
      %v3256 = vadd.f32 %v3233, %v3245
      %v3257 = vadd.f32 %v3234, %v3245
      %v3258 = vadd.f32 %v3235, %v3245
      %v3259 = vadd.f32 %v3236, %v3245
      %v3260 = vadd.f32 %v3237, %v3245
      %v3261 = vadd.f32 %v3238, %v3245
      %v3262 = vadd.f32 %v3239, %v3245
      %v3263 = vxor.u32 %v3247, 2147483648
      %v3264 = vxor.u32 %v3248, 2147483648
      %v3265 = vxor.u32 %v3249, 2147483648
      %v3266 = vxor.u32 %v3250, 2147483648
      %v3267 = vxor.u32 %v3251, 2147483648
      %v3268 = vxor.u32 %v3252, 2147483648
      %v3269 = vxor.u32 %v3253, 2147483648
      %v3270 = vxor.u32 %v3254, 2147483648
      %v3271 = vxor.u32 %v3255, 2147483648
      %v3272 = vxor.u32 %v3256, 2147483648
      %v3273 = vxor.u32 %v3257, 2147483648
      %v3274 = vxor.u32 %v3258, 2147483648
      %v3275 = vxor.u32 %v3259, 2147483648
      %v3276 = vxor.u32 %v3260, 2147483648
      %v3277 = vxor.u32 %v3261, 2147483648
      %v3278 = vxor.u32 %v3262, 2147483648
      %v3279 = vmul.f32 %v3263, 1.442695
      %v3280 = vpow.pop %v3279
      %v3281 = vmul.f32 %v3264, 1.442695
      %v3282 = vpow.pop %v3281
      %v3283 = vmul.f32 %v3265, 1.442695
      %v3284 = vpow.pop %v3283
      %v3285 = vmul.f32 %v3266, 1.442695
      %v3286 = vpow.pop %v3285
      %v3287 = vmul.f32 %v3267, 1.442695
      %v3288 = vpow.pop %v3287
      %v3289 = vmul.f32 %v3268, 1.442695
      %v3290 = vpow.pop %v3289
      %v3291 = vmul.f32 %v3269, 1.442695
      %v3292 = vpow.pop %v3291
      %v3293 = vmul.f32 %v3270, 1.442695
      %v3294 = vpow.pop %v3293
      %v3295 = vmul.f32 %v3271, 1.442695
      %v3296 = vpow.pop %v3295
      %v3297 = vmul.f32 %v3272, 1.442695
      %v3298 = vpow.pop %v3297
      %v3299 = vmul.f32 %v3273, 1.442695
      %v3300 = vpow.pop %v3299
      %v3301 = vmul.f32 %v3274, 1.442695
      %v3302 = vpow.pop %v3301
      %v3303 = vmul.f32 %v3275, 1.442695
      %v3304 = vpow.pop %v3303
      %v3305 = vmul.f32 %v3276, 1.442695
      %v3306 = vpow.pop %v3305
      %v3307 = vmul.f32 %v3277, 1.442695
      %v3308 = vpow.pop %v3307
      %v3309 = vmul.f32 %v3278, 1.442695
      %v3310 = vpow.pop %v3309
      %v3311 = vadd.f32 %v3280, 1.0
      %v3312 = vadd.f32 %v3282, 1.0
      %v3313 = vadd.f32 %v3284, 1.0
      %v3314 = vadd.f32 %v3286, 1.0
      %v3315 = vadd.f32 %v3288, 1.0
      %v3316 = vadd.f32 %v3290, 1.0
      %v3317 = vadd.f32 %v3292, 1.0
      %v3318 = vadd.f32 %v3294, 1.0
      %v3319 = vadd.f32 %v3296, 1.0
      %v3320 = vadd.f32 %v3298, 1.0
      %v3321 = vadd.f32 %v3300, 1.0
      %v3322 = vadd.f32 %v3302, 1.0
      %v3323 = vadd.f32 %v3304, 1.0
      %v3324 = vadd.f32 %v3306, 1.0
      %v3325 = vadd.f32 %v3308, 1.0
      %v3326 = vadd.f32 %v3310, 1.0
      %v3327 = vrcp.pop %v3311
      %v3328 = vmul.f32 1.0, %v3327
      %v3329 = vrcp.pop %v3312
      %v3330 = vmul.f32 1.0, %v3329
      %v3331 = vrcp.pop %v3313
      %v3332 = vmul.f32 1.0, %v3331
      %v3333 = vrcp.pop %v3314
      %v3334 = vmul.f32 1.0, %v3333
      %v3335 = vrcp.pop %v3315
      %v3336 = vmul.f32 1.0, %v3335
      %v3337 = vrcp.pop %v3316
      %v3338 = vmul.f32 1.0, %v3337
      %v3339 = vrcp.pop %v3317
      %v3340 = vmul.f32 1.0, %v3339
      %v3341 = vrcp.pop %v3318
      %v3342 = vmul.f32 1.0, %v3341
      %v3343 = vrcp.pop %v3319
      %v3344 = vmul.f32 1.0, %v3343
      %v3345 = vrcp.pop %v3320
      %v3346 = vmul.f32 1.0, %v3345
      %v3347 = vrcp.pop %v3321
      %v3348 = vmul.f32 1.0, %v3347
      %v3349 = vrcp.pop %v3322
      %v3350 = vmul.f32 1.0, %v3349
      %v3351 = vrcp.pop %v3323
      %v3352 = vmul.f32 1.0, %v3351
      %v3353 = vrcp.pop %v3324
      %v3354 = vmul.f32 1.0, %v3353
      %v3355 = vrcp.pop %v3325
      %v3356 = vmul.f32 1.0, %v3355
      %v3357 = vrcp.pop %v3326
      %v3358 = vmul.f32 1.0, %v3357
      %3375 = vrot.lane.b32.xlu0 %v3328, 96
      %v3376 = vpop.permute.xlu0 %3375
      %3377 = vrot.lane.b32.xlu0 %v3330, 96
      %v3378 = vpop.permute.xlu0 %3377
      %3379 = vrot.lane.b32.xlu0 %v3332, 96
      %v3380 = vpop.permute.xlu0 %3379
      %3381 = vrot.lane.b32.xlu0 %v3334, 96
      %v3382 = vpop.permute.xlu0 %3381
      %3383 = vrot.lane.b32.xlu0 %v3336, 96
      %v3384 = vpop.permute.xlu0 %3383
      %3385 = vrot.lane.b32.xlu0 %v3338, 96
      %v3386 = vpop.permute.xlu0 %3385
      %3387 = vrot.lane.b32.xlu0 %v3340, 96
      %v3388 = vpop.permute.xlu0 %3387
      %3389 = vrot.lane.b32.xlu0 %v3342, 96
      %v3390 = vpop.permute.xlu0 %3389
      %3391 = vrot.lane.b32.xlu0 %v3344, 96
      %v3392 = vpop.permute.xlu0 %3391
      %3393 = vrot.lane.b32.xlu0 %v3346, 96
      %v3394 = vpop.permute.xlu0 %3393
      %3395 = vrot.lane.b32.xlu0 %v3348, 96
      %v3396 = vpop.permute.xlu0 %3395
      %3397 = vrot.lane.b32.xlu0 %v3350, 96
      %v3398 = vpop.permute.xlu0 %3397
      %3399 = vrot.lane.b32.xlu0 %v3352, 96
      %v3400 = vpop.permute.xlu0 %3399
      %3401 = vrot.lane.b32.xlu0 %v3354, 96
      %v3402 = vpop.permute.xlu0 %3401
      %3403 = vrot.lane.b32.xlu0 %v3356, 96
      %v3404 = vpop.permute.xlu0 %3403
      %3405 = vrot.lane.b32.xlu0 %v3358, 96
      %v3406 = vpop.permute.xlu0 %3405
      %v3423 = vmul.f32 %v3247, %v3376
      %v3424 = vmul.f32 %v3248, %v3378
      %v3425 = vmul.f32 %v3249, %v3380
      %v3426 = vmul.f32 %v3250, %v3382
      %v3427 = vmul.f32 %v3251, %v3384
      %v3428 = vmul.f32 %v3252, %v3386
      %v3429 = vmul.f32 %v3253, %v3388
      %v3430 = vmul.f32 %v3254, %v3390
      %v3431 = vmul.f32 %v3255, %v3392
      %v3432 = vmul.f32 %v3256, %v3394
      %v3433 = vmul.f32 %v3257, %v3396
      %v3434 = vmul.f32 %v3258, %v3398
      %v3435 = vmul.f32 %v3259, %v3400
      %v3436 = vmul.f32 %v3260, %v3402
      %v3437 = vmul.f32 %v3261, %v3404
      %v3438 = vmul.f32 %v3262, %v3406
      %v3439 = vld [vmem:[%s11] sm:$0x1]
      %v3441 = vlaneseq
      %v3442 = vshrl.u32 %v3441, 7
      %v3443 = vsub.s32 0, %v3442
      %v3444 = vrot.slane %v3439, %v3443
      %v3446 = vmul.f32 %v3423, %v3444
      %v3447 = vmul.f32 %v3424, %v3444
      %v3448 = vmul.f32 %v3425, %v3444
      %v3449 = vmul.f32 %v3426, %v3444
      %v3450 = vmul.f32 %v3427, %v3444
      %v3451 = vmul.f32 %v3428, %v3444
      %v3452 = vmul.f32 %v3429, %v3444
      %v3453 = vmul.f32 %v3430, %v3444
      %v3454 = vmul.f32 %v3431, %v3444
      %v3455 = vmul.f32 %v3432, %v3444
      %v3456 = vmul.f32 %v3433, %v3444
      %v3457 = vmul.f32 %v3434, %v3444
      %v3458 = vmul.f32 %v3435, %v3444
      %v3459 = vmul.f32 %v3436, %v3444
      %v3460 = vmul.f32 %v3437, %v3444
      %v3461 = vmul.f32 %v3438, %v3444
      %v3462 = vld [vmem:[%s12] sm:$0x1]
      %v3464 = vlaneseq
      %v3465 = vshrl.u32 %v3464, 7
      %v3466 = vsub.s32 0, %v3465
      %v3467 = vrot.slane %v3462, %v3466
      %v3469 = vadd.f32 %v3446, %v3467
      %v3470 = vadd.f32 %v3447, %v3467
      %v3471 = vadd.f32 %v3448, %v3467
      %v3472 = vadd.f32 %v3449, %v3467
      %v3473 = vadd.f32 %v3450, %v3467
      %v3474 = vadd.f32 %v3451, %v3467
      %v3475 = vadd.f32 %v3452, %v3467
      %v3476 = vadd.f32 %v3453, %v3467
      %v3477 = vadd.f32 %v3454, %v3467
      %v3478 = vadd.f32 %v3455, %v3467
      %v3479 = vadd.f32 %v3456, %v3467
      %v3480 = vadd.f32 %v3457, %v3467
      %v3481 = vadd.f32 %v3458, %v3467
      %v3482 = vadd.f32 %v3459, %v3467
      %v3483 = vadd.f32 %v3460, %v3467
      %v3484 = vadd.f32 %v3461, %v3467
      %v3485 = vmul.f32 %v3469, %v550
      %v3486 = vmul.f32 %v3470, %v555
      %v3487 = vmul.f32 %v3471, %v560
      %v3488 = vmul.f32 %v3472, %v565
      %v3489 = vmul.f32 %v3473, %v570
      %v3490 = vmul.f32 %v3474, %v575
      %v3491 = vmul.f32 %v3475, %v580
      %v3492 = vmul.f32 %v3476, %v585
      %v3493 = vmul.f32 %v3477, %v590
      %v3494 = vmul.f32 %v3478, %v595
      %v3495 = vmul.f32 %v3479, %v600
      %v3496 = vmul.f32 %v3480, %v605
      %v3497 = vmul.f32 %v3481, %v610
      %v3498 = vmul.f32 %v3482, %v615
      %v3499 = vmul.f32 %v3483, %v620
      %v3500 = vmul.f32 %v3484, %v625
      %v3501 = vadd.f32 %v1735, %v3485
      %v3502 = vadd.f32 %v1736, %v3486
      %v3503 = vadd.f32 %v1737, %v3487
      %v3504 = vadd.f32 %v1738, %v3488
      %v3505 = vadd.f32 %v1739, %v3489
      %v3506 = vadd.f32 %v1740, %v3490
      %v3507 = vadd.f32 %v1741, %v3491
      %v3508 = vadd.f32 %v1742, %v3492
      %v3509 = vadd.f32 %v1743, %v3493
      %v3510 = vadd.f32 %v1744, %v3494
      %v3511 = vadd.f32 %v1745, %v3495
      %v3512 = vadd.f32 %v1746, %v3496
      %v3513 = vadd.f32 %v1747, %v3497
      %v3514 = vadd.f32 %v1748, %v3498
      %v3515 = vadd.f32 %v1749, %v3499
      %v3516 = vadd.f32 %v1750, %v3500
      %v3517 = vsel %vm638, %v3501, 0.0
      %3518 = vadd.xlane.f32.xlu0 %v3517
      %v3519 = vpop.xlane.xlu0 %3518
      %v3520 = vsel %vm638, %v3502, 0.0
      %3521 = vadd.xlane.f32.xlu0 %v3520
      %v3522 = vpop.xlane.xlu0 %3521
      %v3523 = vsel %vm638, %v3503, 0.0
      %3524 = vadd.xlane.f32.xlu0 %v3523
      %v3525 = vpop.xlane.xlu0 %3524
      %v3526 = vsel %vm638, %v3504, 0.0
      %3527 = vadd.xlane.f32.xlu0 %v3526
      %v3528 = vpop.xlane.xlu0 %3527
      %v3529 = vsel %vm638, %v3505, 0.0
      %3530 = vadd.xlane.f32.xlu0 %v3529
      %v3531 = vpop.xlane.xlu0 %3530
      %v3532 = vsel %vm638, %v3506, 0.0
      %3533 = vadd.xlane.f32.xlu0 %v3532
      %v3534 = vpop.xlane.xlu0 %3533
      %v3535 = vsel %vm638, %v3507, 0.0
      %3536 = vadd.xlane.f32.xlu0 %v3535
      %v3537 = vpop.xlane.xlu0 %3536
      %v3538 = vsel %vm638, %v3508, 0.0
      %3539 = vadd.xlane.f32.xlu0 %v3538
      %v3540 = vpop.xlane.xlu0 %3539
      %v3541 = vsel %vm638, %v3509, 0.0
      %3542 = vadd.xlane.f32.xlu0 %v3541
      %v3543 = vpop.xlane.xlu0 %3542
      %v3544 = vsel %vm638, %v3510, 0.0
      %3545 = vadd.xlane.f32.xlu0 %v3544
      %v3546 = vpop.xlane.xlu0 %3545
      %v3547 = vsel %vm638, %v3511, 0.0
      %3548 = vadd.xlane.f32.xlu0 %v3547
      %v3549 = vpop.xlane.xlu0 %3548
      %v3550 = vsel %vm638, %v3512, 0.0
      %3551 = vadd.xlane.f32.xlu0 %v3550
      %v3552 = vpop.xlane.xlu0 %3551
      %v3553 = vsel %vm638, %v3513, 0.0
      %3554 = vadd.xlane.f32.xlu0 %v3553
      %v3555 = vpop.xlane.xlu0 %3554
      %v3556 = vsel %vm638, %v3514, 0.0
      %3557 = vadd.xlane.f32.xlu0 %v3556
      %v3558 = vpop.xlane.xlu0 %3557
      %v3559 = vsel %vm638, %v3515, 0.0
      %3560 = vadd.xlane.f32.xlu0 %v3559
      %v3561 = vpop.xlane.xlu0 %3560
      %v3562 = vsel %vm638, %v3516, 0.0
      %3563 = vadd.xlane.f32.xlu0 %v3562
      %v3564 = vpop.xlane.xlu0 %3563
      %v3565 = vrcp.pop 32.0
      %v3566 = vmul.f32 %v3519, %v3565
      %v3567 = vmul.f32 %v3522, %v3565
      %v3568 = vmul.f32 %v3525, %v3565
      %v3569 = vmul.f32 %v3528, %v3565
      %v3570 = vmul.f32 %v3531, %v3565
      %v3571 = vmul.f32 %v3534, %v3565
      %v3572 = vmul.f32 %v3537, %v3565
      %v3573 = vmul.f32 %v3540, %v3565
      %v3574 = vmul.f32 %v3543, %v3565
      %v3575 = vmul.f32 %v3546, %v3565
      %v3576 = vmul.f32 %v3549, %v3565
      %v3577 = vmul.f32 %v3552, %v3565
      %v3578 = vmul.f32 %v3555, %v3565
      %v3579 = vmul.f32 %v3558, %v3565
      %v3580 = vmul.f32 %v3561, %v3565
      %v3581 = vmul.f32 %v3564, %v3565
      %v3582 = vsub.f32 %v3501, %v3566
      %v3583 = vsub.f32 %v3502, %v3567
      %v3584 = vsub.f32 %v3503, %v3568
      %v3585 = vsub.f32 %v3504, %v3569
      %v3586 = vsub.f32 %v3505, %v3570
      %v3587 = vsub.f32 %v3506, %v3571
      %v3588 = vsub.f32 %v3507, %v3572
      %v3589 = vsub.f32 %v3508, %v3573
      %v3590 = vsub.f32 %v3509, %v3574
      %v3591 = vsub.f32 %v3510, %v3575
      %v3592 = vsub.f32 %v3511, %v3576
      %v3593 = vsub.f32 %v3512, %v3577
      %v3594 = vsub.f32 %v3513, %v3578
      %v3595 = vsub.f32 %v3514, %v3579
      %v3596 = vsub.f32 %v3515, %v3580
      %v3597 = vsub.f32 %v3516, %v3581
      %v3598 = vmul.f32 %v3582, %v3582
      %v3599 = vmul.f32 %v3583, %v3583
      %v3600 = vmul.f32 %v3584, %v3584
      %v3601 = vmul.f32 %v3585, %v3585
      %v3602 = vmul.f32 %v3586, %v3586
      %v3603 = vmul.f32 %v3587, %v3587
      %v3604 = vmul.f32 %v3588, %v3588
      %v3605 = vmul.f32 %v3589, %v3589
      %v3606 = vmul.f32 %v3590, %v3590
      %v3607 = vmul.f32 %v3591, %v3591
      %v3608 = vmul.f32 %v3592, %v3592
      %v3609 = vmul.f32 %v3593, %v3593
      %v3610 = vmul.f32 %v3594, %v3594
      %v3611 = vmul.f32 %v3595, %v3595
      %v3612 = vmul.f32 %v3596, %v3596
      %v3613 = vmul.f32 %v3597, %v3597
      %v3614 = vsel %vm638, %v3598, 0.0
      %3615 = vadd.xlane.f32.xlu0 %v3614
      %v3616 = vpop.xlane.xlu0 %3615
      %v3617 = vsel %vm638, %v3599, 0.0
      %3618 = vadd.xlane.f32.xlu0 %v3617
      %v3619 = vpop.xlane.xlu0 %3618
      %v3620 = vsel %vm638, %v3600, 0.0
      %3621 = vadd.xlane.f32.xlu0 %v3620
      %v3622 = vpop.xlane.xlu0 %3621
      %v3623 = vsel %vm638, %v3601, 0.0
      %3624 = vadd.xlane.f32.xlu0 %v3623
      %v3625 = vpop.xlane.xlu0 %3624
      %v3626 = vsel %vm638, %v3602, 0.0
      %3627 = vadd.xlane.f32.xlu0 %v3626
      %v3628 = vpop.xlane.xlu0 %3627
      %v3629 = vsel %vm638, %v3603, 0.0
      %3630 = vadd.xlane.f32.xlu0 %v3629
      %v3631 = vpop.xlane.xlu0 %3630
      %v3632 = vsel %vm638, %v3604, 0.0
      %3633 = vadd.xlane.f32.xlu0 %v3632
      %v3634 = vpop.xlane.xlu0 %3633
      %v3635 = vsel %vm638, %v3605, 0.0
      %3636 = vadd.xlane.f32.xlu0 %v3635
      %v3637 = vpop.xlane.xlu0 %3636
      %v3638 = vsel %vm638, %v3606, 0.0
      %3639 = vadd.xlane.f32.xlu0 %v3638
      %v3640 = vpop.xlane.xlu0 %3639
      %v3641 = vsel %vm638, %v3607, 0.0
      %3642 = vadd.xlane.f32.xlu0 %v3641
      %v3643 = vpop.xlane.xlu0 %3642
      %v3644 = vsel %vm638, %v3608, 0.0
      %3645 = vadd.xlane.f32.xlu0 %v3644
      %v3646 = vpop.xlane.xlu0 %3645
      %v3647 = vsel %vm638, %v3609, 0.0
      %3648 = vadd.xlane.f32.xlu0 %v3647
      %v3649 = vpop.xlane.xlu0 %3648
      %v3650 = vsel %vm638, %v3610, 0.0
      %3651 = vadd.xlane.f32.xlu0 %v3650
      %v3652 = vpop.xlane.xlu0 %3651
      %v3653 = vsel %vm638, %v3611, 0.0
      %3654 = vadd.xlane.f32.xlu0 %v3653
      %v3655 = vpop.xlane.xlu0 %3654
      %v3656 = vsel %vm638, %v3612, 0.0
      %3657 = vadd.xlane.f32.xlu0 %v3656
      %v3658 = vpop.xlane.xlu0 %3657
      %v3659 = vsel %vm638, %v3613, 0.0
      %3660 = vadd.xlane.f32.xlu0 %v3659
      %v3661 = vpop.xlane.xlu0 %3660
      %v3662 = vmul.f32 %v3616, %v3565
      %v3663 = vmul.f32 %v3619, %v3565
      %v3664 = vmul.f32 %v3622, %v3565
      %v3665 = vmul.f32 %v3625, %v3565
      %v3666 = vmul.f32 %v3628, %v3565
      %v3667 = vmul.f32 %v3631, %v3565
      %v3668 = vmul.f32 %v3634, %v3565
      %v3669 = vmul.f32 %v3637, %v3565
      %v3670 = vmul.f32 %v3640, %v3565
      %v3671 = vmul.f32 %v3643, %v3565
      %v3672 = vmul.f32 %v3646, %v3565
      %v3673 = vmul.f32 %v3649, %v3565
      %v3674 = vmul.f32 %v3652, %v3565
      %v3675 = vmul.f32 %v3655, %v3565
      %v3676 = vmul.f32 %v3658, %v3565
      %v3677 = vmul.f32 %v3661, %v3565
      %v3678 = vadd.f32 %v3662, 1e-05
      %v3679 = vadd.f32 %v3663, 1e-05
      %v3680 = vadd.f32 %v3664, 1e-05
      %v3681 = vadd.f32 %v3665, 1e-05
      %v3682 = vadd.f32 %v3666, 1e-05
      %v3683 = vadd.f32 %v3667, 1e-05
      %v3684 = vadd.f32 %v3668, 1e-05
      %v3685 = vadd.f32 %v3669, 1e-05
      %v3686 = vadd.f32 %v3670, 1e-05
      %v3687 = vadd.f32 %v3671, 1e-05
      %v3688 = vadd.f32 %v3672, 1e-05
      %v3689 = vadd.f32 %v3673, 1e-05
      %v3690 = vadd.f32 %v3674, 1e-05
      %v3691 = vadd.f32 %v3675, 1e-05
      %v3692 = vadd.f32 %v3676, 1e-05
      %v3693 = vadd.f32 %v3677, 1e-05
      %v3694 = vrsqrt.pop %v3678
      %v3695 = vrsqrt.pop %v3679
      %v3696 = vrsqrt.pop %v3680
      %v3697 = vrsqrt.pop %v3681
      %v3698 = vrsqrt.pop %v3682
      %v3699 = vrsqrt.pop %v3683
      %v3700 = vrsqrt.pop %v3684
      %v3701 = vrsqrt.pop %v3685
      %v3702 = vrsqrt.pop %v3686
      %v3703 = vrsqrt.pop %v3687
      %v3704 = vrsqrt.pop %v3688
      %v3705 = vrsqrt.pop %v3689
      %v3706 = vrsqrt.pop %v3690
      %v3707 = vrsqrt.pop %v3691
      %v3708 = vrsqrt.pop %v3692
      %v3709 = vrsqrt.pop %v3693
      %v3710 = vmul.f32 %v3582, %v3694
      %v3711 = vmul.f32 %v3583, %v3695
      %v3712 = vmul.f32 %v3584, %v3696
      %v3713 = vmul.f32 %v3585, %v3697
      %v3714 = vmul.f32 %v3586, %v3698
      %v3715 = vmul.f32 %v3587, %v3699
      %v3716 = vmul.f32 %v3588, %v3700
      %v3717 = vmul.f32 %v3589, %v3701
      %v3718 = vmul.f32 %v3590, %v3702
      %v3719 = vmul.f32 %v3591, %v3703
      %v3720 = vmul.f32 %v3592, %v3704
      %v3721 = vmul.f32 %v3593, %v3705
      %v3722 = vmul.f32 %v3594, %v3706
      %v3723 = vmul.f32 %v3595, %v3707
      %v3724 = vmul.f32 %v3596, %v3708
      %v3725 = vmul.f32 %v3597, %v3709
      %v3726 = vld [vmem:[%s13] sm:$0x1]
      %v3728 = vlaneseq
      %v3729 = vshrl.u32 %v3728, 7
      %v3730 = vsub.s32 0, %v3729
      %v3731 = vrot.slane %v3726, %v3730
      %v3733 = vmul.f32 %v3710, %v3731
      %v3734 = vmul.f32 %v3711, %v3731
      %v3735 = vmul.f32 %v3712, %v3731
      %v3736 = vmul.f32 %v3713, %v3731
      %v3737 = vmul.f32 %v3714, %v3731
      %v3738 = vmul.f32 %v3715, %v3731
      %v3739 = vmul.f32 %v3716, %v3731
      %v3740 = vmul.f32 %v3717, %v3731
      %v3741 = vmul.f32 %v3718, %v3731
      %v3742 = vmul.f32 %v3719, %v3731
      %v3743 = vmul.f32 %v3720, %v3731
      %v3744 = vmul.f32 %v3721, %v3731
      %v3745 = vmul.f32 %v3722, %v3731
      %v3746 = vmul.f32 %v3723, %v3731
      %v3747 = vmul.f32 %v3724, %v3731
      %v3748 = vmul.f32 %v3725, %v3731
      %v3749 = vld [vmem:[%s14] sm:$0x1]
      %v3751 = vlaneseq
      %v3752 = vshrl.u32 %v3751, 7
      %v3753 = vsub.s32 0, %v3752
      %v3754 = vrot.slane %v3749, %v3753
      %v3756 = vadd.f32 %v3733, %v3754
      %v3757 = vadd.f32 %v3734, %v3754
      %v3758 = vadd.f32 %v3735, %v3754
      %v3759 = vadd.f32 %v3736, %v3754
      %v3760 = vadd.f32 %v3737, %v3754
      %v3761 = vadd.f32 %v3738, %v3754
      %v3762 = vadd.f32 %v3739, %v3754
      %v3763 = vadd.f32 %v3740, %v3754
      %v3764 = vadd.f32 %v3741, %v3754
      %v3765 = vadd.f32 %v3742, %v3754
      %v3766 = vadd.f32 %v3743, %v3754
      %v3767 = vadd.f32 %v3744, %v3754
      %v3768 = vadd.f32 %v3745, %v3754
      %v3769 = vadd.f32 %v3746, %v3754
      %v3770 = vadd.f32 %v3747, %v3754
      %v3771 = vadd.f32 %v3748, %v3754
      %v3772 = vadd.f32 %v515, %v3756
      %v3773 = vadd.f32 %v516, %v3757
      %v3774 = vadd.f32 %v517, %v3758
      %v3775 = vadd.f32 %v518, %v3759
      %v3776 = vadd.f32 %v519, %v3760
      %v3777 = vadd.f32 %v520, %v3761
      %v3778 = vadd.f32 %v521, %v3762
      %v3779 = vadd.f32 %v522, %v3763
      %v3780 = vadd.f32 %v523, %v3764
      %v3781 = vadd.f32 %v524, %v3765
      %v3782 = vadd.f32 %v525, %v3766
      %v3783 = vadd.f32 %v526, %v3767
      %v3784 = vadd.f32 %v527, %v3768
      %v3785 = vadd.f32 %v528, %v3769
      %v3786 = vadd.f32 %v529, %v3770
      %v3787 = vadd.f32 %v530, %v3771
      %3788 = vst.msk [vmem:[%s514] sm:$0xff] %vm638, %v3772
      %3789 = vst.msk [vmem:[%s514 + $0x8] sm:$0xff] %vm638, %v3773
      %3790 = vst.msk [vmem:[%s514 + $0x10] sm:$0xff] %vm638, %v3774
      %3791 = vst.msk [vmem:[%s514 + $0x18] sm:$0xff] %vm638, %v3775
      %3792 = vst.msk [vmem:[%s514 + $0x20] sm:$0xff] %vm638, %v3776
      %3793 = vst.msk [vmem:[%s514 + $0x28] sm:$0xff] %vm638, %v3777
      %3794 = vst.msk [vmem:[%s514 + $0x30] sm:$0xff] %vm638, %v3778
      %3795 = vst.msk [vmem:[%s514 + $0x38] sm:$0xff] %vm638, %v3779
      %3796 = vst.msk [vmem:[%s514 + $0x40] sm:$0xff] %vm638, %v3780
      %3797 = vst.msk [vmem:[%s514 + $0x48] sm:$0xff] %vm638, %v3781
      %3798 = vst.msk [vmem:[%s514 + $0x50] sm:$0xff] %vm638, %v3782
      %3799 = vst.msk [vmem:[%s514 + $0x58] sm:$0xff] %vm638, %v3783
      %3800 = vst.msk [vmem:[%s514 + $0x60] sm:$0xff] %vm638, %v3784
      %3801 = vst.msk [vmem:[%s514 + $0x68] sm:$0xff] %vm638, %v3785
      %3802 = vst.msk [vmem:[%s514 + $0x70] sm:$0xff] %vm638, %v3786
      %3803 = vst.msk [vmem:[%s514 + $0x78] sm:$0xff] %vm638, %v3787
      %p3804 = scmp.lt.s32.totalorder %s26, 1
      %s3805 = scalar_select %p3804, %s26, 1
      %s3806 = smul.addr %s3805, 16
      %s3807 = smul.addr %s3806, 8
      %s3808 = scalar_lea.vmem %s15, %s3807
      // Predicated region
      $region88: #{tpu_custom_call.1} parent=79 // pred_check
        %p3809 = pneg %p369
      $region89: #{tpu_custom_call.1} parent=79 // pred_check_branch
        %3811 = sbr.rel (%p3809) target = $region91
      $region90: #{tpu_custom_call.1} parent=79 // pred_region
        _
      $region91: #{tpu_custom_call.1} parent=79 // pred_fallthru
        _
    $region80: #{tpu_custom_call.1} parent=5 // pred_fallthru
      _
    %p3812 = scmp.le.s32.totalorder 2, %s21
    // Predicated region
    $region92: #{tpu_custom_call.1} parent=5 // pred_check
      %p3813 = pneg %p3812
    $region93: #{tpu_custom_call.1} parent=5 // pred_check_branch
      %3815 = sbr.rel (%p3813) target = $region95
    $region94: #{tpu_custom_call.1} parent=5 // pred_region
      %s3816 = ssub.s32 %s21, 2
      // Predicated region
      $region96: #{tpu_custom_call.1} parent=94 // pred_check
        %p3817 = pneg %p375
      $region97: #{tpu_custom_call.1} parent=94 // pred_check_branch
        %3819 = sbr.rel (%p3817) target = $region99
      $region98: #{tpu_custom_call.1} parent=94 // pred_region
        %p3820 = scmp.lt.s32.totalorder %s27, 1
        %s3821 = scalar_select %p3820, %s27, 1
        %s3822 = smul.addr %s3821, 16
        %s3823 = smul.addr %s3822, 8
        %s3824 = scalar_lea.vmem %s15, %s3823
      $region99: #{tpu_custom_call.1} parent=94 // pred_fallthru
        _
    $region95: #{tpu_custom_call.1} parent=5 // pred_fallthru
      _
  $region6: #{tpu_custom_call.1} parent=0 // loop_footer
    %s25 = sadd.s32 1, %s21
  $region7: #{tpu_custom_call.1} parent=0 // loop_footer_branch
    %20 = sbr.rel target = $region3
  $region8: #{tpu_custom_call.1} parent=0 // loop_exit
    _

</llo_original>
